<compile_context>
chip_gen: v6e
topology: v6e:2x2x1
jax: 0.10.0
libtpu: 0.0.40
codegen_flags: <defaults>
</compile_context>

<pallas_src>
import functools

import jax
import jax.numpy as jnp
from jax.experimental import pallas as pl
from jax.experimental.pallas import tpu as pltpu


def msa_kernel(x_ref, wq_ref, wk_ref, wv_ref, wp_ref, bp_ref, o_ref, ctx_ref,
               *, num_heads):
    # x_ref: (Bb, N, C) block of the batch.
    Bb, N, C = x_ref.shape
    H = num_heads
    hd = C // H
    M = Bb * N

    # Fold batch*seq into matmul M (leading-dim merge only; no relayout).
    x = x_ref[...].reshape(M, C).astype(jnp.bfloat16)          # (M, C)

    # Lane-dense projections on the MXU: (M, C) x (C, C), K = C.
    # The attention scale is pre-folded into wq (exact here: hd=16 -> 0.25).
    q = jnp.dot(x, wq_ref[...], preferred_element_type=jnp.float32).astype(jnp.bfloat16)
    k = jnp.dot(x, wk_ref[...], preferred_element_type=jnp.float32).astype(jnp.bfloat16)
    v = jnp.dot(x, wv_ref[...], preferred_element_type=jnp.float32).astype(jnp.bfloat16)

    # (M, C) -> (Bb, N, C): split of the leading/sublane dim only (cheap).
    q3 = q.reshape(Bb, N, C)
    k3 = k.reshape(Bb, N, C)
    v3 = v.reshape(Bb, N, C)

    # Per-head attention.  Each head is a leading-batch (Bb, N, hd) batched
    # matmul -- the Mosaic-native batched-dot form -- so no 4-D transposes are
    # needed inside the kernel.  The hd-wide lane slices are cheap at this
    # size; at real ViT shapes head would become a grid axis instead.
    for h in range(H):
        sl = slice(h * hd, (h + 1) * hd)
        qh = q3[:, :, sl]                                        # (Bb, N, hd)
        kh = k3[:, :, sl]
        vh = v3[:, :, sl]

        s = jnp.einsum('bqd,bkd->bqk', qh, kh,
                       preferred_element_type=jnp.float32)       # (Bb, N, N) f32

        # Numerically-stable softmax; EUP reciprocal instead of a VPU divide.
        s = s - jnp.max(s, axis=-1, keepdims=True)
        p = jnp.exp(s)
        p = p * pl.reciprocal(jnp.sum(p, axis=-1, keepdims=True), approx=True)

        ctx_h = jnp.einsum('bqk,bkd->bqd', p.astype(jnp.bfloat16), vh,
                           preferred_element_type=jnp.float32)   # (Bb, N, hd)

        # Stage this head's context into VMEM at its lane offset: assembles the
        # (M, C) context without a (N, H, hd) transpose and bounds the vreg
        # live range of the unrolled head loop.
        ctx_ref[:, sl] = ctx_h.reshape(M, hd).astype(jnp.bfloat16)

    # Single K=C output projection + bias.
    out = jnp.dot(ctx_ref[...], wp_ref[...], preferred_element_type=jnp.float32)
    out = out + bp_ref[...]                                      # (M, C) + (1, C)
    o_ref[...] = out.reshape(Bb, N, C).astype(o_ref.dtype)


def prepare_msa_params(w_qkv, w_proj, b_proj, *, num_heads):
    """One-time weight repack (call at parameter init, NOT per forward).

    w_qkv is (C, 3C) stored (in, out) with output columns ordered [q | k | v]
    (heads interleaved (H, hd) inside each C-wide slab), matching the PyTorch
    qkv(x).reshape(B, N, 3, H, hd) layout.  The attention scale hd**-0.5 is
    folded into the q weight before the bf16 cast (exact when hd is a power of
    4, as here with hd=16 -> scale=0.25; otherwise one extra bf16 rounding).
    """
    C = w_proj.shape[0]
    hd = C // num_heads
    scale = hd ** (-0.5)
    w_q = (w_qkv[:, 0:C] * scale).astype(jnp.bfloat16)
    w_k = w_qkv[:, C:2 * C].astype(jnp.bfloat16)
    w_v = w_qkv[:, 2 * C:3 * C].astype(jnp.bfloat16)
    w_p = w_proj.astype(jnp.bfloat16)
    b_p = b_proj.reshape(1, C).astype(jnp.float32)
    return w_q, w_k, w_v, w_p, b_p


def msa_forward(x, w_q, w_k, w_v, w_p, b_p, *, num_heads):
    B, N, C = x.shape
    assert C % num_heads == 0
    H = num_heads

    # Split across the two v7x TensorCores only when each block carries enough
    # work to amortize per-step pipeline overhead (~0.35 us per grid step).  On
    # single-TC v5e/v6e (and at toy shapes everywhere) one grid step with the
    # whole batch folded into matmul M is strictly better.
    approx_flops = 2 * B * N * C * (4 * C + 2 * N)
    grid_b = 2 if (B % 2 == 0 and approx_flops >= (1 << 30)) else 1
    block_b = B // grid_b

    kernel = functools.partial(msa_kernel, num_heads=H)

    return pl.pallas_call(
        kernel,
        out_shape=jax.ShapeDtypeStruct((B, N, C), x.dtype),
        grid_spec=pltpu.PrefetchScalarGridSpec(
            num_scalar_prefetch=0,
            grid=(grid_b,),
            in_specs=[
                pl.BlockSpec((block_b, N, C), lambda i: (i, 0, 0)),   # x block
                pl.BlockSpec((C, C), lambda i: (0, 0)),               # w_q (scaled)
                pl.BlockSpec((C, C), lambda i: (0, 0)),               # w_k
                pl.BlockSpec((C, C), lambda i: (0, 0)),               # w_v
                pl.BlockSpec((C, C), lambda i: (0, 0)),               # w_proj
                pl.BlockSpec((1, C), lambda i: (0, 0)),               # proj bias
            ],
            out_specs=pl.BlockSpec((block_b, N, C), lambda i: (i, 0, 0)),
            scratch_shapes=[pltpu.VMEM((block_b * N, C), jnp.bfloat16)],
        ),
        compiler_params=pltpu.CompilerParams(
            dimension_semantics=("parallel",),
        ),
    )(x, w_q, w_k, w_v, w_p, b_p)


def msa_reference(x, w_qkv, w_proj, b_proj, *, num_heads):
    """Pure-JAX f32 reference mirroring the PyTorch forward."""
    B, N, C = x.shape
    hd = C // num_heads
    scale = hd ** (-0.5)
    qkv = jnp.einsum('bnc,cd->bnd', x, w_qkv)                 # (B, N, 3C)
    qkv = qkv.reshape(B, N, 3, num_heads, hd).transpose(2, 0, 3, 1, 4)
    q, k, v = qkv[0], qkv[1], qkv[2]                          # (B, H, N, hd)
    attn = jnp.einsum('bhqd,bhkd->bhqk', q, k) * scale
    attn = jax.nn.softmax(attn, axis=-1)
    out = jnp.einsum('bhqk,bhkd->bhqd', attn, v)              # (B, H, N, hd)
    out = out.transpose(0, 2, 1, 3).reshape(B, N, C)
    out = jnp.einsum('bnc,cd->bnd', out, w_proj) + b_proj[0]
    return out


if __name__ == "__main__":
    # Module defaults: dim=192, num_heads=12, qkv_bias=False, dropout p=0.
    B, N, dim, num_heads = 2, 16, 192, 12

    key = jax.random.PRNGKey(0)
    kx, kqkv, kproj, kb = jax.random.split(key, 4)

    x = jax.random.normal(kx, (B, N, dim), dtype=jnp.float32)
    # Deterministic synthetic weights (stored as (in, out)).
    w_qkv = 0.02 * jax.random.normal(kqkv, (dim, 3 * dim), dtype=jnp.float32)
    w_proj = 0.02 * jax.random.normal(kproj, (dim, dim), dtype=jnp.float32)
    b_proj = 0.02 * jax.random.normal(kb, (1, dim), dtype=jnp.float32)

    # One-time weight repack (hoisted off the forward hot path).
    w_q, w_k, w_v, w_p, b_p = prepare_msa_params(w_qkv, w_proj, b_proj,
                                                 num_heads=num_heads)

    out = msa_forward(x, w_q, w_k, w_v, w_p, b_p, num_heads=num_heads)
    out = jax.block_until_ready(out)

    ref = msa_reference(x, w_qkv, w_proj, b_proj, num_heads=num_heads)
    assert out.shape == (B, N, dim)
    # bf16 matmul operands + approx reciprocal -> loosened tolerance vs f32 ref.
    assert jnp.allclose(out, ref, atol=2e-2, rtol=2e-2), "mismatch vs JAX reference"

    print("KERNEL_OK")
</pallas_src>

<mosaic_0001>
module attributes {stable_mosaic.version = 11 : i64} {
  func.func @msa_kernel(%arg0: i32, %arg1: memref<2x16x192xf32, #tpu.memory_space<vmem>>, %arg2: memref<192x192xbf16, #tpu.memory_space<vmem>>, %arg3: memref<192x192xbf16, #tpu.memory_space<vmem>>, %arg4: memref<192x192xbf16, #tpu.memory_space<vmem>>, %arg5: memref<192x192xbf16, #tpu.memory_space<vmem>>, %arg6: memref<1x192xf32, #tpu.memory_space<vmem>>, %arg7: memref<2x16x192xf32, #tpu.memory_space<vmem>>, %arg8: memref<32x192xbf16, #tpu.memory_space<vmem>>) attributes {dimension_semantics = [#tpu.dimension_semantics<parallel>], iteration_bounds = array<i64: 1>, scalar_prefetch = 0 : i64, scratch_operands = 1 : i64, tpu.core_type = #tpu.core_type<tc>, window_params = [{transform_indices = @transform_0, window_bounds = array<i64: 2, 16, 192>}, {pipeline_mode = #tpu.pipeline_mode<synchronous>, transform_indices = @transform_1, window_bounds = array<i64: 192, 192>}, {pipeline_mode = #tpu.pipeline_mode<synchronous>, transform_indices = @transform_2, window_bounds = array<i64: 192, 192>}, {pipeline_mode = #tpu.pipeline_mode<synchronous>, transform_indices = @transform_3, window_bounds = array<i64: 192, 192>}, {pipeline_mode = #tpu.pipeline_mode<synchronous>, transform_indices = @transform_4, window_bounds = array<i64: 192, 192>}, {pipeline_mode = #tpu.pipeline_mode<synchronous>, transform_indices = @transform_5, window_bounds = array<i64: 1, 192>}, {transform_indices = @transform_6, window_bounds = array<i64: 2, 16, 192>}]} {
    %c0 = arith.constant 0 : index
    %c0_0 = arith.constant 0 : index
    %c0_1 = arith.constant 0 : index
    %0 = vector.load %arg1[%c0, %c0_0, %c0_1] : memref<2x16x192xf32, #tpu.memory_space<vmem>>, vector<2x16x192xf32>
    %1 = vector.shape_cast %0 : vector<2x16x192xf32> to vector<32x192xf32>
    %2 = arith.truncf %1 : vector<32x192xf32> to vector<32x192xbf16>
    %c0_2 = arith.constant 0 : index
    %c0_3 = arith.constant 0 : index
    %3 = vector.load %arg2[%c0_2, %c0_3] : memref<192x192xbf16, #tpu.memory_space<vmem>>, vector<192x192xbf16>
    %cst = arith.constant dense<0.000000e+00> : vector<32x192xf32>
    %4 = tpu.matmul %2, %3, %cst {dimension_numbers = #tpu.dot_dimension_numbers<[1], [0], [0], [1], [0, 0, 1, 1], [], []>} : vector<32x192xbf16>, vector<192x192xbf16>, vector<32x192xf32> -> vector<32x192xf32>
    %5 = arith.truncf %4 : vector<32x192xf32> to vector<32x192xbf16>
    %c0_4 = arith.constant 0 : index
    %c0_5 = arith.constant 0 : index
    %6 = vector.load %arg3[%c0_4, %c0_5] : memref<192x192xbf16, #tpu.memory_space<vmem>>, vector<192x192xbf16>
    %cst_6 = arith.constant dense<0.000000e+00> : vector<32x192xf32>
    %7 = tpu.matmul %2, %6, %cst_6 {dimension_numbers = #tpu.dot_dimension_numbers<[1], [0], [0], [1], [0, 0, 1, 1], [], []>} : vector<32x192xbf16>, vector<192x192xbf16>, vector<32x192xf32> -> vector<32x192xf32>
    %8 = arith.truncf %7 : vector<32x192xf32> to vector<32x192xbf16>
    %c0_7 = arith.constant 0 : index
    %c0_8 = arith.constant 0 : index
    %9 = vector.load %arg4[%c0_7, %c0_8] : memref<192x192xbf16, #tpu.memory_space<vmem>>, vector<192x192xbf16>
    %cst_9 = arith.constant dense<0.000000e+00> : vector<32x192xf32>
    %10 = tpu.matmul %2, %9, %cst_9 {dimension_numbers = #tpu.dot_dimension_numbers<[1], [0], [0], [1], [0, 0, 1, 1], [], []>} : vector<32x192xbf16>, vector<192x192xbf16>, vector<32x192xf32> -> vector<32x192xf32>
    %11 = arith.truncf %10 : vector<32x192xf32> to vector<32x192xbf16>
    %12 = vector.shape_cast %5 : vector<32x192xbf16> to vector<2x16x192xbf16>
    %13 = vector.shape_cast %8 : vector<32x192xbf16> to vector<2x16x192xbf16>
    %14 = vector.shape_cast %11 : vector<32x192xbf16> to vector<2x16x192xbf16>
    %15 = vector.extract_strided_slice %12 {offsets = [0, 0, 0], sizes = [2, 16, 16], strides = [1, 1, 1]} : vector<2x16x192xbf16> to vector<2x16x16xbf16>
    %16 = vector.extract_strided_slice %13 {offsets = [0, 0, 0], sizes = [2, 16, 16], strides = [1, 1, 1]} : vector<2x16x192xbf16> to vector<2x16x16xbf16>
    %17 = vector.extract_strided_slice %14 {offsets = [0, 0, 0], sizes = [2, 16, 16], strides = [1, 1, 1]} : vector<2x16x192xbf16> to vector<2x16x16xbf16>
    "tpu.trace_start"() <{level = 10 : i32, message = "bqd,bkd->bqk"}> : () -> ()
    %cst_10 = arith.constant dense<0.000000e+00> : vector<2x16x16xf32>
    %18 = tpu.matmul %15, %16, %cst_10 {dimension_numbers = #tpu.dot_dimension_numbers<[2], [2], [1], [1], [0, 0, 0, 1, 1, 1], [0], [0]>} : vector<2x16x16xbf16>, vector<2x16x16xbf16>, vector<2x16x16xf32> -> vector<2x16x16xf32>
    "tpu.trace_stop"() : () -> ()
    %cst_11 = arith.constant dense<0xFF800000> : vector<2x16xf32>
    %19 = vector.multi_reduction <maximumf>, %18, %cst_11 [2] : vector<2x16x16xf32> to vector<2x16xf32>
    %20 = vector.shape_cast %19 : vector<2x16xf32> to vector<2x16x1xf32>
    %21 = vector.broadcast %20 : vector<2x16x1xf32> to vector<2x16x16xf32>
    %22 = arith.subf %18, %21 : vector<2x16x16xf32>
    %23 = math.exp %22 : vector<2x16x16xf32>
    %cst_12 = arith.constant dense<0.000000e+00> : vector<2x16xf32>
    %24 = vector.multi_reduction <add>, %23, %cst_12 [2] : vector<2x16x16xf32> to vector<2x16xf32>
    %25 = vector.shape_cast %24 : vector<2x16xf32> to vector<2x16x1xf32>
    %26 = tpu.reciprocal %25 {approx = true} : vector<2x16x1xf32> -> vector<2x16x1xf32>
    %27 = vector.broadcast %26 : vector<2x16x1xf32> to vector<2x16x16xf32>
    %28 = arith.mulf %23, %27 : vector<2x16x16xf32>
    %29 = arith.truncf %28 : vector<2x16x16xf32> to vector<2x16x16xbf16>
    "tpu.trace_start"() <{level = 10 : i32, message = "bqk,bkd->bqd"}> : () -> ()
    %cst_13 = arith.constant dense<0.000000e+00> : vector<2x16x16xf32>
    %30 = tpu.matmul %29, %17, %cst_13 {dimension_numbers = #tpu.dot_dimension_numbers<[2], [1], [1], [2], [0, 0, 0, 1, 1, 2], [0], [0]>} : vector<2x16x16xbf16>, vector<2x16x16xbf16>, vector<2x16x16xf32> -> vector<2x16x16xf32>
    "tpu.trace_stop"() : () -> ()
    %31 = vector.shape_cast %30 : vector<2x16x16xf32> to vector<32x16xf32>
    %32 = arith.truncf %31 : vector<32x16xf32> to vector<32x16xbf16>
    %c0_14 = arith.constant 0 : index
    %c0_15 = arith.constant 0 : index
    %33 = vector.load %arg8[%c0_14, %c0_15] : memref<32x192xbf16, #tpu.memory_space<vmem>>, vector<32x16xbf16>
    tpu.vector_store %arg8[%c0_14, %c0_15], %32 {strides = array<i32>} : memref<32x192xbf16, #tpu.memory_space<vmem>>, vector<32x16xbf16>,
    %34 = vector.extract_strided_slice %12 {offsets = [0, 0, 16], sizes = [2, 16, 16], strides = [1, 1, 1]} : vector<2x16x192xbf16> to vector<2x16x16xbf16>
    %35 = vector.extract_strided_slice %13 {offsets = [0, 0, 16], sizes = [2, 16, 16], strides = [1, 1, 1]} : vector<2x16x192xbf16> to vector<2x16x16xbf16>
    %36 = vector.extract_strided_slice %14 {offsets = [0, 0, 16], sizes = [2, 16, 16], strides = [1, 1, 1]} : vector<2x16x192xbf16> to vector<2x16x16xbf16>
    "tpu.trace_start"() <{level = 10 : i32, message = "bqd,bkd->bqk"}> : () -> ()
    %cst_16 = arith.constant dense<0.000000e+00> : vector<2x16x16xf32>
    %37 = tpu.matmul %34, %35, %cst_16 {dimension_numbers = #tpu.dot_dimension_numbers<[2], [2], [1], [1], [0, 0, 0, 1, 1, 1], [0], [0]>} : vector<2x16x16xbf16>, vector<2x16x16xbf16>, vector<2x16x16xf32> -> vector<2x16x16xf32>
    "tpu.trace_stop"() : () -> ()
    %cst_17 = arith.constant dense<0xFF800000> : vector<2x16xf32>
    %38 = vector.multi_reduction <maximumf>, %37, %cst_17 [2] : vector<2x16x16xf32> to vector<2x16xf32>
    %39 = vector.shape_cast %38 : vector<2x16xf32> to vector<2x16x1xf32>
    %40 = vector.broadcast %39 : vector<2x16x1xf32> to vector<2x16x16xf32>
    %41 = arith.subf %37, %40 : vector<2x16x16xf32>
    %42 = math.exp %41 : vector<2x16x16xf32>
    %cst_18 = arith.constant dense<0.000000e+00> : vector<2x16xf32>
    %43 = vector.multi_reduction <add>, %42, %cst_18 [2] : vector<2x16x16xf32> to vector<2x16xf32>
    %44 = vector.shape_cast %43 : vector<2x16xf32> to vector<2x16x1xf32>
    %45 = tpu.reciprocal %44 {approx = true} : vector<2x16x1xf32> -> vector<2x16x1xf32>
    %46 = vector.broadcast %45 : vector<2x16x1xf32> to vector<2x16x16xf32>
    %47 = arith.mulf %42, %46 : vector<2x16x16xf32>
    %48 = arith.truncf %47 : vector<2x16x16xf32> to vector<2x16x16xbf16>
    "tpu.trace_start"() <{level = 10 : i32, message = "bqk,bkd->bqd"}> : () -> ()
    %cst_19 = arith.constant dense<0.000000e+00> : vector<2x16x16xf32>
    %49 = tpu.matmul %48, %36, %cst_19 {dimension_numbers = #tpu.dot_dimension_numbers<[2], [1], [1], [2], [0, 0, 0, 1, 1, 2], [0], [0]>} : vector<2x16x16xbf16>, vector<2x16x16xbf16>, vector<2x16x16xf32> -> vector<2x16x16xf32>
    "tpu.trace_stop"() : () -> ()
    %50 = vector.shape_cast %49 : vector<2x16x16xf32> to vector<32x16xf32>
    %51 = arith.truncf %50 : vector<32x16xf32> to vector<32x16xbf16>
    %c0_20 = arith.constant 0 : index
    %c16 = arith.constant 16 : index
    %52 = vector.load %arg8[%c0_20, %c16] : memref<32x192xbf16, #tpu.memory_space<vmem>>, vector<32x16xbf16>
    tpu.vector_store %arg8[%c0_20, %c16], %51 {strides = array<i32>} : memref<32x192xbf16, #tpu.memory_space<vmem>>, vector<32x16xbf16>,
    %53 = vector.extract_strided_slice %12 {offsets = [0, 0, 32], sizes = [2, 16, 16], strides = [1, 1, 1]} : vector<2x16x192xbf16> to vector<2x16x16xbf16>
    %54 = vector.extract_strided_slice %13 {offsets = [0, 0, 32], sizes = [2, 16, 16], strides = [1, 1, 1]} : vector<2x16x192xbf16> to vector<2x16x16xbf16>
    %55 = vector.extract_strided_slice %14 {offsets = [0, 0, 32], sizes = [2, 16, 16], strides = [1, 1, 1]} : vector<2x16x192xbf16> to vector<2x16x16xbf16>
    "tpu.trace_start"() <{level = 10 : i32, message = "bqd,bkd->bqk"}> : () -> ()
    %cst_21 = arith.constant dense<0.000000e+00> : vector<2x16x16xf32>
    %56 = tpu.matmul %53, %54, %cst_21 {dimension_numbers = #tpu.dot_dimension_numbers<[2], [2], [1], [1], [0, 0, 0, 1, 1, 1], [0], [0]>} : vector<2x16x16xbf16>, vector<2x16x16xbf16>, vector<2x16x16xf32> -> vector<2x16x16xf32>
    "tpu.trace_stop"() : () -> ()
    %cst_22 = arith.constant dense<0xFF800000> : vector<2x16xf32>
    %57 = vector.multi_reduction <maximumf>, %56, %cst_22 [2] : vector<2x16x16xf32> to vector<2x16xf32>
    %58 = vector.shape_cast %57 : vector<2x16xf32> to vector<2x16x1xf32>
    %59 = vector.broadcast %58 : vector<2x16x1xf32> to vector<2x16x16xf32>
    %60 = arith.subf %56, %59 : vector<2x16x16xf32>
    %61 = math.exp %60 : vector<2x16x16xf32>
    %cst_23 = arith.constant dense<0.000000e+00> : vector<2x16xf32>
    %62 = vector.multi_reduction <add>, %61, %cst_23 [2] : vector<2x16x16xf32> to vector<2x16xf32>
    %63 = vector.shape_cast %62 : vector<2x16xf32> to vector<2x16x1xf32>
    %64 = tpu.reciprocal %63 {approx = true} : vector<2x16x1xf32> -> vector<2x16x1xf32>
    %65 = vector.broadcast %64 : vector<2x16x1xf32> to vector<2x16x16xf32>
    %66 = arith.mulf %61, %65 : vector<2x16x16xf32>
    %67 = arith.truncf %66 : vector<2x16x16xf32> to vector<2x16x16xbf16>
    "tpu.trace_start"() <{level = 10 : i32, message = "bqk,bkd->bqd"}> : () -> ()
    %cst_24 = arith.constant dense<0.000000e+00> : vector<2x16x16xf32>
    %68 = tpu.matmul %67, %55, %cst_24 {dimension_numbers = #tpu.dot_dimension_numbers<[2], [1], [1], [2], [0, 0, 0, 1, 1, 2], [0], [0]>} : vector<2x16x16xbf16>, vector<2x16x16xbf16>, vector<2x16x16xf32> -> vector<2x16x16xf32>
    "tpu.trace_stop"() : () -> ()
    %69 = vector.shape_cast %68 : vector<2x16x16xf32> to vector<32x16xf32>
    %70 = arith.truncf %69 : vector<32x16xf32> to vector<32x16xbf16>
    %c0_25 = arith.constant 0 : index
    %c32 = arith.constant 32 : index
    %71 = vector.load %arg8[%c0_25, %c32] : memref<32x192xbf16, #tpu.memory_space<vmem>>, vector<32x16xbf16>
    tpu.vector_store %arg8[%c0_25, %c32], %70 {strides = array<i32>} : memref<32x192xbf16, #tpu.memory_space<vmem>>, vector<32x16xbf16>,
    %72 = vector.extract_strided_slice %12 {offsets = [0, 0, 48], sizes = [2, 16, 16], strides = [1, 1, 1]} : vector<2x16x192xbf16> to vector<2x16x16xbf16>
    %73 = vector.extract_strided_slice %13 {offsets = [0, 0, 48], sizes = [2, 16, 16], strides = [1, 1, 1]} : vector<2x16x192xbf16> to vector<2x16x16xbf16>
    %74 = vector.extract_strided_slice %14 {offsets = [0, 0, 48], sizes = [2, 16, 16], strides = [1, 1, 1]} : vector<2x16x192xbf16> to vector<2x16x16xbf16>
    "tpu.trace_start"() <{level = 10 : i32, message = "bqd,bkd->bqk"}> : () -> ()
    %cst_26 = arith.constant dense<0.000000e+00> : vector<2x16x16xf32>
    %75 = tpu.matmul %72, %73, %cst_26 {dimension_numbers = #tpu.dot_dimension_numbers<[2], [2], [1], [1], [0, 0, 0, 1, 1, 1], [0], [0]>} : vector<2x16x16xbf16>, vector<2x16x16xbf16>, vector<2x16x16xf32> -> vector<2x16x16xf32>
    "tpu.trace_stop"() : () -> ()
    %cst_27 = arith.constant dense<0xFF800000> : vector<2x16xf32>
    %76 = vector.multi_reduction <maximumf>, %75, %cst_27 [2] : vector<2x16x16xf32> to vector<2x16xf32>
    %77 = vector.shape_cast %76 : vector<2x16xf32> to vector<2x16x1xf32>
    %78 = vector.broadcast %77 : vector<2x16x1xf32> to vector<2x16x16xf32>
    %79 = arith.subf %75, %78 : vector<2x16x16xf32>
    %80 = math.exp %79 : vector<2x16x16xf32>
    %cst_28 = arith.constant dense<0.000000e+00> : vector<2x16xf32>
    %81 = vector.multi_reduction <add>, %80, %cst_28 [2] : vector<2x16x16xf32> to vector<2x16xf32>
    %82 = vector.shape_cast %81 : vector<2x16xf32> to vector<2x16x1xf32>
    %83 = tpu.reciprocal %82 {approx = true} : vector<2x16x1xf32> -> vector<2x16x1xf32>
    %84 = vector.broadcast %83 : vector<2x16x1xf32> to vector<2x16x16xf32>
    %85 = arith.mulf %80, %84 : vector<2x16x16xf32>
    %86 = arith.truncf %85 : vector<2x16x16xf32> to vector<2x16x16xbf16>
    "tpu.trace_start"() <{level = 10 : i32, message = "bqk,bkd->bqd"}> : () -> ()
    %cst_29 = arith.constant dense<0.000000e+00> : vector<2x16x16xf32>
    %87 = tpu.matmul %86, %74, %cst_29 {dimension_numbers = #tpu.dot_dimension_numbers<[2], [1], [1], [2], [0, 0, 0, 1, 1, 2], [0], [0]>} : vector<2x16x16xbf16>, vector<2x16x16xbf16>, vector<2x16x16xf32> -> vector<2x16x16xf32>
    "tpu.trace_stop"() : () -> ()
    %88 = vector.shape_cast %87 : vector<2x16x16xf32> to vector<32x16xf32>
    %89 = arith.truncf %88 : vector<32x16xf32> to vector<32x16xbf16>
    %c0_30 = arith.constant 0 : index
    %c48 = arith.constant 48 : index
    %90 = vector.load %arg8[%c0_30, %c48] : memref<32x192xbf16, #tpu.memory_space<vmem>>, vector<32x16xbf16>
    tpu.vector_store %arg8[%c0_30, %c48], %89 {strides = array<i32>} : memref<32x192xbf16, #tpu.memory_space<vmem>>, vector<32x16xbf16>,
    %91 = vector.extract_strided_slice %12 {offsets = [0, 0, 64], sizes = [2, 16, 16], strides = [1, 1, 1]} : vector<2x16x192xbf16> to vector<2x16x16xbf16>
    %92 = vector.extract_strided_slice %13 {offsets = [0, 0, 64], sizes = [2, 16, 16], strides = [1, 1, 1]} : vector<2x16x192xbf16> to vector<2x16x16xbf16>
    %93 = vector.extract_strided_slice %14 {offsets = [0, 0, 64], sizes = [2, 16, 16], strides = [1, 1, 1]} : vector<2x16x192xbf16> to vector<2x16x16xbf16>
    "tpu.trace_start"() <{level = 10 : i32, message = "bqd,bkd->bqk"}> : () -> ()
    %cst_31 = arith.constant dense<0.000000e+00> : vector<2x16x16xf32>
    %94 = tpu.matmul %91, %92, %cst_31 {dimension_numbers = #tpu.dot_dimension_numbers<[2], [2], [1], [1], [0, 0, 0, 1, 1, 1], [0], [0]>} : vector<2x16x16xbf16>, vector<2x16x16xbf16>, vector<2x16x16xf32> -> vector<2x16x16xf32>
    "tpu.trace_stop"() : () -> ()
    %cst_32 = arith.constant dense<0xFF800000> : vector<2x16xf32>
    %95 = vector.multi_reduction <maximumf>, %94, %cst_32 [2] : vector<2x16x16xf32> to vector<2x16xf32>
    %96 = vector.shape_cast %95 : vector<2x16xf32> to vector<2x16x1xf32>
    %97 = vector.broadcast %96 : vector<2x16x1xf32> to vector<2x16x16xf32>
    %98 = arith.subf %94, %97 : vector<2x16x16xf32>
    %99 = math.exp %98 : vector<2x16x16xf32>
    %cst_33 = arith.constant dense<0.000000e+00> : vector<2x16xf32>
    %100 = vector.multi_reduction <add>, %99, %cst_33 [2] : vector<2x16x16xf32> to vector<2x16xf32>
    %101 = vector.shape_cast %100 : vector<2x16xf32> to vector<2x16x1xf32>
    %102 = tpu.reciprocal %101 {approx = true} : vector<2x16x1xf32> -> vector<2x16x1xf32>
    %103 = vector.broadcast %102 : vector<2x16x1xf32> to vector<2x16x16xf32>
    %104 = arith.mulf %99, %103 : vector<2x16x16xf32>
    %105 = arith.truncf %104 : vector<2x16x16xf32> to vector<2x16x16xbf16>
    "tpu.trace_start"() <{level = 10 : i32, message = "bqk,bkd->bqd"}> : () -> ()
    %cst_34 = arith.constant dense<0.000000e+00> : vector<2x16x16xf32>
    %106 = tpu.matmul %105, %93, %cst_34 {dimension_numbers = #tpu.dot_dimension_numbers<[2], [1], [1], [2], [0, 0, 0, 1, 1, 2], [0], [0]>} : vector<2x16x16xbf16>, vector<2x16x16xbf16>, vector<2x16x16xf32> -> vector<2x16x16xf32>
    "tpu.trace_stop"() : () -> ()
    %107 = vector.shape_cast %106 : vector<2x16x16xf32> to vector<32x16xf32>
    %108 = arith.truncf %107 : vector<32x16xf32> to vector<32x16xbf16>
    %c0_35 = arith.constant 0 : index
    %c64 = arith.constant 64 : index
    %109 = vector.load %arg8[%c0_35, %c64] : memref<32x192xbf16, #tpu.memory_space<vmem>>, vector<32x16xbf16>
    tpu.vector_store %arg8[%c0_35, %c64], %108 {strides = array<i32>} : memref<32x192xbf16, #tpu.memory_space<vmem>>, vector<32x16xbf16>,
    %110 = vector.extract_strided_slice %12 {offsets = [0, 0, 80], sizes = [2, 16, 16], strides = [1, 1, 1]} : vector<2x16x192xbf16> to vector<2x16x16xbf16>
    %111 = vector.extract_strided_slice %13 {offsets = [0, 0, 80], sizes = [2, 16, 16], strides = [1, 1, 1]} : vector<2x16x192xbf16> to vector<2x16x16xbf16>
    %112 = vector.extract_strided_slice %14 {offsets = [0, 0, 80], sizes = [2, 16, 16], strides = [1, 1, 1]} : vector<2x16x192xbf16> to vector<2x16x16xbf16>
    "tpu.trace_start"() <{level = 10 : i32, message = "bqd,bkd->bqk"}> : () -> ()
    %cst_36 = arith.constant dense<0.000000e+00> : vector<2x16x16xf32>
    %113 = tpu.matmul %110, %111, %cst_36 {dimension_numbers = #tpu.dot_dimension_numbers<[2], [2], [1], [1], [0, 0, 0, 1, 1, 1], [0], [0]>} : vector<2x16x16xbf16>, vector<2x16x16xbf16>, vector<2x16x16xf32> -> vector<2x16x16xf32>
    "tpu.trace_stop"() : () -> ()
    %cst_37 = arith.constant dense<0xFF800000> : vector<2x16xf32>
    %114 = vector.multi_reduction <maximumf>, %113, %cst_37 [2] : vector<2x16x16xf32> to vector<2x16xf32>
    %115 = vector.shape_cast %114 : vector<2x16xf32> to vector<2x16x1xf32>
    %116 = vector.broadcast %115 : vector<2x16x1xf32> to vector<2x16x16xf32>
    %117 = arith.subf %113, %116 : vector<2x16x16xf32>
    %118 = math.exp %117 : vector<2x16x16xf32>
    %cst_38 = arith.constant dense<0.000000e+00> : vector<2x16xf32>
    %119 = vector.multi_reduction <add>, %118, %cst_38 [2] : vector<2x16x16xf32> to vector<2x16xf32>
    %120 = vector.shape_cast %119 : vector<2x16xf32> to vector<2x16x1xf32>
    %121 = tpu.reciprocal %120 {approx = true} : vector<2x16x1xf32> -> vector<2x16x1xf32>
    %122 = vector.broadcast %121 : vector<2x16x1xf32> to vector<2x16x16xf32>
    %123 = arith.mulf %118, %122 : vector<2x16x16xf32>
    %124 = arith.truncf %123 : vector<2x16x16xf32> to vector<2x16x16xbf16>
    "tpu.trace_start"() <{level = 10 : i32, message = "bqk,bkd->bqd"}> : () -> ()
    %cst_39 = arith.constant dense<0.000000e+00> : vector<2x16x16xf32>
    %125 = tpu.matmul %124, %112, %cst_39 {dimension_numbers = #tpu.dot_dimension_numbers<[2], [1], [1], [2], [0, 0, 0, 1, 1, 2], [0], [0]>} : vector<2x16x16xbf16>, vector<2x16x16xbf16>, vector<2x16x16xf32> -> vector<2x16x16xf32>
    "tpu.trace_stop"() : () -> ()
    %126 = vector.shape_cast %125 : vector<2x16x16xf32> to vector<32x16xf32>
    %127 = arith.truncf %126 : vector<32x16xf32> to vector<32x16xbf16>
    %c0_40 = arith.constant 0 : index
    %c80 = arith.constant 80 : index
    %128 = vector.load %arg8[%c0_40, %c80] : memref<32x192xbf16, #tpu.memory_space<vmem>>, vector<32x16xbf16>
    tpu.vector_store %arg8[%c0_40, %c80], %127 {strides = array<i32>} : memref<32x192xbf16, #tpu.memory_space<vmem>>, vector<32x16xbf16>,
    %129 = vector.extract_strided_slice %12 {offsets = [0, 0, 96], sizes = [2, 16, 16], strides = [1, 1, 1]} : vector<2x16x192xbf16> to vector<2x16x16xbf16>
    %130 = vector.extract_strided_slice %13 {offsets = [0, 0, 96], sizes = [2, 16, 16], strides = [1, 1, 1]} : vector<2x16x192xbf16> to vector<2x16x16xbf16>
    %131 = vector.extract_strided_slice %14 {offsets = [0, 0, 96], sizes = [2, 16, 16], strides = [1, 1, 1]} : vector<2x16x192xbf16> to vector<2x16x16xbf16>
    "tpu.trace_start"() <{level = 10 : i32, message = "bqd,bkd->bqk"}> : () -> ()
    %cst_41 = arith.constant dense<0.000000e+00> : vector<2x16x16xf32>
    %132 = tpu.matmul %129, %130, %cst_41 {dimension_numbers = #tpu.dot_dimension_numbers<[2], [2], [1], [1], [0, 0, 0, 1, 1, 1], [0], [0]>} : vector<2x16x16xbf16>, vector<2x16x16xbf16>, vector<2x16x16xf32> -> vector<2x16x16xf32>
    "tpu.trace_stop"() : () -> ()
    %cst_42 = arith.constant dense<0xFF800000> : vector<2x16xf32>
    %133 = vector.multi_reduction <maximumf>, %132, %cst_42 [2] : vector<2x16x16xf32> to vector<2x16xf32>
    %134 = vector.shape_cast %133 : vector<2x16xf32> to vector<2x16x1xf32>
    %135 = vector.broadcast %134 : vector<2x16x1xf32> to vector<2x16x16xf32>
    %136 = arith.subf %132, %135 : vector<2x16x16xf32>
    %137 = math.exp %136 : vector<2x16x16xf32>
    %cst_43 = arith.constant dense<0.000000e+00> : vector<2x16xf32>
    %138 = vector.multi_reduction <add>, %137, %cst_43 [2] : vector<2x16x16xf32> to vector<2x16xf32>
    %139 = vector.shape_cast %138 : vector<2x16xf32> to vector<2x16x1xf32>
    %140 = tpu.reciprocal %139 {approx = true} : vector<2x16x1xf32> -> vector<2x16x1xf32>
    %141 = vector.broadcast %140 : vector<2x16x1xf32> to vector<2x16x16xf32>
    %142 = arith.mulf %137, %141 : vector<2x16x16xf32>
    %143 = arith.truncf %142 : vector<2x16x16xf32> to vector<2x16x16xbf16>
    "tpu.trace_start"() <{level = 10 : i32, message = "bqk,bkd->bqd"}> : () -> ()
    %cst_44 = arith.constant dense<0.000000e+00> : vector<2x16x16xf32>
    %144 = tpu.matmul %143, %131, %cst_44 {dimension_numbers = #tpu.dot_dimension_numbers<[2], [1], [1], [2], [0, 0, 0, 1, 1, 2], [0], [0]>} : vector<2x16x16xbf16>, vector<2x16x16xbf16>, vector<2x16x16xf32> -> vector<2x16x16xf32>
    "tpu.trace_stop"() : () -> ()
    %145 = vector.shape_cast %144 : vector<2x16x16xf32> to vector<32x16xf32>
    %146 = arith.truncf %145 : vector<32x16xf32> to vector<32x16xbf16>
    %c0_45 = arith.constant 0 : index
    %c96 = arith.constant 96 : index
    %147 = vector.load %arg8[%c0_45, %c96] : memref<32x192xbf16, #tpu.memory_space<vmem>>, vector<32x16xbf16>
    tpu.vector_store %arg8[%c0_45, %c96], %146 {strides = array<i32>} : memref<32x192xbf16, #tpu.memory_space<vmem>>, vector<32x16xbf16>,
    %148 = vector.extract_strided_slice %12 {offsets = [0, 0, 112], sizes = [2, 16, 16], strides = [1, 1, 1]} : vector<2x16x192xbf16> to vector<2x16x16xbf16>
    %149 = vector.extract_strided_slice %13 {offsets = [0, 0, 112], sizes = [2, 16, 16], strides = [1, 1, 1]} : vector<2x16x192xbf16> to vector<2x16x16xbf16>
    %150 = vector.extract_strided_slice %14 {offsets = [0, 0, 112], sizes = [2, 16, 16], strides = [1, 1, 1]} : vector<2x16x192xbf16> to vector<2x16x16xbf16>
    "tpu.trace_start"() <{level = 10 : i32, message = "bqd,bkd->bqk"}> : () -> ()
    %cst_46 = arith.constant dense<0.000000e+00> : vector<2x16x16xf32>
    %151 = tpu.matmul %148, %149, %cst_46 {dimension_numbers = #tpu.dot_dimension_numbers<[2], [2], [1], [1], [0, 0, 0, 1, 1, 1], [0], [0]>} : vector<2x16x16xbf16>, vector<2x16x16xbf16>, vector<2x16x16xf32> -> vector<2x16x16xf32>
    "tpu.trace_stop"() : () -> ()
    %cst_47 = arith.constant dense<0xFF800000> : vector<2x16xf32>
    %152 = vector.multi_reduction <maximumf>, %151, %cst_47 [2] : vector<2x16x16xf32> to vector<2x16xf32>
    %153 = vector.shape_cast %152 : vector<2x16xf32> to vector<2x16x1xf32>
    %154 = vector.broadcast %153 : vector<2x16x1xf32> to vector<2x16x16xf32>
    %155 = arith.subf %151, %154 : vector<2x16x16xf32>
    %156 = math.exp %155 : vector<2x16x16xf32>
    %cst_48 = arith.constant dense<0.000000e+00> : vector<2x16xf32>
    %157 = vector.multi_reduction <add>, %156, %cst_48 [2] : vector<2x16x16xf32> to vector<2x16xf32>
    %158 = vector.shape_cast %157 : vector<2x16xf32> to vector<2x16x1xf32>
    %159 = tpu.reciprocal %158 {approx = true} : vector<2x16x1xf32> -> vector<2x16x1xf32>
    %160 = vector.broadcast %159 : vector<2x16x1xf32> to vector<2x16x16xf32>
    %161 = arith.mulf %156, %160 : vector<2x16x16xf32>
    %162 = arith.truncf %161 : vector<2x16x16xf32> to vector<2x16x16xbf16>
    "tpu.trace_start"() <{level = 10 : i32, message = "bqk,bkd->bqd"}> : () -> ()
    %cst_49 = arith.constant dense<0.000000e+00> : vector<2x16x16xf32>
    %163 = tpu.matmul %162, %150, %cst_49 {dimension_numbers = #tpu.dot_dimension_numbers<[2], [1], [1], [2], [0, 0, 0, 1, 1, 2], [0], [0]>} : vector<2x16x16xbf16>, vector<2x16x16xbf16>, vector<2x16x16xf32> -> vector<2x16x16xf32>
    "tpu.trace_stop"() : () -> ()
    %164 = vector.shape_cast %163 : vector<2x16x16xf32> to vector<32x16xf32>
    %165 = arith.truncf %164 : vector<32x16xf32> to vector<32x16xbf16>
    %c0_50 = arith.constant 0 : index
    %c112 = arith.constant 112 : index
    %166 = vector.load %arg8[%c0_50, %c112] : memref<32x192xbf16, #tpu.memory_space<vmem>>, vector<32x16xbf16>
    tpu.vector_store %arg8[%c0_50, %c112], %165 {strides = array<i32>} : memref<32x192xbf16, #tpu.memory_space<vmem>>, vector<32x16xbf16>,
    %167 = vector.extract_strided_slice %12 {offsets = [0, 0, 128], sizes = [2, 16, 16], strides = [1, 1, 1]} : vector<2x16x192xbf16> to vector<2x16x16xbf16>
    %168 = vector.extract_strided_slice %13 {offsets = [0, 0, 128], sizes = [2, 16, 16], strides = [1, 1, 1]} : vector<2x16x192xbf16> to vector<2x16x16xbf16>
    %169 = vector.extract_strided_slice %14 {offsets = [0, 0, 128], sizes = [2, 16, 16], strides = [1, 1, 1]} : vector<2x16x192xbf16> to vector<2x16x16xbf16>
    "tpu.trace_start"() <{level = 10 : i32, message = "bqd,bkd->bqk"}> : () -> ()
    %cst_51 = arith.constant dense<0.000000e+00> : vector<2x16x16xf32>
    %170 = tpu.matmul %167, %168, %cst_51 {dimension_numbers = #tpu.dot_dimension_numbers<[2], [2], [1], [1], [0, 0, 0, 1, 1, 1], [0], [0]>} : vector<2x16x16xbf16>, vector<2x16x16xbf16>, vector<2x16x16xf32> -> vector<2x16x16xf32>
    "tpu.trace_stop"() : () -> ()
    %cst_52 = arith.constant dense<0xFF800000> : vector<2x16xf32>
    %171 = vector.multi_reduction <maximumf>, %170, %cst_52 [2] : vector<2x16x16xf32> to vector<2x16xf32>
    %172 = vector.shape_cast %171 : vector<2x16xf32> to vector<2x16x1xf32>
    %173 = vector.broadcast %172 : vector<2x16x1xf32> to vector<2x16x16xf32>
    %174 = arith.subf %170, %173 : vector<2x16x16xf32>
    %175 = math.exp %174 : vector<2x16x16xf32>
    %cst_53 = arith.constant dense<0.000000e+00> : vector<2x16xf32>
    %176 = vector.multi_reduction <add>, %175, %cst_53 [2] : vector<2x16x16xf32> to vector<2x16xf32>
    %177 = vector.shape_cast %176 : vector<2x16xf32> to vector<2x16x1xf32>
    %178 = tpu.reciprocal %177 {approx = true} : vector<2x16x1xf32> -> vector<2x16x1xf32>
    %179 = vector.broadcast %178 : vector<2x16x1xf32> to vector<2x16x16xf32>
    %180 = arith.mulf %175, %179 : vector<2x16x16xf32>
    %181 = arith.truncf %180 : vector<2x16x16xf32> to vector<2x16x16xbf16>
    "tpu.trace_start"() <{level = 10 : i32, message = "bqk,bkd->bqd"}> : () -> ()
    %cst_54 = arith.constant dense<0.000000e+00> : vector<2x16x16xf32>
    %182 = tpu.matmul %181, %169, %cst_54 {dimension_numbers = #tpu.dot_dimension_numbers<[2], [1], [1], [2], [0, 0, 0, 1, 1, 2], [0], [0]>} : vector<2x16x16xbf16>, vector<2x16x16xbf16>, vector<2x16x16xf32> -> vector<2x16x16xf32>
    "tpu.trace_stop"() : () -> ()
    %183 = vector.shape_cast %182 : vector<2x16x16xf32> to vector<32x16xf32>
    %184 = arith.truncf %183 : vector<32x16xf32> to vector<32x16xbf16>
    %c0_55 = arith.constant 0 : index
    %c128 = arith.constant 128 : index
    %185 = vector.load %arg8[%c0_55, %c128] : memref<32x192xbf16, #tpu.memory_space<vmem>>, vector<32x16xbf16>
    tpu.vector_store %arg8[%c0_55, %c128], %184 {strides = array<i32>} : memref<32x192xbf16, #tpu.memory_space<vmem>>, vector<32x16xbf16>,
    %186 = vector.extract_strided_slice %12 {offsets = [0, 0, 144], sizes = [2, 16, 16], strides = [1, 1, 1]} : vector<2x16x192xbf16> to vector<2x16x16xbf16>
    %187 = vector.extract_strided_slice %13 {offsets = [0, 0, 144], sizes = [2, 16, 16], strides = [1, 1, 1]} : vector<2x16x192xbf16> to vector<2x16x16xbf16>
    %188 = vector.extract_strided_slice %14 {offsets = [0, 0, 144], sizes = [2, 16, 16], strides = [1, 1, 1]} : vector<2x16x192xbf16> to vector<2x16x16xbf16>
    "tpu.trace_start"() <{level = 10 : i32, message = "bqd,bkd->bqk"}> : () -> ()
    %cst_56 = arith.constant dense<0.000000e+00> : vector<2x16x16xf32>
    %189 = tpu.matmul %186, %187, %cst_56 {dimension_numbers = #tpu.dot_dimension_numbers<[2], [2], [1], [1], [0, 0, 0, 1, 1, 1], [0], [0]>} : vector<2x16x16xbf16>, vector<2x16x16xbf16>, vector<2x16x16xf32> -> vector<2x16x16xf32>
    "tpu.trace_stop"() : () -> ()
    %cst_57 = arith.constant dense<0xFF800000> : vector<2x16xf32>
    %190 = vector.multi_reduction <maximumf>, %189, %cst_57 [2] : vector<2x16x16xf32> to vector<2x16xf32>
    %191 = vector.shape_cast %190 : vector<2x16xf32> to vector<2x16x1xf32>
    %192 = vector.broadcast %191 : vector<2x16x1xf32> to vector<2x16x16xf32>
    %193 = arith.subf %189, %192 : vector<2x16x16xf32>
    %194 = math.exp %193 : vector<2x16x16xf32>
    %cst_58 = arith.constant dense<0.000000e+00> : vector<2x16xf32>
    %195 = vector.multi_reduction <add>, %194, %cst_58 [2] : vector<2x16x16xf32> to vector<2x16xf32>
    %196 = vector.shape_cast %195 : vector<2x16xf32> to vector<2x16x1xf32>
    %197 = tpu.reciprocal %196 {approx = true} : vector<2x16x1xf32> -> vector<2x16x1xf32>
    %198 = vector.broadcast %197 : vector<2x16x1xf32> to vector<2x16x16xf32>
    %199 = arith.mulf %194, %198 : vector<2x16x16xf32>
    %200 = arith.truncf %199 : vector<2x16x16xf32> to vector<2x16x16xbf16>
    "tpu.trace_start"() <{level = 10 : i32, message = "bqk,bkd->bqd"}> : () -> ()
    %cst_59 = arith.constant dense<0.000000e+00> : vector<2x16x16xf32>
    %201 = tpu.matmul %200, %188, %cst_59 {dimension_numbers = #tpu.dot_dimension_numbers<[2], [1], [1], [2], [0, 0, 0, 1, 1, 2], [0], [0]>} : vector<2x16x16xbf16>, vector<2x16x16xbf16>, vector<2x16x16xf32> -> vector<2x16x16xf32>
    "tpu.trace_stop"() : () -> ()
    %202 = vector.shape_cast %201 : vector<2x16x16xf32> to vector<32x16xf32>
    %203 = arith.truncf %202 : vector<32x16xf32> to vector<32x16xbf16>
    %c0_60 = arith.constant 0 : index
    %c144 = arith.constant 144 : index
    %204 = vector.load %arg8[%c0_60, %c144] : memref<32x192xbf16, #tpu.memory_space<vmem>>, vector<32x16xbf16>
    tpu.vector_store %arg8[%c0_60, %c144], %203 {strides = array<i32>} : memref<32x192xbf16, #tpu.memory_space<vmem>>, vector<32x16xbf16>,
    %205 = vector.extract_strided_slice %12 {offsets = [0, 0, 160], sizes = [2, 16, 16], strides = [1, 1, 1]} : vector<2x16x192xbf16> to vector<2x16x16xbf16>
    %206 = vector.extract_strided_slice %13 {offsets = [0, 0, 160], sizes = [2, 16, 16], strides = [1, 1, 1]} : vector<2x16x192xbf16> to vector<2x16x16xbf16>
    %207 = vector.extract_strided_slice %14 {offsets = [0, 0, 160], sizes = [2, 16, 16], strides = [1, 1, 1]} : vector<2x16x192xbf16> to vector<2x16x16xbf16>
    "tpu.trace_start"() <{level = 10 : i32, message = "bqd,bkd->bqk"}> : () -> ()
    %cst_61 = arith.constant dense<0.000000e+00> : vector<2x16x16xf32>
    %208 = tpu.matmul %205, %206, %cst_61 {dimension_numbers = #tpu.dot_dimension_numbers<[2], [2], [1], [1], [0, 0, 0, 1, 1, 1], [0], [0]>} : vector<2x16x16xbf16>, vector<2x16x16xbf16>, vector<2x16x16xf32> -> vector<2x16x16xf32>
    "tpu.trace_stop"() : () -> ()
    %cst_62 = arith.constant dense<0xFF800000> : vector<2x16xf32>
    %209 = vector.multi_reduction <maximumf>, %208, %cst_62 [2] : vector<2x16x16xf32> to vector<2x16xf32>
    %210 = vector.shape_cast %209 : vector<2x16xf32> to vector<2x16x1xf32>
    %211 = vector.broadcast %210 : vector<2x16x1xf32> to vector<2x16x16xf32>
    %212 = arith.subf %208, %211 : vector<2x16x16xf32>
    %213 = math.exp %212 : vector<2x16x16xf32>
    %cst_63 = arith.constant dense<0.000000e+00> : vector<2x16xf32>
    %214 = vector.multi_reduction <add>, %213, %cst_63 [2] : vector<2x16x16xf32> to vector<2x16xf32>
    %215 = vector.shape_cast %214 : vector<2x16xf32> to vector<2x16x1xf32>
    %216 = tpu.reciprocal %215 {approx = true} : vector<2x16x1xf32> -> vector<2x16x1xf32>
    %217 = vector.broadcast %216 : vector<2x16x1xf32> to vector<2x16x16xf32>
    %218 = arith.mulf %213, %217 : vector<2x16x16xf32>
    %219 = arith.truncf %218 : vector<2x16x16xf32> to vector<2x16x16xbf16>
    "tpu.trace_start"() <{level = 10 : i32, message = "bqk,bkd->bqd"}> : () -> ()
    %cst_64 = arith.constant dense<0.000000e+00> : vector<2x16x16xf32>
    %220 = tpu.matmul %219, %207, %cst_64 {dimension_numbers = #tpu.dot_dimension_numbers<[2], [1], [1], [2], [0, 0, 0, 1, 1, 2], [0], [0]>} : vector<2x16x16xbf16>, vector<2x16x16xbf16>, vector<2x16x16xf32> -> vector<2x16x16xf32>
    "tpu.trace_stop"() : () -> ()
    %221 = vector.shape_cast %220 : vector<2x16x16xf32> to vector<32x16xf32>
    %222 = arith.truncf %221 : vector<32x16xf32> to vector<32x16xbf16>
    %c0_65 = arith.constant 0 : index
    %c160 = arith.constant 160 : index
    %223 = vector.load %arg8[%c0_65, %c160] : memref<32x192xbf16, #tpu.memory_space<vmem>>, vector<32x16xbf16>
    tpu.vector_store %arg8[%c0_65, %c160], %222 {strides = array<i32>} : memref<32x192xbf16, #tpu.memory_space<vmem>>, vector<32x16xbf16>,
    %224 = vector.extract_strided_slice %12 {offsets = [0, 0, 176], sizes = [2, 16, 16], strides = [1, 1, 1]} : vector<2x16x192xbf16> to vector<2x16x16xbf16>
    %225 = vector.extract_strided_slice %13 {offsets = [0, 0, 176], sizes = [2, 16, 16], strides = [1, 1, 1]} : vector<2x16x192xbf16> to vector<2x16x16xbf16>
    %226 = vector.extract_strided_slice %14 {offsets = [0, 0, 176], sizes = [2, 16, 16], strides = [1, 1, 1]} : vector<2x16x192xbf16> to vector<2x16x16xbf16>
    "tpu.trace_start"() <{level = 10 : i32, message = "bqd,bkd->bqk"}> : () -> ()
    %cst_66 = arith.constant dense<0.000000e+00> : vector<2x16x16xf32>
    %227 = tpu.matmul %224, %225, %cst_66 {dimension_numbers = #tpu.dot_dimension_numbers<[2], [2], [1], [1], [0, 0, 0, 1, 1, 1], [0], [0]>} : vector<2x16x16xbf16>, vector<2x16x16xbf16>, vector<2x16x16xf32> -> vector<2x16x16xf32>
    "tpu.trace_stop"() : () -> ()
    %cst_67 = arith.constant dense<0xFF800000> : vector<2x16xf32>
    %228 = vector.multi_reduction <maximumf>, %227, %cst_67 [2] : vector<2x16x16xf32> to vector<2x16xf32>
    %229 = vector.shape_cast %228 : vector<2x16xf32> to vector<2x16x1xf32>
    %230 = vector.broadcast %229 : vector<2x16x1xf32> to vector<2x16x16xf32>
    %231 = arith.subf %227, %230 : vector<2x16x16xf32>
    %232 = math.exp %231 : vector<2x16x16xf32>
    %cst_68 = arith.constant dense<0.000000e+00> : vector<2x16xf32>
    %233 = vector.multi_reduction <add>, %232, %cst_68 [2] : vector<2x16x16xf32> to vector<2x16xf32>
    %234 = vector.shape_cast %233 : vector<2x16xf32> to vector<2x16x1xf32>
    %235 = tpu.reciprocal %234 {approx = true} : vector<2x16x1xf32> -> vector<2x16x1xf32>
    %236 = vector.broadcast %235 : vector<2x16x1xf32> to vector<2x16x16xf32>
    %237 = arith.mulf %232, %236 : vector<2x16x16xf32>
    %238 = arith.truncf %237 : vector<2x16x16xf32> to vector<2x16x16xbf16>
    "tpu.trace_start"() <{level = 10 : i32, message = "bqk,bkd->bqd"}> : () -> ()
    %cst_69 = arith.constant dense<0.000000e+00> : vector<2x16x16xf32>
    %239 = tpu.matmul %238, %226, %cst_69 {dimension_numbers = #tpu.dot_dimension_numbers<[2], [1], [1], [2], [0, 0, 0, 1, 1, 2], [0], [0]>} : vector<2x16x16xbf16>, vector<2x16x16xbf16>, vector<2x16x16xf32> -> vector<2x16x16xf32>
    "tpu.trace_stop"() : () -> ()
    %240 = vector.shape_cast %239 : vector<2x16x16xf32> to vector<32x16xf32>
    %241 = arith.truncf %240 : vector<32x16xf32> to vector<32x16xbf16>
    %c0_70 = arith.constant 0 : index
    %c176 = arith.constant 176 : index
    %242 = vector.load %arg8[%c0_70, %c176] : memref<32x192xbf16, #tpu.memory_space<vmem>>, vector<32x16xbf16>
    tpu.vector_store %arg8[%c0_70, %c176], %241 {strides = array<i32>} : memref<32x192xbf16, #tpu.memory_space<vmem>>, vector<32x16xbf16>,
    %c0_71 = arith.constant 0 : index
    %c0_72 = arith.constant 0 : index
    %243 = vector.load %arg8[%c0_71, %c0_72] : memref<32x192xbf16, #tpu.memory_space<vmem>>, vector<32x192xbf16>
    %c0_73 = arith.constant 0 : index
    %c0_74 = arith.constant 0 : index
    %244 = vector.load %arg5[%c0_73, %c0_74] : memref<192x192xbf16, #tpu.memory_space<vmem>>, vector<192x192xbf16>
    %cst_75 = arith.constant dense<0.000000e+00> : vector<32x192xf32>
    %245 = tpu.matmul %243, %244, %cst_75 {dimension_numbers = #tpu.dot_dimension_numbers<[1], [0], [0], [1], [0, 0, 1, 1], [], []>} : vector<32x192xbf16>, vector<192x192xbf16>, vector<32x192xf32> -> vector<32x192xf32>
    %c0_76 = arith.constant 0 : index
    %c0_77 = arith.constant 0 : index
    %246 = vector.load %arg6[%c0_76, %c0_77] : memref<1x192xf32, #tpu.memory_space<vmem>>, vector<1x192xf32>
    %247 = vector.broadcast %246 : vector<1x192xf32> to vector<32x192xf32>
    %248 = arith.addf %245, %247 : vector<32x192xf32>
    %249 = vector.shape_cast %248 : vector<32x192xf32> to vector<2x16x192xf32>
    %c0_78 = arith.constant 0 : index
    %c0_79 = arith.constant 0 : index
    %c0_80 = arith.constant 0 : index
    %250 = vector.load %arg7[%c0_78, %c0_79, %c0_80] : memref<2x16x192xf32, #tpu.memory_space<vmem>>, vector<2x16x192xf32>
    tpu.vector_store %arg7[%c0_78, %c0_79, %c0_80], %249 {strides = array<i32>} : memref<2x16x192xf32, #tpu.memory_space<vmem>>, vector<2x16x192xf32>,
    return
  }
  func.func @transform_0(%arg0: i32) -> (i32, i32, i32) {
    %c0_i32 = arith.constant 0 : i32
    %c0_i32_0 = arith.constant 0 : i32
    %c0_i32_1 = arith.constant 0 : i32
    return %arg0, %c0_i32, %c0_i32_0 : i32, i32, i32
  }
  func.func @transform_1(%arg0: i32) -> (i32, i32) {
    %c0_i32 = arith.constant 0 : i32
    %c0_i32_0 = arith.constant 0 : i32
    %c0_i32_1 = arith.constant 0 : i32
    return %c0_i32, %c0_i32_0 : i32, i32
  }
  func.func @transform_2(%arg0: i32) -> (i32, i32) {
    %c0_i32 = arith.constant 0 : i32
    %c0_i32_0 = arith.constant 0 : i32
    %c0_i32_1 = arith.constant 0 : i32
    return %c0_i32, %c0_i32_0 : i32, i32
  }
  func.func @transform_3(%arg0: i32) -> (i32, i32) {
    %c0_i32 = arith.constant 0 : i32
    %c0_i32_0 = arith.constant 0 : i32
    %c0_i32_1 = arith.constant 0 : i32
    return %c0_i32, %c0_i32_0 : i32, i32
  }
  func.func @transform_4(%arg0: i32) -> (i32, i32) {
    %c0_i32 = arith.constant 0 : i32
    %c0_i32_0 = arith.constant 0 : i32
    %c0_i32_1 = arith.constant 0 : i32
    return %c0_i32, %c0_i32_0 : i32, i32
  }
  func.func @transform_5(%arg0: i32) -> (i32, i32) {
    %c0_i32 = arith.constant 0 : i32
    %c0_i32_0 = arith.constant 0 : i32
    %c0_i32_1 = arith.constant 0 : i32
    return %c0_i32, %c0_i32_0 : i32, i32
  }
  func.func @transform_6(%arg0: i32) -> (i32, i32, i32) {
    %c0_i32 = arith.constant 0 : i32
    %c0_i32_0 = arith.constant 0 : i32
    %c0_i32_1 = arith.constant 0 : i32
    return %arg0, %c0_i32, %c0_i32_0 : i32, i32, i32
  }
}

</mosaic_0001>

<llo_original>
// kernel: tpu_custom_call.1
$region0: #{tpu_custom_call.1}
  #allocation0 [shape = 'u32[]', space=smem, size = 0x4, offset = 0x4, fixed_abs, tag = 'smem constant byte address 0x4 - core index']
  #allocation1 [shape = 'u32[144,128]{1,0:T(1,128)}', space=vmem, size = 0x12000, scoped, tag = 'internal scratch']
  #allocation2 [shape = 'bf16[32,192]{1,0:T(8,128)(2,1)}', space=vmem, size = 0x4000, scoped, tag = 'scratch operand']
  %s0 = inlined_call_operand.hbm [shape: f32[2,16,192], index: 0, kind: input, shape index: {}]
  %s1 = inlined_call_operand.hbm [shape: bf16[192,192], index: 1, kind: input, shape index: {}]
  %s2 = inlined_call_operand.hbm [shape: bf16[192,192], index: 2, kind: input, shape index: {}]
  %s3 = inlined_call_operand.hbm [shape: bf16[192,192], index: 3, kind: input, shape index: {}]
  %s4 = inlined_call_operand.hbm [shape: bf16[192,192], index: 4, kind: input, shape index: {}]
  %s5 = inlined_call_operand.vmem [shape: f32[1,192], index: 5, kind: input, shape index: {}]
  %s6 = inlined_call_operand.hbm [shape: f32[2,16,192], index: 6, kind: output, shape index: {}]
  %s7 = sld [smem:[#allocation0]]
  $region54: #{tpu_custom_call.1} parent=0
    _
  %s9 = ssub.s32 1, %s7
  %s10 = scalar_select 0, %s9, %s7
  $region1: #{tpu_custom_call.1} parent=0
    #allocation3 [shape = 'u8[32768]{0}', space=vmem, size = 0x8000, scoped, tag = 'input window, operand 0, single buffered']
    #allocation4 [shape = 's32[1]{0}', space=sflag, size = 0x4, scoped, tag = 'scoped memory for tpu_custom_call.1']
    #allocation5 [shape = 's32[1]{0}', space=sflag, size = 0x4, scoped, tag = 'scoped memory for tpu_custom_call.1']
    #allocation6 [shape = 'u8[98304]{0}', space=vmem, size = 0x18000, scoped, tag = 'input window, operand 1, single buffered']
    #allocation7 [shape = 's32[1]{0}', space=sflag, size = 0x4, scoped, tag = 'scoped memory for tpu_custom_call.1']
    #allocation8 [shape = 'u8[98304]{0}', space=vmem, size = 0x18000, scoped, tag = 'input window, operand 2, single buffered']
    #allocation9 [shape = 'u8[98304]{0}', space=vmem, size = 0x18000, scoped, tag = 'input window, operand 3, single buffered']
    #allocation10 [shape = 's32[1]{0}', space=sflag, size = 0x4, scoped, tag = 'scoped memory for tpu_custom_call.1']
    #allocation11 [shape = 'u8[98304]{0}', space=vmem, size = 0x18000, scoped, tag = 'input window, operand 4, single buffered']
    #allocation12 [shape = 'u8[32768]{0}', space=vmem, size = 0x8000, scoped, tag = 'output window, operand 0, single buffered']
    %11 = vsyncpa [#allocation4], 0
    %12 = vsyncpa [#allocation7], 0
    %13 = vsyncpa [#allocation10], 0
    %14 = vsyncpa [#allocation5], 0
    // Predicated region
    $region2: #{tpu_custom_call.1} parent=1 // pred_check
      _
    $region3: #{tpu_custom_call.1} parent=1 // pred_check_branch
      %16 = sbr.rel (0) target = $region5
    $region4: #{tpu_custom_call.1} parent=1 // pred_region
      %s18 = ssub.s32 1024, 1024
      %19 = vsyncadd [#allocation4], %s18
      %s20 = sshll.u32 [#allocation3], 4
      %s21 = int_to_ptr.vmem [resolvable:$true] %s20
      %26 = dma.hbm_to_vmem [thread:$0]  %s0, 1024, %s21, [#allocation4], 256, 256, 16
    $region5: #{tpu_custom_call.1} parent=1 // pred_fallthru
      _
    // Predicated region
    $region6: #{tpu_custom_call.1} parent=1 // pred_check
      _
    $region7: #{tpu_custom_call.1} parent=1 // pred_check_branch
      %28 = sbr.rel (0) target = $region9
    $region8: #{tpu_custom_call.1} parent=1 // pred_region
      %s30 = ssub.s32 3072, 3072
      %31 = vsyncadd [#allocation7], %s30
      %s32 = sshll.u32 [#allocation6], 4
      %s33 = int_to_ptr.vmem [resolvable:$true] %s32
      %38 = dma.hbm_to_vmem [thread:$0]  %s1, 3072, %s33, [#allocation7], 128, 128, 8
    $region9: #{tpu_custom_call.1} parent=1 // pred_fallthru
      _
    // Predicated region
    $region10: #{tpu_custom_call.1} parent=1 // pred_check
      _
    $region11: #{tpu_custom_call.1} parent=1 // pred_check_branch
      %40 = sbr.rel (0) target = $region13
    $region12: #{tpu_custom_call.1} parent=1 // pred_region
      %s42 = ssub.s32 3072, 3072
      %43 = vsyncadd [#allocation7], %s42
      %s44 = sshll.u32 [#allocation8], 4
      %s45 = int_to_ptr.vmem [resolvable:$true] %s44
      %50 = dma.hbm_to_vmem [thread:$0]  %s2, 3072, %s45, [#allocation7], 128, 128, 8
    $region13: #{tpu_custom_call.1} parent=1 // pred_fallthru
      _
    // Predicated region
    $region14: #{tpu_custom_call.1} parent=1 // pred_check
      _
    $region15: #{tpu_custom_call.1} parent=1 // pred_check_branch
      %52 = sbr.rel (0) target = $region17
    $region16: #{tpu_custom_call.1} parent=1 // pred_region
      %s54 = ssub.s32 3072, 3072
      %55 = vsyncadd [#allocation10], %s54
      %s56 = sshll.u32 [#allocation9], 4
      %s57 = int_to_ptr.vmem [resolvable:$true] %s56
      %62 = dma.hbm_to_vmem [thread:$0]  %s3, 3072, %s57, [#allocation10], 128, 128, 8
    $region17: #{tpu_custom_call.1} parent=1 // pred_fallthru
      _
    // Predicated region
    $region18: #{tpu_custom_call.1} parent=1 // pred_check
      _
    $region19: #{tpu_custom_call.1} parent=1 // pred_check_branch
      %64 = sbr.rel (0) target = $region21
    $region20: #{tpu_custom_call.1} parent=1 // pred_region
      %s66 = ssub.s32 3072, 3072
      %67 = vsyncadd [#allocation10], %s66
      %s68 = sshll.u32 [#allocation11], 4
      %s69 = int_to_ptr.vmem [resolvable:$true] %s68
      %74 = dma.hbm_to_vmem [thread:$0]  %s4, 3072, %s69, [#allocation10], 128, 128, 8
    $region21: #{tpu_custom_call.1} parent=1 // pred_fallthru
      _
    // Predicated region
    $region22: #{tpu_custom_call.1} parent=1 // pred_check
      _
    $region23: #{tpu_custom_call.1} parent=1 // pred_check_branch
      %76 = sbr.rel (0) target = $region25
    $region24: #{tpu_custom_call.1} parent=1 // pred_region
      _
    $region25: #{tpu_custom_call.1} parent=1 // pred_fallthru
      _
    // Predicated region
    $region26: #{tpu_custom_call.1} parent=1 // pred_check
      _
    $region27: #{tpu_custom_call.1} parent=1 // pred_check_branch
      %78 = sbr.rel (0) target = $region29
    $region28: #{tpu_custom_call.1} parent=1 // pred_region
      %79 = dma.done [#allocation4], 1024
    $region29: #{tpu_custom_call.1} parent=1 // pred_fallthru
      _
    // Predicated region
    $region30: #{tpu_custom_call.1} parent=1 // pred_check
      _
    $region31: #{tpu_custom_call.1} parent=1 // pred_check_branch
      %81 = sbr.rel (0) target = $region33
    $region32: #{tpu_custom_call.1} parent=1 // pred_region
      %82 = dma.done [#allocation7], 3072
    $region33: #{tpu_custom_call.1} parent=1 // pred_fallthru
      _
    // Predicated region
    $region34: #{tpu_custom_call.1} parent=1 // pred_check
      _
    $region35: #{tpu_custom_call.1} parent=1 // pred_check_branch
      %84 = sbr.rel (0) target = $region37
    $region36: #{tpu_custom_call.1} parent=1 // pred_region
      %85 = dma.done [#allocation7], 3072
    $region37: #{tpu_custom_call.1} parent=1 // pred_fallthru
      _
    // Predicated region
    $region38: #{tpu_custom_call.1} parent=1 // pred_check
      _
    $region39: #{tpu_custom_call.1} parent=1 // pred_check_branch
      %87 = sbr.rel (0) target = $region41
    $region40: #{tpu_custom_call.1} parent=1 // pred_region
      %88 = dma.done [#allocation10], 3072
    $region41: #{tpu_custom_call.1} parent=1 // pred_fallthru
      _
    // Predicated region
    $region42: #{tpu_custom_call.1} parent=1 // pred_check
      _
    $region43: #{tpu_custom_call.1} parent=1 // pred_check_branch
      %90 = sbr.rel (0) target = $region45
    $region44: #{tpu_custom_call.1} parent=1 // pred_region
      %91 = dma.done [#allocation10], 3072
    $region45: #{tpu_custom_call.1} parent=1 // pred_fallthru
      _
    %v93 = vld [vmem:[#allocation3] sm:$0xff]
    %v94 = vld [vmem:[#allocation3 + $0x8] sm:$0xff]
    %v95 = vld [vmem:[#allocation3 + $0x10] sm:$0xff]
    %v96 = vld [vmem:[#allocation3 + $0x18] sm:$0xff]
    %v97 = vld [vmem:[#allocation3 + $0x20] sm:$0xff]
    %v98 = vld [vmem:[#allocation3 + $0x28] sm:$0xff]
    %v99 = vld [vmem:[#allocation3 + $0x30] sm:$0xff]
    %v100 = vld [vmem:[#allocation3 + $0x38] sm:$0xff]
    %v101 = vpack.c.bf16 %v95, %v93
    %v102 = vpack.c.bf16 %v96, %v94
    %v103 = vpack.c.bf16 %v99, %v97
    %v104 = vpack.c.bf16 %v100, %v98
    %v105 = vld [vmem:[#allocation6] sm:$0xff]
    %v106 = vld [vmem:[#allocation6 + $0x8] sm:$0xff]
    %v107 = vld [vmem:[#allocation6 + $0x10] sm:$0xff]
    %v108 = vld [vmem:[#allocation6 + $0x18] sm:$0xff]
    %v109 = vld [vmem:[#allocation6 + $0x20] sm:$0xff]
    %v110 = vld [vmem:[#allocation6 + $0x28] sm:$0xff]
    %v111 = vld [vmem:[#allocation6 + $0x30] sm:$0xff]
    %v112 = vld [vmem:[#allocation6 + $0x38] sm:$0xff]
    %v113 = vld [vmem:[#allocation6 + $0x40] sm:$0xff]
    %v114 = vld [vmem:[#allocation6 + $0x48] sm:$0xff]
    %v115 = vld [vmem:[#allocation6 + $0x50] sm:$0xff]
    %v116 = vld [vmem:[#allocation6 + $0x58] sm:$0xff]
    %v117 = vld [vmem:[#allocation6 + $0x60] sm:$0xff]
    %v118 = vld [vmem:[#allocation6 + $0x68] sm:$0xff]
    %v119 = vld [vmem:[#allocation6 + $0x70] sm:$0xff]
    %v120 = vld [vmem:[#allocation6 + $0x78] sm:$0xff]
    %v121 = vld [vmem:[#allocation6 + $0x80] sm:$0xff]
    %v122 = vld [vmem:[#allocation6 + $0x88] sm:$0xff]
    %v123 = vld [vmem:[#allocation6 + $0x90] sm:$0xff]
    %v124 = vld [vmem:[#allocation6 + $0x98] sm:$0xff]
    %v125 = vld [vmem:[#allocation6 + $0xa0] sm:$0xff]
    %v126 = vld [vmem:[#allocation6 + $0xa8] sm:$0xff]
    %v127 = vld [vmem:[#allocation6 + $0xb0] sm:$0xff]
    %v128 = vld [vmem:[#allocation6 + $0xb8] sm:$0xff]
    %v153 = vunpack.c.l.b16 %v105
    %v154 = vunpack.c.h.b16 %v105
    %v155 = vunpack.c.l.b16 %v106
    %v156 = vunpack.c.h.b16 %v106
    %v157 = vunpack.c.l.b16 %v107
    %v158 = vunpack.c.h.b16 %v107
    %v159 = vunpack.c.l.b16 %v108
    %v160 = vunpack.c.h.b16 %v108
    %v161 = vunpack.c.l.b16 %v109
    %v162 = vunpack.c.h.b16 %v109
    %v163 = vunpack.c.l.b16 %v110
    %v164 = vunpack.c.h.b16 %v110
    %v165 = vunpack.c.l.b16 %v111
    %v166 = vunpack.c.h.b16 %v111
    %v167 = vunpack.c.l.b16 %v112
    %v168 = vunpack.c.h.b16 %v112
    %v169 = vunpack.c.l.b16 %v113
    %v170 = vunpack.c.h.b16 %v113
    %v171 = vunpack.c.l.b16 %v114
    %v172 = vunpack.c.h.b16 %v114
    %v173 = vunpack.c.l.b16 %v115
    %v174 = vunpack.c.h.b16 %v115
    %v175 = vunpack.c.l.b16 %v116
    %v176 = vunpack.c.h.b16 %v116
    %v177 = vunpack.c.l.b16 %v117
    %v178 = vunpack.c.h.b16 %v117
    %v179 = vunpack.c.l.b16 %v118
    %v180 = vunpack.c.h.b16 %v118
    %v181 = vunpack.c.l.b16 %v119
    %v182 = vunpack.c.h.b16 %v119
    %v183 = vunpack.c.l.b16 %v120
    %v184 = vunpack.c.h.b16 %v120
    %v185 = vunpack.c.l.b16 %v121
    %v186 = vunpack.c.h.b16 %v121
    %v187 = vunpack.c.l.b16 %v122
    %v188 = vunpack.c.h.b16 %v122
    %v189 = vunpack.c.l.b16 %v123
    %v190 = vunpack.c.h.b16 %v123
    %v191 = vunpack.c.l.b16 %v124
    %v192 = vunpack.c.h.b16 %v124
    %v193 = vunpack.c.l.b16 %v125
    %v194 = vunpack.c.h.b16 %v125
    %v195 = vunpack.c.l.b16 %v126
    %v196 = vunpack.c.h.b16 %v126
    %v197 = vunpack.c.l.b16 %v127
    %v198 = vunpack.c.h.b16 %v127
    %v199 = vunpack.c.l.b16 %v128
    %v200 = vunpack.c.h.b16 %v128
    %v201 = vpack.c.b16 %v155, %v153
    %v202 = vpack.c.b16 %v156, %v154
    %v203 = vpack.c.b16 %v159, %v157
    %v204 = vpack.c.b16 %v160, %v158
    %v205 = vpack.c.b16 %v163, %v161
    %v206 = vpack.c.b16 %v164, %v162
    %v207 = vpack.c.b16 %v167, %v165
    %v208 = vpack.c.b16 %v168, %v166
    %v209 = vpack.c.b16 %v171, %v169
    %v210 = vpack.c.b16 %v172, %v170
    %v211 = vpack.c.b16 %v175, %v173
    %v212 = vpack.c.b16 %v176, %v174
    %v213 = vpack.c.b16 %v179, %v177
    %v214 = vpack.c.b16 %v180, %v178
    %v215 = vpack.c.b16 %v183, %v181
    %v216 = vpack.c.b16 %v184, %v182
    %v217 = vpack.c.b16 %v187, %v185
    %v218 = vpack.c.b16 %v188, %v186
    %v219 = vpack.c.b16 %v191, %v189
    %v220 = vpack.c.b16 %v192, %v190
    %v221 = vpack.c.b16 %v195, %v193
    %v222 = vpack.c.b16 %v196, %v194
    %v223 = vpack.c.b16 %v199, %v197
    %v224 = vpack.c.b16 %v200, %v198
    %vm249 = vcmask 523264
    %v251 = vsel %vm249, %v102, 0
    %v254 = vsel %vm249, %v104, 0
    %256 = vmatprep.subr.bf16.mxu0 %v216
    %257 = vmatpush1.bf16.msra.mxu0 %v215
    %258 = vmatprep.subr.bf16.mxu0 %v214
    %259 = vmatpush1.bf16.msra.mxu0 %v213
    %260 = vmatprep.subr.bf16.mxu0 %v212
    %261 = vmatpush1.bf16.msra.mxu0 %v211
    %262 = vmatprep.subr.bf16.mxu0 %v210
    %263 = vmatpush1.bf16.msra.mxu0 %v209
    %264 = vmatprep.subr.bf16.mxu0 %v208
    %265 = vmatpush1.bf16.msra.mxu0 %v207
    %266 = vmatprep.subr.bf16.mxu0 %v206
    %267 = vmatpush1.bf16.msra.mxu0 %v205
    %268 = vmatprep.subr.bf16.mxu0 %v204
    %269 = vmatpush1.bf16.msra.mxu0 %v203
    %270 = vmatprep.subr.bf16.mxu0 %v202
    %271 = vmatpush1.bf16.msra.mxu0 %v201
    %272 = vmatprep.subr.bf16.mxu0 0
    %273 = vmatpush2.bf16.msra.mxu0 0
    %274 = vmatprep.subr.bf16.mxu0 0
    %275 = vmatpush2.bf16.msra.mxu0 0
    %276 = vmatprep.subr.bf16.mxu0 0
    %277 = vmatpush2.bf16.msra.mxu0 0
    %278 = vmatprep.subr.bf16.mxu0 0
    %279 = vmatpush2.bf16.msra.mxu0 0
    %280 = vmatprep.subr.bf16.mxu0 %v224
    %281 = vmatpush2.bf16.msra.mxu0 %v223
    %282 = vmatprep.subr.bf16.mxu0 %v222
    %283 = vmatpush2.bf16.msra.mxu0 %v221
    %284 = vmatprep.subr.bf16.mxu0 %v220
    %285 = vmatpush2.bf16.msra.mxu0 %v219
    %286 = vmatprep.subr.bf16.mxu0 %v218
    %287 = vmatpush2.bf16.msra.mxu0 %v217
    %288 = vmatprep.mubr.bf16.mxu0 %v251
    %289 = vmatmul.mubr.bf16.gmra.mxu0 %v101
    %v290 = vpop.f32.mrf.mxu0
    %v291 = vadd.f32 0.0, %v290
    %v292 = vpop.f32.mrf.mxu0
    %v293 = vadd.f32 0.0, %v292
    %v294 = vpop.f32.mrf.mxu0
    %v295 = vadd.f32 0.0, %v294
    %v296 = vpop.f32.mrf.mxu0
    %v297 = vadd.f32 0.0, %v296
    %298 = vmatprep.mubr.bf16.mxu0 %v254
    %299 = vmatmul.mubr.bf16.gmra.mxu0 %v103
    %v300 = vpop.f32.mrf.mxu0
    %v301 = vadd.f32 0.0, %v300
    %v302 = vpop.f32.mrf.mxu0
    %v303 = vadd.f32 0.0, %v302
    %v304 = vpop.f32.mrf.mxu0
    %v305 = vadd.f32 0.0, %v304
    %v306 = vpop.f32.mrf.mxu0
    %v307 = vadd.f32 0.0, %v306
    %308 = vdwg.mxu0
    %v309 = vpack.c.bf16 %v295, %v291
    %v310 = vpack.c.bf16 %v297, %v293
    %v311 = vpack.c.bf16 %v305, %v301
    %v312 = vpack.c.bf16 %v307, %v303
    %v313 = vld [vmem:[#allocation8] sm:$0xff]
    %v314 = vld [vmem:[#allocation8 + $0x8] sm:$0xff]
    %v315 = vld [vmem:[#allocation8 + $0x10] sm:$0xff]
    %v316 = vld [vmem:[#allocation8 + $0x18] sm:$0xff]
    %v317 = vld [vmem:[#allocation8 + $0x20] sm:$0xff]
    %v318 = vld [vmem:[#allocation8 + $0x28] sm:$0xff]
    %v319 = vld [vmem:[#allocation8 + $0x30] sm:$0xff]
    %v320 = vld [vmem:[#allocation8 + $0x38] sm:$0xff]
    %v321 = vld [vmem:[#allocation8 + $0x40] sm:$0xff]
    %v322 = vld [vmem:[#allocation8 + $0x48] sm:$0xff]
    %v323 = vld [vmem:[#allocation8 + $0x50] sm:$0xff]
    %v324 = vld [vmem:[#allocation8 + $0x58] sm:$0xff]
    %v325 = vld [vmem:[#allocation8 + $0x60] sm:$0xff]
    %v326 = vld [vmem:[#allocation8 + $0x68] sm:$0xff]
    %v327 = vld [vmem:[#allocation8 + $0x70] sm:$0xff]
    %v328 = vld [vmem:[#allocation8 + $0x78] sm:$0xff]
    %v329 = vld [vmem:[#allocation8 + $0x80] sm:$0xff]
    %v330 = vld [vmem:[#allocation8 + $0x88] sm:$0xff]
    %v331 = vld [vmem:[#allocation8 + $0x90] sm:$0xff]
    %v332 = vld [vmem:[#allocation8 + $0x98] sm:$0xff]
    %v333 = vld [vmem:[#allocation8 + $0xa0] sm:$0xff]
    %v334 = vld [vmem:[#allocation8 + $0xa8] sm:$0xff]
    %v335 = vld [vmem:[#allocation8 + $0xb0] sm:$0xff]
    %v336 = vld [vmem:[#allocation8 + $0xb8] sm:$0xff]
    %v361 = vunpack.c.l.b16 %v313
    %v362 = vunpack.c.h.b16 %v313
    %v363 = vunpack.c.l.b16 %v314
    %v364 = vunpack.c.h.b16 %v314
    %v365 = vunpack.c.l.b16 %v315
    %v366 = vunpack.c.h.b16 %v315
    %v367 = vunpack.c.l.b16 %v316
    %v368 = vunpack.c.h.b16 %v316
    %v369 = vunpack.c.l.b16 %v317
    %v370 = vunpack.c.h.b16 %v317
    %v371 = vunpack.c.l.b16 %v318
    %v372 = vunpack.c.h.b16 %v318
    %v373 = vunpack.c.l.b16 %v319
    %v374 = vunpack.c.h.b16 %v319
    %v375 = vunpack.c.l.b16 %v320
    %v376 = vunpack.c.h.b16 %v320
    %v377 = vunpack.c.l.b16 %v321
    %v378 = vunpack.c.h.b16 %v321
    %v379 = vunpack.c.l.b16 %v322
    %v380 = vunpack.c.h.b16 %v322
    %v381 = vunpack.c.l.b16 %v323
    %v382 = vunpack.c.h.b16 %v323
    %v383 = vunpack.c.l.b16 %v324
    %v384 = vunpack.c.h.b16 %v324
    %v385 = vunpack.c.l.b16 %v325
    %v386 = vunpack.c.h.b16 %v325
    %v387 = vunpack.c.l.b16 %v326
    %v388 = vunpack.c.h.b16 %v326
    %v389 = vunpack.c.l.b16 %v327
    %v390 = vunpack.c.h.b16 %v327
    %v391 = vunpack.c.l.b16 %v328
    %v392 = vunpack.c.h.b16 %v328
    %v393 = vunpack.c.l.b16 %v329
    %v394 = vunpack.c.h.b16 %v329
    %v395 = vunpack.c.l.b16 %v330
    %v396 = vunpack.c.h.b16 %v330
    %v397 = vunpack.c.l.b16 %v331
    %v398 = vunpack.c.h.b16 %v331
    %v399 = vunpack.c.l.b16 %v332
    %v400 = vunpack.c.h.b16 %v332
    %v401 = vunpack.c.l.b16 %v333
    %v402 = vunpack.c.h.b16 %v333
    %v403 = vunpack.c.l.b16 %v334
    %v404 = vunpack.c.h.b16 %v334
    %v405 = vunpack.c.l.b16 %v335
    %v406 = vunpack.c.h.b16 %v335
    %v407 = vunpack.c.l.b16 %v336
    %v408 = vunpack.c.h.b16 %v336
    %v409 = vpack.c.b16 %v363, %v361
    %v410 = vpack.c.b16 %v364, %v362
    %v411 = vpack.c.b16 %v367, %v365
    %v412 = vpack.c.b16 %v368, %v366
    %v413 = vpack.c.b16 %v371, %v369
    %v414 = vpack.c.b16 %v372, %v370
    %v415 = vpack.c.b16 %v375, %v373
    %v416 = vpack.c.b16 %v376, %v374
    %v417 = vpack.c.b16 %v379, %v377
    %v418 = vpack.c.b16 %v380, %v378
    %v419 = vpack.c.b16 %v383, %v381
    %v420 = vpack.c.b16 %v384, %v382
    %v421 = vpack.c.b16 %v387, %v385
    %v422 = vpack.c.b16 %v388, %v386
    %v423 = vpack.c.b16 %v391, %v389
    %v424 = vpack.c.b16 %v392, %v390
    %v425 = vpack.c.b16 %v395, %v393
    %v426 = vpack.c.b16 %v396, %v394
    %v427 = vpack.c.b16 %v399, %v397
    %v428 = vpack.c.b16 %v400, %v398
    %v429 = vpack.c.b16 %v403, %v401
    %v430 = vpack.c.b16 %v404, %v402
    %v431 = vpack.c.b16 %v407, %v405
    %v432 = vpack.c.b16 %v408, %v406
    %457 = vmatprep.subr.bf16.mxu0 %v424
    %458 = vmatpush1.bf16.msra.mxu0 %v423
    %459 = vmatprep.subr.bf16.mxu0 %v422
    %460 = vmatpush1.bf16.msra.mxu0 %v421
    %461 = vmatprep.subr.bf16.mxu0 %v420
    %462 = vmatpush1.bf16.msra.mxu0 %v419
    %463 = vmatprep.subr.bf16.mxu0 %v418
    %464 = vmatpush1.bf16.msra.mxu0 %v417
    %465 = vmatprep.subr.bf16.mxu0 %v416
    %466 = vmatpush1.bf16.msra.mxu0 %v415
    %467 = vmatprep.subr.bf16.mxu0 %v414
    %468 = vmatpush1.bf16.msra.mxu0 %v413
    %469 = vmatprep.subr.bf16.mxu0 %v412
    %470 = vmatpush1.bf16.msra.mxu0 %v411
    %471 = vmatprep.subr.bf16.mxu0 %v410
    %472 = vmatpush1.bf16.msra.mxu0 %v409
    %473 = vmatprep.subr.bf16.mxu0 0
    %474 = vmatpush2.bf16.msra.mxu0 0
    %475 = vmatprep.subr.bf16.mxu0 0
    %476 = vmatpush2.bf16.msra.mxu0 0
    %477 = vmatprep.subr.bf16.mxu0 0
    %478 = vmatpush2.bf16.msra.mxu0 0
    %479 = vmatprep.subr.bf16.mxu0 0
    %480 = vmatpush2.bf16.msra.mxu0 0
    %481 = vmatprep.subr.bf16.mxu0 %v432
    %482 = vmatpush2.bf16.msra.mxu0 %v431
    %483 = vmatprep.subr.bf16.mxu0 %v430
    %484 = vmatpush2.bf16.msra.mxu0 %v429
    %485 = vmatprep.subr.bf16.mxu0 %v428
    %486 = vmatpush2.bf16.msra.mxu0 %v427
    %487 = vmatprep.subr.bf16.mxu0 %v426
    %488 = vmatpush2.bf16.msra.mxu0 %v425
    %489 = vmatprep.mubr.bf16.mxu0 %v251
    %490 = vmatmul.mubr.bf16.gmra.mxu0 %v101
    %v491 = vpop.f32.mrf.mxu0
    %v492 = vadd.f32 0.0, %v491
    %v493 = vpop.f32.mrf.mxu0
    %v494 = vadd.f32 0.0, %v493
    %v495 = vpop.f32.mrf.mxu0
    %v496 = vadd.f32 0.0, %v495
    %v497 = vpop.f32.mrf.mxu0
    %v498 = vadd.f32 0.0, %v497
    %499 = vmatprep.mubr.bf16.mxu0 %v254
    %500 = vmatmul.mubr.bf16.gmra.mxu0 %v103
    %v501 = vpop.f32.mrf.mxu0
    %v502 = vadd.f32 0.0, %v501
    %v503 = vpop.f32.mrf.mxu0
    %v504 = vadd.f32 0.0, %v503
    %v505 = vpop.f32.mrf.mxu0
    %v506 = vadd.f32 0.0, %v505
    %v507 = vpop.f32.mrf.mxu0
    %v508 = vadd.f32 0.0, %v507
    %509 = vdwg.mxu0
    %v510 = vpack.c.bf16 %v496, %v492
    %v511 = vpack.c.bf16 %v498, %v494
    %v512 = vpack.c.bf16 %v506, %v502
    %v513 = vpack.c.bf16 %v508, %v504
    %v514 = vld [vmem:[#allocation9] sm:$0xff]
    %v515 = vld [vmem:[#allocation9 + $0x8] sm:$0xff]
    %v516 = vld [vmem:[#allocation9 + $0x10] sm:$0xff]
    %v517 = vld [vmem:[#allocation9 + $0x18] sm:$0xff]
    %v518 = vld [vmem:[#allocation9 + $0x20] sm:$0xff]
    %v519 = vld [vmem:[#allocation9 + $0x28] sm:$0xff]
    %v520 = vld [vmem:[#allocation9 + $0x30] sm:$0xff]
    %v521 = vld [vmem:[#allocation9 + $0x38] sm:$0xff]
    %v522 = vld [vmem:[#allocation9 + $0x40] sm:$0xff]
    %v523 = vld [vmem:[#allocation9 + $0x48] sm:$0xff]
    %v524 = vld [vmem:[#allocation9 + $0x50] sm:$0xff]
    %v525 = vld [vmem:[#allocation9 + $0x58] sm:$0xff]
    %v526 = vld [vmem:[#allocation9 + $0x60] sm:$0xff]
    %v527 = vld [vmem:[#allocation9 + $0x68] sm:$0xff]
    %v528 = vld [vmem:[#allocation9 + $0x70] sm:$0xff]
    %v529 = vld [vmem:[#allocation9 + $0x78] sm:$0xff]
    %v530 = vld [vmem:[#allocation9 + $0x80] sm:$0xff]
    %v531 = vld [vmem:[#allocation9 + $0x88] sm:$0xff]
    %v532 = vld [vmem:[#allocation9 + $0x90] sm:$0xff]
    %v533 = vld [vmem:[#allocation9 + $0x98] sm:$0xff]
    %v534 = vld [vmem:[#allocation9 + $0xa0] sm:$0xff]
    %v535 = vld [vmem:[#allocation9 + $0xa8] sm:$0xff]
    %v536 = vld [vmem:[#allocation9 + $0xb0] sm:$0xff]
    %v537 = vld [vmem:[#allocation9 + $0xb8] sm:$0xff]
    %v562 = vunpack.c.l.b16 %v514
    %v563 = vunpack.c.h.b16 %v514
    %v564 = vunpack.c.l.b16 %v515
    %v565 = vunpack.c.h.b16 %v515
    %v566 = vunpack.c.l.b16 %v516
    %v567 = vunpack.c.h.b16 %v516
    %v568 = vunpack.c.l.b16 %v517
    %v569 = vunpack.c.h.b16 %v517
    %v570 = vunpack.c.l.b16 %v518
    %v571 = vunpack.c.h.b16 %v518
    %v572 = vunpack.c.l.b16 %v519
    %v573 = vunpack.c.h.b16 %v519
    %v574 = vunpack.c.l.b16 %v520
    %v575 = vunpack.c.h.b16 %v520
    %v576 = vunpack.c.l.b16 %v521
    %v577 = vunpack.c.h.b16 %v521
    %v578 = vunpack.c.l.b16 %v522
    %v579 = vunpack.c.h.b16 %v522
    %v580 = vunpack.c.l.b16 %v523
    %v581 = vunpack.c.h.b16 %v523
    %v582 = vunpack.c.l.b16 %v524
    %v583 = vunpack.c.h.b16 %v524
    %v584 = vunpack.c.l.b16 %v525
    %v585 = vunpack.c.h.b16 %v525
    %v586 = vunpack.c.l.b16 %v526
    %v587 = vunpack.c.h.b16 %v526
    %v588 = vunpack.c.l.b16 %v527
    %v589 = vunpack.c.h.b16 %v527
    %v590 = vunpack.c.l.b16 %v528
    %v591 = vunpack.c.h.b16 %v528
    %v592 = vunpack.c.l.b16 %v529
    %v593 = vunpack.c.h.b16 %v529
    %v594 = vunpack.c.l.b16 %v530
    %v595 = vunpack.c.h.b16 %v530
    %v596 = vunpack.c.l.b16 %v531
    %v597 = vunpack.c.h.b16 %v531
    %v598 = vunpack.c.l.b16 %v532
    %v599 = vunpack.c.h.b16 %v532
    %v600 = vunpack.c.l.b16 %v533
    %v601 = vunpack.c.h.b16 %v533
    %v602 = vunpack.c.l.b16 %v534
    %v603 = vunpack.c.h.b16 %v534
    %v604 = vunpack.c.l.b16 %v535
    %v605 = vunpack.c.h.b16 %v535
    %v606 = vunpack.c.l.b16 %v536
    %v607 = vunpack.c.h.b16 %v536
    %v608 = vunpack.c.l.b16 %v537
    %v609 = vunpack.c.h.b16 %v537
    %v610 = vpack.c.b16 %v564, %v562
    %v611 = vpack.c.b16 %v565, %v563
    %v612 = vpack.c.b16 %v568, %v566
    %v613 = vpack.c.b16 %v569, %v567
    %v614 = vpack.c.b16 %v572, %v570
    %v615 = vpack.c.b16 %v573, %v571
    %v616 = vpack.c.b16 %v576, %v574
    %v617 = vpack.c.b16 %v577, %v575
    %v618 = vpack.c.b16 %v580, %v578
    %v619 = vpack.c.b16 %v581, %v579
    %v620 = vpack.c.b16 %v584, %v582
    %v621 = vpack.c.b16 %v585, %v583
    %v622 = vpack.c.b16 %v588, %v586
    %v623 = vpack.c.b16 %v589, %v587
    %v624 = vpack.c.b16 %v592, %v590
    %v625 = vpack.c.b16 %v593, %v591
    %v626 = vpack.c.b16 %v596, %v594
    %v627 = vpack.c.b16 %v597, %v595
    %v628 = vpack.c.b16 %v600, %v598
    %v629 = vpack.c.b16 %v601, %v599
    %v630 = vpack.c.b16 %v604, %v602
    %v631 = vpack.c.b16 %v605, %v603
    %v632 = vpack.c.b16 %v608, %v606
    %v633 = vpack.c.b16 %v609, %v607
    %658 = vmatprep.subr.bf16.mxu0 %v625
    %659 = vmatpush1.bf16.msra.mxu0 %v624
    %660 = vmatprep.subr.bf16.mxu0 %v623
    %661 = vmatpush1.bf16.msra.mxu0 %v622
    %662 = vmatprep.subr.bf16.mxu0 %v621
    %663 = vmatpush1.bf16.msra.mxu0 %v620
    %664 = vmatprep.subr.bf16.mxu0 %v619
    %665 = vmatpush1.bf16.msra.mxu0 %v618
    %666 = vmatprep.subr.bf16.mxu0 %v617
    %667 = vmatpush1.bf16.msra.mxu0 %v616
    %668 = vmatprep.subr.bf16.mxu0 %v615
    %669 = vmatpush1.bf16.msra.mxu0 %v614
    %670 = vmatprep.subr.bf16.mxu0 %v613
    %671 = vmatpush1.bf16.msra.mxu0 %v612
    %672 = vmatprep.subr.bf16.mxu0 %v611
    %673 = vmatpush1.bf16.msra.mxu0 %v610
    %674 = vmatprep.subr.bf16.mxu0 0
    %675 = vmatpush2.bf16.msra.mxu0 0
    %676 = vmatprep.subr.bf16.mxu0 0
    %677 = vmatpush2.bf16.msra.mxu0 0
    %678 = vmatprep.subr.bf16.mxu0 0
    %679 = vmatpush2.bf16.msra.mxu0 0
    %680 = vmatprep.subr.bf16.mxu0 0
    %681 = vmatpush2.bf16.msra.mxu0 0
    %682 = vmatprep.subr.bf16.mxu0 %v633
    %683 = vmatpush2.bf16.msra.mxu0 %v632
    %684 = vmatprep.subr.bf16.mxu0 %v631
    %685 = vmatpush2.bf16.msra.mxu0 %v630
    %686 = vmatprep.subr.bf16.mxu0 %v629
    %687 = vmatpush2.bf16.msra.mxu0 %v628
    %688 = vmatprep.subr.bf16.mxu0 %v627
    %689 = vmatpush2.bf16.msra.mxu0 %v626
    %690 = vmatprep.mubr.bf16.mxu0 %v251
    %691 = vmatmul.mubr.bf16.gmra.mxu0 %v101
    %v692 = vpop.f32.mrf.mxu0
    %v693 = vadd.f32 0.0, %v692
    %v694 = vpop.f32.mrf.mxu0
    %v695 = vadd.f32 0.0, %v694
    %v696 = vpop.f32.mrf.mxu0
    %v697 = vadd.f32 0.0, %v696
    %v698 = vpop.f32.mrf.mxu0
    %v699 = vadd.f32 0.0, %v698
    %700 = vmatprep.mubr.bf16.mxu0 %v254
    %701 = vmatmul.mubr.bf16.gmra.mxu0 %v103
    %v702 = vpop.f32.mrf.mxu0
    %v703 = vadd.f32 0.0, %v702
    %v704 = vpop.f32.mrf.mxu0
    %v705 = vadd.f32 0.0, %v704
    %v706 = vpop.f32.mrf.mxu0
    %v707 = vadd.f32 0.0, %v706
    %v708 = vpop.f32.mrf.mxu0
    %v709 = vadd.f32 0.0, %v708
    %710 = vdwg.mxu0
    %v711 = vpack.c.bf16 %v697, %v693
    %v712 = vpack.c.bf16 %v699, %v695
    %v713 = vpack.c.bf16 %v707, %v703
    %v714 = vpack.c.bf16 %v709, %v705
    %vm715 = vcmask 130048
    %v717 = vsel %vm715, %v309, 0
    %v720 = vsel %vm715, %v510, 0
    %722 = vmatprep.subr.bf16.mxu0 0
    %723 = vmatpush1.bf16.xpose.msra.mxu0 0
    %724 = vmatprep.subr.bf16.mxu0 0
    %725 = vmatpush1.bf16.xpose.msra.mxu0 0
    %726 = vmatprep.subr.bf16.mxu0 0
    %727 = vmatpush1.bf16.xpose.msra.mxu0 0
    %728 = vmatprep.subr.bf16.mxu0 0
    %729 = vmatpush1.bf16.xpose.msra.mxu0 0
    %730 = vmatprep.subr.bf16.mxu0 0
    %731 = vmatpush1.bf16.xpose.msra.mxu0 0
    %732 = vmatprep.subr.bf16.mxu0 0
    %733 = vmatpush1.bf16.xpose.msra.mxu0 0
    %734 = vmatprep.subr.bf16.mxu0 0
    %735 = vmatpush1.bf16.xpose.msra.mxu0 0
    %736 = vmatprep.subr.bf16.mxu0 0
    %737 = vmatpush1.bf16.xpose.msra.mxu0 %v720
    %738 = vmatprep.subr.bf16.mxu0 0
    %739 = vmatpush2.bf16.xpose.msra.mxu0 0
    %740 = vmatprep.subr.bf16.mxu0 0
    %741 = vmatpush2.bf16.xpose.msra.mxu0 0
    %742 = vmatprep.subr.bf16.mxu0 0
    %743 = vmatpush2.bf16.xpose.msra.mxu0 0
    %744 = vmatprep.subr.bf16.mxu0 0
    %745 = vmatpush2.bf16.xpose.msra.mxu0 0
    %746 = vmatprep.subr.bf16.mxu0 0
    %747 = vmatpush2.bf16.xpose.msra.mxu0 0
    %748 = vmatprep.subr.bf16.mxu0 0
    %749 = vmatpush2.bf16.xpose.msra.mxu0 0
    %750 = vmatprep.subr.bf16.mxu0 0
    %751 = vmatpush2.bf16.xpose.msra.mxu0 0
    %752 = vmatprep.subr.bf16.mxu0 0
    %753 = vmatpush2.bf16.xpose.msra.mxu0 0
    %754 = vmatprep.mubr.bf16.mxu0 0
    %755 = vmatmul.mubr.bf16.gmra.mxu0 %v717
    %v756 = vpop.f32.mrf.mxu0
    %v757 = vadd.f32 0.0, %v756
    %v758 = vpop.f32.mrf.mxu0
    %v759 = vpop.f32.mrf.mxu0
    %v760 = vadd.f32 0.0, %v759
    %v761 = vpop.f32.mrf.mxu0
    %762 = vdwg.mxu0
    %v764 = vsel %vm715, %v311, 0
    %v767 = vsel %vm715, %v512, 0
    %769 = vmatprep.subr.bf16.mxu0 0
    %770 = vmatpush1.bf16.xpose.msra.mxu0 0
    %771 = vmatprep.subr.bf16.mxu0 0
    %772 = vmatpush1.bf16.xpose.msra.mxu0 0
    %773 = vmatprep.subr.bf16.mxu0 0
    %774 = vmatpush1.bf16.xpose.msra.mxu0 0
    %775 = vmatprep.subr.bf16.mxu0 0
    %776 = vmatpush1.bf16.xpose.msra.mxu0 0
    %777 = vmatprep.subr.bf16.mxu0 0
    %778 = vmatpush1.bf16.xpose.msra.mxu0 0
    %779 = vmatprep.subr.bf16.mxu0 0
    %780 = vmatpush1.bf16.xpose.msra.mxu0 0
    %781 = vmatprep.subr.bf16.mxu0 0
    %782 = vmatpush1.bf16.xpose.msra.mxu0 0
    %783 = vmatprep.subr.bf16.mxu0 0
    %784 = vmatpush1.bf16.xpose.msra.mxu0 %v767
    %785 = vmatprep.subr.bf16.mxu0 0
    %786 = vmatpush2.bf16.xpose.msra.mxu0 0
    %787 = vmatprep.subr.bf16.mxu0 0
    %788 = vmatpush2.bf16.xpose.msra.mxu0 0
    %789 = vmatprep.subr.bf16.mxu0 0
    %790 = vmatpush2.bf16.xpose.msra.mxu0 0
    %791 = vmatprep.subr.bf16.mxu0 0
    %792 = vmatpush2.bf16.xpose.msra.mxu0 0
    %793 = vmatprep.subr.bf16.mxu0 0
    %794 = vmatpush2.bf16.xpose.msra.mxu0 0
    %795 = vmatprep.subr.bf16.mxu0 0
    %796 = vmatpush2.bf16.xpose.msra.mxu0 0
    %797 = vmatprep.subr.bf16.mxu0 0
    %798 = vmatpush2.bf16.xpose.msra.mxu0 0
    %799 = vmatprep.subr.bf16.mxu0 0
    %800 = vmatpush2.bf16.xpose.msra.mxu0 0
    %801 = vmatprep.mubr.bf16.mxu0 0
    %802 = vmatmul.mubr.bf16.gmra.mxu0 %v764
    %v803 = vpop.f32.mrf.mxu0
    %v804 = vadd.f32 0.0, %v803
    %v805 = vpop.f32.mrf.mxu0
    %v806 = vpop.f32.mrf.mxu0
    %v807 = vadd.f32 0.0, %v806
    %v808 = vpop.f32.mrf.mxu0
    %809 = vdwg.mxu0
    %v810 = vsel %vm715, %v757, -inf
    %811 = vmax.xlane.f32.xlu0 %v810
    %v812 = vpop.xlane.xlu0 %811
    %v813 = vsel %vm715, %v760, -inf
    %814 = vmax.xlane.f32.xlu0 %v813
    %v815 = vpop.xlane.xlu0 %814
    %v816 = vsel %vm715, %v804, -inf
    %817 = vmax.xlane.f32.xlu0 %v816
    %v818 = vpop.xlane.xlu0 %817
    %v819 = vsel %vm715, %v807, -inf
    %820 = vmax.xlane.f32.xlu0 %v819
    %v821 = vpop.xlane.xlu0 %820
    %v822 = vsub.f32 %v757, %v812
    %v823 = vsub.f32 %v760, %v815
    %v824 = vsub.f32 %v804, %v818
    %v825 = vsub.f32 %v807, %v821
    %v826 = vmul.f32 %v822, 1.442695
    %v827 = vpow.pop %v826
    %v828 = vmul.f32 %v823, 1.442695
    %v829 = vpow.pop %v828
    %v830 = vmul.f32 %v824, 1.442695
    %v831 = vpow.pop %v830
    %v832 = vmul.f32 %v825, 1.442695
    %v833 = vpow.pop %v832
    %v834 = vsel %vm715, %v827, 0.0
    %835 = vadd.xlane.f32.xlu0 %v834
    %v836 = vpop.xlane.xlu0 %835
    %v837 = vsel %vm715, %v829, 0.0
    %838 = vadd.xlane.f32.xlu0 %v837
    %v839 = vpop.xlane.xlu0 %838
    %v840 = vsel %vm715, %v831, 0.0
    %841 = vadd.xlane.f32.xlu0 %v840
    %v842 = vpop.xlane.xlu0 %841
    %v843 = vsel %vm715, %v833, 0.0
    %844 = vadd.xlane.f32.xlu0 %v843
    %v845 = vpop.xlane.xlu0 %844
    %v846 = vrcp.pop %v836
    %v847 = vrcp.pop %v839
    %v848 = vrcp.pop %v842
    %v849 = vrcp.pop %v845
    %v850 = vmul.f32 %v827, %v846
    %v851 = vmul.f32 %v829, %v847
    %v852 = vmul.f32 %v831, %v848
    %v853 = vmul.f32 %v833, %v849
    %v854 = vpack.c.bf16 %v851, %v850
    %v855 = vpack.c.bf16 %v853, %v852
    %v857 = vsel %vm715, %v854, 0
    %859 = vmatprep.subr.bf16.mxu0 0
    %860 = vmatpush1.bf16.msra.mxu0 0
    %861 = vmatprep.subr.bf16.mxu0 0
    %862 = vmatpush1.bf16.msra.mxu0 0
    %863 = vmatprep.subr.bf16.mxu0 0
    %864 = vmatpush1.bf16.msra.mxu0 0
    %865 = vmatprep.subr.bf16.mxu0 0
    %866 = vmatpush1.bf16.msra.mxu0 0
    %867 = vmatprep.subr.bf16.mxu0 0
    %868 = vmatpush1.bf16.msra.mxu0 0
    %869 = vmatprep.subr.bf16.mxu0 0
    %870 = vmatpush1.bf16.msra.mxu0 0
    %871 = vmatprep.subr.bf16.mxu0 0
    %872 = vmatpush1.bf16.msra.mxu0 0
    %873 = vmatprep.subr.bf16.mxu0 0
    %874 = vmatpush1.bf16.msra.mxu0 %v711
    %875 = vmatprep.subr.bf16.mxu0 0
    %876 = vmatpush2.bf16.msra.mxu0 0
    %877 = vmatprep.subr.bf16.mxu0 0
    %878 = vmatpush2.bf16.msra.mxu0 0
    %879 = vmatprep.subr.bf16.mxu0 0
    %880 = vmatpush2.bf16.msra.mxu0 0
    %881 = vmatprep.subr.bf16.mxu0 0
    %882 = vmatpush2.bf16.msra.mxu0 0
    %883 = vmatprep.subr.bf16.mxu0 0
    %884 = vmatpush2.bf16.msra.mxu0 0
    %885 = vmatprep.subr.bf16.mxu0 0
    %886 = vmatpush2.bf16.msra.mxu0 0
    %887 = vmatprep.subr.bf16.mxu0 0
    %888 = vmatpush2.bf16.msra.mxu0 0
    %889 = vmatprep.subr.bf16.mxu0 0
    %890 = vmatpush2.bf16.msra.mxu0 0
    %891 = vmatprep.mubr.bf16.mxu0 0
    %892 = vmatmul.mubr.bf16.gmra.mxu0 %v857
    %v893 = vpop.f32.mrf.mxu0
    %v894 = vadd.f32 0.0, %v893
    %v895 = vpop.f32.mrf.mxu0
    %v896 = vpop.f32.mrf.mxu0
    %v897 = vadd.f32 0.0, %v896
    %v898 = vpop.f32.mrf.mxu0
    %899 = vdwg.mxu0
    %v901 = vsel %vm715, %v855, 0
    %903 = vmatprep.subr.bf16.mxu0 0
    %904 = vmatpush1.bf16.msra.mxu0 0
    %905 = vmatprep.subr.bf16.mxu0 0
    %906 = vmatpush1.bf16.msra.mxu0 0
    %907 = vmatprep.subr.bf16.mxu0 0
    %908 = vmatpush1.bf16.msra.mxu0 0
    %909 = vmatprep.subr.bf16.mxu0 0
    %910 = vmatpush1.bf16.msra.mxu0 0
    %911 = vmatprep.subr.bf16.mxu0 0
    %912 = vmatpush1.bf16.msra.mxu0 0
    %913 = vmatprep.subr.bf16.mxu0 0
    %914 = vmatpush1.bf16.msra.mxu0 0
    %915 = vmatprep.subr.bf16.mxu0 0
    %916 = vmatpush1.bf16.msra.mxu0 0
    %917 = vmatprep.subr.bf16.mxu0 0
    %918 = vmatpush1.bf16.msra.mxu0 %v713
    %919 = vmatprep.subr.bf16.mxu0 0
    %920 = vmatpush2.bf16.msra.mxu0 0
    %921 = vmatprep.subr.bf16.mxu0 0
    %922 = vmatpush2.bf16.msra.mxu0 0
    %923 = vmatprep.subr.bf16.mxu0 0
    %924 = vmatpush2.bf16.msra.mxu0 0
    %925 = vmatprep.subr.bf16.mxu0 0
    %926 = vmatpush2.bf16.msra.mxu0 0
    %927 = vmatprep.subr.bf16.mxu0 0
    %928 = vmatpush2.bf16.msra.mxu0 0
    %929 = vmatprep.subr.bf16.mxu0 0
    %930 = vmatpush2.bf16.msra.mxu0 0
    %931 = vmatprep.subr.bf16.mxu0 0
    %932 = vmatpush2.bf16.msra.mxu0 0
    %933 = vmatprep.subr.bf16.mxu0 0
    %934 = vmatpush2.bf16.msra.mxu0 0
    %935 = vmatprep.mubr.bf16.mxu0 0
    %936 = vmatmul.mubr.bf16.gmra.mxu0 %v901
    %v937 = vpop.f32.mrf.mxu0
    %v938 = vadd.f32 0.0, %v937
    %v939 = vpop.f32.mrf.mxu0
    %v940 = vpop.f32.mrf.mxu0
    %v941 = vadd.f32 0.0, %v940
    %v942 = vpop.f32.mrf.mxu0
    %943 = vdwg.mxu0
    %v944 = vpack.c.bf16 %v897, %v894
    %v945 = vpack.c.bf16 %v941, %v938
    %v948 = vunpack.c.l.b16 %v944
    %v949 = vunpack.c.h.b16 %v944
    %v950 = vunpack.c.l.b16 %v945
    %v951 = vunpack.c.h.b16 %v945
    %v952 = vpack.c.b16 %v948, %v948
    %v953 = vpack.c.b16 %v949, %v949
    %v954 = vpack.c.b16 %v950, %v950
    %v955 = vpack.c.b16 %v951, %v951
    %vm960 = vcmask 125952
    %961 = vst.msk [vmem:[#allocation2] sm:$0xf] %vm960, %v952
    %962 = vst.msk [vmem:[#allocation2 + $0x8] sm:$0xf] %vm960, %v953
    %963 = vst.msk [vmem:[#allocation2 + $0x10] sm:$0xf] %vm960, %v954
    %964 = vst.msk [vmem:[#allocation2 + $0x18] sm:$0xf] %vm960, %v955
    %966 = vrot.lane.b32.xlu0 %v309, 112
    %v967 = vpop.permute.xlu0 %966
    %969 = vrot.lane.b32.xlu0 %v510, 112
    %v970 = vpop.permute.xlu0 %969
    %v972 = vsel %vm715, %v967, 0
    %v975 = vsel %vm715, %v970, 0
    %977 = vmatprep.subr.bf16.mxu0 0
    %978 = vmatpush1.bf16.xpose.msra.mxu0 0
    %979 = vmatprep.subr.bf16.mxu0 0
    %980 = vmatpush1.bf16.xpose.msra.mxu0 0
    %981 = vmatprep.subr.bf16.mxu0 0
    %982 = vmatpush1.bf16.xpose.msra.mxu0 0
    %983 = vmatprep.subr.bf16.mxu0 0
    %984 = vmatpush1.bf16.xpose.msra.mxu0 0
    %985 = vmatprep.subr.bf16.mxu0 0
    %986 = vmatpush1.bf16.xpose.msra.mxu0 0
    %987 = vmatprep.subr.bf16.mxu0 0
    %988 = vmatpush1.bf16.xpose.msra.mxu0 0
    %989 = vmatprep.subr.bf16.mxu0 0
    %990 = vmatpush1.bf16.xpose.msra.mxu0 0
    %991 = vmatprep.subr.bf16.mxu0 0
    %992 = vmatpush1.bf16.xpose.msra.mxu0 %v975
    %993 = vmatprep.subr.bf16.mxu0 0
    %994 = vmatpush2.bf16.xpose.msra.mxu0 0
    %995 = vmatprep.subr.bf16.mxu0 0
    %996 = vmatpush2.bf16.xpose.msra.mxu0 0
    %997 = vmatprep.subr.bf16.mxu0 0
    %998 = vmatpush2.bf16.xpose.msra.mxu0 0
    %999 = vmatprep.subr.bf16.mxu0 0
    %1000 = vmatpush2.bf16.xpose.msra.mxu0 0
    %1001 = vmatprep.subr.bf16.mxu0 0
    %1002 = vmatpush2.bf16.xpose.msra.mxu0 0
    %1003 = vmatprep.subr.bf16.mxu0 0
    %1004 = vmatpush2.bf16.xpose.msra.mxu0 0
    %1005 = vmatprep.subr.bf16.mxu0 0
    %1006 = vmatpush2.bf16.xpose.msra.mxu0 0
    %1007 = vmatprep.subr.bf16.mxu0 0
    %1008 = vmatpush2.bf16.xpose.msra.mxu0 0
    %1009 = vmatprep.mubr.bf16.mxu0 0
    %1010 = vmatmul.mubr.bf16.gmra.mxu0 %v972
    %v1011 = vpop.f32.mrf.mxu0
    %v1012 = vadd.f32 0.0, %v1011
    %v1013 = vpop.f32.mrf.mxu0
    %v1014 = vpop.f32.mrf.mxu0
    %v1015 = vadd.f32 0.0, %v1014
    %v1016 = vpop.f32.mrf.mxu0
    %1017 = vdwg.mxu0
    %1019 = vrot.lane.b32.xlu0 %v311, 112
    %v1020 = vpop.permute.xlu0 %1019
    %1022 = vrot.lane.b32.xlu0 %v512, 112
    %v1023 = vpop.permute.xlu0 %1022
    %v1025 = vsel %vm715, %v1020, 0
    %v1028 = vsel %vm715, %v1023, 0
    %1030 = vmatprep.subr.bf16.mxu0 0
    %1031 = vmatpush1.bf16.xpose.msra.mxu0 0
    %1032 = vmatprep.subr.bf16.mxu0 0
    %1033 = vmatpush1.bf16.xpose.msra.mxu0 0
    %1034 = vmatprep.subr.bf16.mxu0 0
    %1035 = vmatpush1.bf16.xpose.msra.mxu0 0
    %1036 = vmatprep.subr.bf16.mxu0 0
    %1037 = vmatpush1.bf16.xpose.msra.mxu0 0
    %1038 = vmatprep.subr.bf16.mxu0 0
    %1039 = vmatpush1.bf16.xpose.msra.mxu0 0
    %1040 = vmatprep.subr.bf16.mxu0 0
    %1041 = vmatpush1.bf16.xpose.msra.mxu0 0
    %1042 = vmatprep.subr.bf16.mxu0 0
    %1043 = vmatpush1.bf16.xpose.msra.mxu0 0
    %1044 = vmatprep.subr.bf16.mxu0 0
    %1045 = vmatpush1.bf16.xpose.msra.mxu0 %v1028
    %1046 = vmatprep.subr.bf16.mxu0 0
    %1047 = vmatpush2.bf16.xpose.msra.mxu0 0
    %1048 = vmatprep.subr.bf16.mxu0 0
    %1049 = vmatpush2.bf16.xpose.msra.mxu0 0
    %1050 = vmatprep.subr.bf16.mxu0 0
    %1051 = vmatpush2.bf16.xpose.msra.mxu0 0
    %1052 = vmatprep.subr.bf16.mxu0 0
    %1053 = vmatpush2.bf16.xpose.msra.mxu0 0
    %1054 = vmatprep.subr.bf16.mxu0 0
    %1055 = vmatpush2.bf16.xpose.msra.mxu0 0
    %1056 = vmatprep.subr.bf16.mxu0 0
    %1057 = vmatpush2.bf16.xpose.msra.mxu0 0
    %1058 = vmatprep.subr.bf16.mxu0 0
    %1059 = vmatpush2.bf16.xpose.msra.mxu0 0
    %1060 = vmatprep.subr.bf16.mxu0 0
    %1061 = vmatpush2.bf16.xpose.msra.mxu0 0
    %1062 = vmatprep.mubr.bf16.mxu0 0
    %1063 = vmatmul.mubr.bf16.gmra.mxu0 %v1025
    %v1064 = vpop.f32.mrf.mxu0
    %v1065 = vadd.f32 0.0, %v1064
    %v1066 = vpop.f32.mrf.mxu0
    %v1067 = vpop.f32.mrf.mxu0
    %v1068 = vadd.f32 0.0, %v1067
    %v1069 = vpop.f32.mrf.mxu0
    %1070 = vdwg.mxu0
    %v1071 = vsel %vm715, %v1012, -inf
    %1072 = vmax.xlane.f32.xlu0 %v1071
    %v1073 = vpop.xlane.xlu0 %1072
    %v1074 = vsel %vm715, %v1015, -inf
    %1075 = vmax.xlane.f32.xlu0 %v1074
    %v1076 = vpop.xlane.xlu0 %1075
    %v1077 = vsel %vm715, %v1065, -inf
    %1078 = vmax.xlane.f32.xlu0 %v1077
    %v1079 = vpop.xlane.xlu0 %1078
    %v1080 = vsel %vm715, %v1068, -inf
    %1081 = vmax.xlane.f32.xlu0 %v1080
    %v1082 = vpop.xlane.xlu0 %1081
    %v1083 = vsub.f32 %v1012, %v1073
    %v1084 = vsub.f32 %v1015, %v1076
    %v1085 = vsub.f32 %v1065, %v1079
    %v1086 = vsub.f32 %v1068, %v1082
    %v1087 = vmul.f32 %v1083, 1.442695
    %v1088 = vpow.pop %v1087
    %v1089 = vmul.f32 %v1084, 1.442695
    %v1090 = vpow.pop %v1089
    %v1091 = vmul.f32 %v1085, 1.442695
    %v1092 = vpow.pop %v1091
    %v1093 = vmul.f32 %v1086, 1.442695
    %v1094 = vpow.pop %v1093
    %v1095 = vsel %vm715, %v1088, 0.0
    %1096 = vadd.xlane.f32.xlu0 %v1095
    %v1097 = vpop.xlane.xlu0 %1096
    %v1098 = vsel %vm715, %v1090, 0.0
    %1099 = vadd.xlane.f32.xlu0 %v1098
    %v1100 = vpop.xlane.xlu0 %1099
    %v1101 = vsel %vm715, %v1092, 0.0
    %1102 = vadd.xlane.f32.xlu0 %v1101
    %v1103 = vpop.xlane.xlu0 %1102
    %v1104 = vsel %vm715, %v1094, 0.0
    %1105 = vadd.xlane.f32.xlu0 %v1104
    %v1106 = vpop.xlane.xlu0 %1105
    %v1107 = vrcp.pop %v1097
    %v1108 = vrcp.pop %v1100
    %v1109 = vrcp.pop %v1103
    %v1110 = vrcp.pop %v1106
    %v1111 = vmul.f32 %v1088, %v1107
    %v1112 = vmul.f32 %v1090, %v1108
    %v1113 = vmul.f32 %v1092, %v1109
    %v1114 = vmul.f32 %v1094, %v1110
    %v1115 = vpack.c.bf16 %v1112, %v1111
    %v1116 = vpack.c.bf16 %v1114, %v1113
    %1118 = vrot.lane.b32.xlu0 %v711, 112
    %v1119 = vpop.permute.xlu0 %1118
    %v1122 = vsel %vm715, %v1115, 0
    %1124 = vmatprep.subr.bf16.mxu0 0
    %1125 = vmatpush1.bf16.msra.mxu0 0
    %1126 = vmatprep.subr.bf16.mxu0 0
    %1127 = vmatpush1.bf16.msra.mxu0 0
    %1128 = vmatprep.subr.bf16.mxu0 0
    %1129 = vmatpush1.bf16.msra.mxu0 0
    %1130 = vmatprep.subr.bf16.mxu0 0
    %1131 = vmatpush1.bf16.msra.mxu0 0
    %1132 = vmatprep.subr.bf16.mxu0 0
    %1133 = vmatpush1.bf16.msra.mxu0 0
    %1134 = vmatprep.subr.bf16.mxu0 0
    %1135 = vmatpush1.bf16.msra.mxu0 0
    %1136 = vmatprep.subr.bf16.mxu0 0
    %1137 = vmatpush1.bf16.msra.mxu0 0
    %1138 = vmatprep.subr.bf16.mxu0 0
    %1139 = vmatpush1.bf16.msra.mxu0 %v1119
    %1140 = vmatprep.subr.bf16.mxu0 0
    %1141 = vmatpush2.bf16.msra.mxu0 0
    %1142 = vmatprep.subr.bf16.mxu0 0
    %1143 = vmatpush2.bf16.msra.mxu0 0
    %1144 = vmatprep.subr.bf16.mxu0 0
    %1145 = vmatpush2.bf16.msra.mxu0 0
    %1146 = vmatprep.subr.bf16.mxu0 0
    %1147 = vmatpush2.bf16.msra.mxu0 0
    %1148 = vmatprep.subr.bf16.mxu0 0
    %1149 = vmatpush2.bf16.msra.mxu0 0
    %1150 = vmatprep.subr.bf16.mxu0 0
    %1151 = vmatpush2.bf16.msra.mxu0 0
    %1152 = vmatprep.subr.bf16.mxu0 0
    %1153 = vmatpush2.bf16.msra.mxu0 0
    %1154 = vmatprep.subr.bf16.mxu0 0
    %1155 = vmatpush2.bf16.msra.mxu0 0
    %1156 = vmatprep.mubr.bf16.mxu0 0
    %1157 = vmatmul.mubr.bf16.gmra.mxu0 %v1122
    %v1158 = vpop.f32.mrf.mxu0
    %v1159 = vadd.f32 0.0, %v1158
    %v1160 = vpop.f32.mrf.mxu0
    %v1161 = vpop.f32.mrf.mxu0
    %v1162 = vadd.f32 0.0, %v1161
    %v1163 = vpop.f32.mrf.mxu0
    %1164 = vdwg.mxu0
    %1166 = vrot.lane.b32.xlu0 %v713, 112
    %v1167 = vpop.permute.xlu0 %1166
    %v1170 = vsel %vm715, %v1116, 0
    %1172 = vmatprep.subr.bf16.mxu0 0
    %1173 = vmatpush1.bf16.msra.mxu0 0
    %1174 = vmatprep.subr.bf16.mxu0 0
    %1175 = vmatpush1.bf16.msra.mxu0 0
    %1176 = vmatprep.subr.bf16.mxu0 0
    %1177 = vmatpush1.bf16.msra.mxu0 0
    %1178 = vmatprep.subr.bf16.mxu0 0
    %1179 = vmatpush1.bf16.msra.mxu0 0
    %1180 = vmatprep.subr.bf16.mxu0 0
    %1181 = vmatpush1.bf16.msra.mxu0 0
    %1182 = vmatprep.subr.bf16.mxu0 0
    %1183 = vmatpush1.bf16.msra.mxu0 0
    %1184 = vmatprep.subr.bf16.mxu0 0
    %1185 = vmatpush1.bf16.msra.mxu0 0
    %1186 = vmatprep.subr.bf16.mxu0 0
    %1187 = vmatpush1.bf16.msra.mxu0 %v1167
    %1188 = vmatprep.subr.bf16.mxu0 0
    %1189 = vmatpush2.bf16.msra.mxu0 0
    %1190 = vmatprep.subr.bf16.mxu0 0
    %1191 = vmatpush2.bf16.msra.mxu0 0
    %1192 = vmatprep.subr.bf16.mxu0 0
    %1193 = vmatpush2.bf16.msra.mxu0 0
    %1194 = vmatprep.subr.bf16.mxu0 0
    %1195 = vmatpush2.bf16.msra.mxu0 0
    %1196 = vmatprep.subr.bf16.mxu0 0
    %1197 = vmatpush2.bf16.msra.mxu0 0
    %1198 = vmatprep.subr.bf16.mxu0 0
    %1199 = vmatpush2.bf16.msra.mxu0 0
    %1200 = vmatprep.subr.bf16.mxu0 0
    %1201 = vmatpush2.bf16.msra.mxu0 0
    %1202 = vmatprep.subr.bf16.mxu0 0
    %1203 = vmatpush2.bf16.msra.mxu0 0
    %1204 = vmatprep.mubr.bf16.mxu0 0
    %1205 = vmatmul.mubr.bf16.gmra.mxu0 %v1170
    %v1206 = vpop.f32.mrf.mxu0
    %v1207 = vadd.f32 0.0, %v1206
    %v1208 = vpop.f32.mrf.mxu0
    %v1209 = vpop.f32.mrf.mxu0
    %v1210 = vadd.f32 0.0, %v1209
    %v1211 = vpop.f32.mrf.mxu0
    %1212 = vdwg.mxu0
    %v1213 = vpack.c.bf16 %v1162, %v1159
    %v1214 = vpack.c.bf16 %v1210, %v1207
    %v1217 = vunpack.c.l.b16 %v1213
    %v1218 = vunpack.c.h.b16 %v1213
    %v1219 = vunpack.c.l.b16 %v1214
    %v1220 = vunpack.c.h.b16 %v1214
    %v1221 = vpack.c.b16 %v1217, %v1217
    %v1222 = vpack.c.b16 %v1218, %v1218
    %v1223 = vpack.c.b16 %v1219, %v1219
    %v1224 = vpack.c.b16 %v1220, %v1220
    %1225 = vrot.lane.b32.xlu0 %v1221, 16
    %v1226 = vpop.permute.xlu0 %1225
    %1227 = vrot.lane.b32.xlu0 %v1222, 16
    %v1228 = vpop.permute.xlu0 %1227
    %1229 = vrot.lane.b32.xlu0 %v1223, 16
    %v1230 = vpop.permute.xlu0 %1229
    %1231 = vrot.lane.b32.xlu0 %v1224, 16
    %v1232 = vpop.permute.xlu0 %1231
    %vm1237 = vcmask 257152
    %1238 = vst.msk [vmem:[#allocation2] sm:$0xf] %vm1237, %v1226
    %1239 = vst.msk [vmem:[#allocation2 + $0x8] sm:$0xf] %vm1237, %v1228
    %1240 = vst.msk [vmem:[#allocation2 + $0x10] sm:$0xf] %vm1237, %v1230
    %1241 = vst.msk [vmem:[#allocation2 + $0x18] sm:$0xf] %vm1237, %v1232
    %1242 = vrot.lane.b32.xlu0 %v309, 96
    %v1243 = vpop.permute.xlu0 %1242
    %1244 = vrot.lane.b32.xlu0 %v510, 96
    %v1245 = vpop.permute.xlu0 %1244
    %v1247 = vsel %vm715, %v1243, 0
    %v1250 = vsel %vm715, %v1245, 0
    %1252 = vmatprep.subr.bf16.mxu0 0
    %1253 = vmatpush1.bf16.xpose.msra.mxu0 0
    %1254 = vmatprep.subr.bf16.mxu0 0
    %1255 = vmatpush1.bf16.xpose.msra.mxu0 0
    %1256 = vmatprep.subr.bf16.mxu0 0
    %1257 = vmatpush1.bf16.xpose.msra.mxu0 0
    %1258 = vmatprep.subr.bf16.mxu0 0
    %1259 = vmatpush1.bf16.xpose.msra.mxu0 0
    %1260 = vmatprep.subr.bf16.mxu0 0
    %1261 = vmatpush1.bf16.xpose.msra.mxu0 0
    %1262 = vmatprep.subr.bf16.mxu0 0
    %1263 = vmatpush1.bf16.xpose.msra.mxu0 0
    %1264 = vmatprep.subr.bf16.mxu0 0
    %1265 = vmatpush1.bf16.xpose.msra.mxu0 0
    %1266 = vmatprep.subr.bf16.mxu0 0
    %1267 = vmatpush1.bf16.xpose.msra.mxu0 %v1250
    %1268 = vmatprep.subr.bf16.mxu0 0
    %1269 = vmatpush2.bf16.xpose.msra.mxu0 0
    %1270 = vmatprep.subr.bf16.mxu0 0
    %1271 = vmatpush2.bf16.xpose.msra.mxu0 0
    %1272 = vmatprep.subr.bf16.mxu0 0
    %1273 = vmatpush2.bf16.xpose.msra.mxu0 0
    %1274 = vmatprep.subr.bf16.mxu0 0
    %1275 = vmatpush2.bf16.xpose.msra.mxu0 0
    %1276 = vmatprep.subr.bf16.mxu0 0
    %1277 = vmatpush2.bf16.xpose.msra.mxu0 0
    %1278 = vmatprep.subr.bf16.mxu0 0
    %1279 = vmatpush2.bf16.xpose.msra.mxu0 0
    %1280 = vmatprep.subr.bf16.mxu0 0
    %1281 = vmatpush2.bf16.xpose.msra.mxu0 0
    %1282 = vmatprep.subr.bf16.mxu0 0
    %1283 = vmatpush2.bf16.xpose.msra.mxu0 0
    %1284 = vmatprep.mubr.bf16.mxu0 0
    %1285 = vmatmul.mubr.bf16.gmra.mxu0 %v1247
    %v1286 = vpop.f32.mrf.mxu0
    %v1287 = vadd.f32 0.0, %v1286
    %v1288 = vpop.f32.mrf.mxu0
    %v1289 = vpop.f32.mrf.mxu0
    %v1290 = vadd.f32 0.0, %v1289
    %v1291 = vpop.f32.mrf.mxu0
    %1292 = vdwg.mxu0
    %1293 = vrot.lane.b32.xlu0 %v311, 96
    %v1294 = vpop.permute.xlu0 %1293
    %1295 = vrot.lane.b32.xlu0 %v512, 96
    %v1296 = vpop.permute.xlu0 %1295
    %v1298 = vsel %vm715, %v1294, 0
    %v1301 = vsel %vm715, %v1296, 0
    %1303 = vmatprep.subr.bf16.mxu0 0
    %1304 = vmatpush1.bf16.xpose.msra.mxu0 0
    %1305 = vmatprep.subr.bf16.mxu0 0
    %1306 = vmatpush1.bf16.xpose.msra.mxu0 0
    %1307 = vmatprep.subr.bf16.mxu0 0
    %1308 = vmatpush1.bf16.xpose.msra.mxu0 0
    %1309 = vmatprep.subr.bf16.mxu0 0
    %1310 = vmatpush1.bf16.xpose.msra.mxu0 0
    %1311 = vmatprep.subr.bf16.mxu0 0
    %1312 = vmatpush1.bf16.xpose.msra.mxu0 0
    %1313 = vmatprep.subr.bf16.mxu0 0
    %1314 = vmatpush1.bf16.xpose.msra.mxu0 0
    %1315 = vmatprep.subr.bf16.mxu0 0
    %1316 = vmatpush1.bf16.xpose.msra.mxu0 0
    %1317 = vmatprep.subr.bf16.mxu0 0
    %1318 = vmatpush1.bf16.xpose.msra.mxu0 %v1301
    %1319 = vmatprep.subr.bf16.mxu0 0
    %1320 = vmatpush2.bf16.xpose.msra.mxu0 0
    %1321 = vmatprep.subr.bf16.mxu0 0
    %1322 = vmatpush2.bf16.xpose.msra.mxu0 0
    %1323 = vmatprep.subr.bf16.mxu0 0
    %1324 = vmatpush2.bf16.xpose.msra.mxu0 0
    %1325 = vmatprep.subr.bf16.mxu0 0
    %1326 = vmatpush2.bf16.xpose.msra.mxu0 0
    %1327 = vmatprep.subr.bf16.mxu0 0
    %1328 = vmatpush2.bf16.xpose.msra.mxu0 0
    %1329 = vmatprep.subr.bf16.mxu0 0
    %1330 = vmatpush2.bf16.xpose.msra.mxu0 0
    %1331 = vmatprep.subr.bf16.mxu0 0
    %1332 = vmatpush2.bf16.xpose.msra.mxu0 0
    %1333 = vmatprep.subr.bf16.mxu0 0
    %1334 = vmatpush2.bf16.xpose.msra.mxu0 0
    %1335 = vmatprep.mubr.bf16.mxu0 0
    %1336 = vmatmul.mubr.bf16.gmra.mxu0 %v1298
    %v1337 = vpop.f32.mrf.mxu0
    %v1338 = vadd.f32 0.0, %v1337
    %v1339 = vpop.f32.mrf.mxu0
    %v1340 = vpop.f32.mrf.mxu0
    %v1341 = vadd.f32 0.0, %v1340
    %v1342 = vpop.f32.mrf.mxu0
    %1343 = vdwg.mxu0
    %v1344 = vsel %vm715, %v1287, -inf
    %1345 = vmax.xlane.f32.xlu0 %v1344
    %v1346 = vpop.xlane.xlu0 %1345
    %v1347 = vsel %vm715, %v1290, -inf
    %1348 = vmax.xlane.f32.xlu0 %v1347
    %v1349 = vpop.xlane.xlu0 %1348
    %v1350 = vsel %vm715, %v1338, -inf
    %1351 = vmax.xlane.f32.xlu0 %v1350
    %v1352 = vpop.xlane.xlu0 %1351
    %v1353 = vsel %vm715, %v1341, -inf
    %1354 = vmax.xlane.f32.xlu0 %v1353
    %v1355 = vpop.xlane.xlu0 %1354
    %v1356 = vsub.f32 %v1287, %v1346
    %v1357 = vsub.f32 %v1290, %v1349
    %v1358 = vsub.f32 %v1338, %v1352
    %v1359 = vsub.f32 %v1341, %v1355
    %v1360 = vmul.f32 %v1356, 1.442695
    %v1361 = vpow.pop %v1360
    %v1362 = vmul.f32 %v1357, 1.442695
    %v1363 = vpow.pop %v1362
    %v1364 = vmul.f32 %v1358, 1.442695
    %v1365 = vpow.pop %v1364
    %v1366 = vmul.f32 %v1359, 1.442695
    %v1367 = vpow.pop %v1366
    %v1368 = vsel %vm715, %v1361, 0.0
    %1369 = vadd.xlane.f32.xlu0 %v1368
    %v1370 = vpop.xlane.xlu0 %1369
    %v1371 = vsel %vm715, %v1363, 0.0
    %1372 = vadd.xlane.f32.xlu0 %v1371
    %v1373 = vpop.xlane.xlu0 %1372
    %v1374 = vsel %vm715, %v1365, 0.0
    %1375 = vadd.xlane.f32.xlu0 %v1374
    %v1376 = vpop.xlane.xlu0 %1375
    %v1377 = vsel %vm715, %v1367, 0.0
    %1378 = vadd.xlane.f32.xlu0 %v1377
    %v1379 = vpop.xlane.xlu0 %1378
    %v1380 = vrcp.pop %v1370
    %v1381 = vrcp.pop %v1373
    %v1382 = vrcp.pop %v1376
    %v1383 = vrcp.pop %v1379
    %v1384 = vmul.f32 %v1361, %v1380
    %v1385 = vmul.f32 %v1363, %v1381
    %v1386 = vmul.f32 %v1365, %v1382
    %v1387 = vmul.f32 %v1367, %v1383
    %v1388 = vpack.c.bf16 %v1385, %v1384
    %v1389 = vpack.c.bf16 %v1387, %v1386
    %1390 = vrot.lane.b32.xlu0 %v711, 96
    %v1391 = vpop.permute.xlu0 %1390
    %v1394 = vsel %vm715, %v1388, 0
    %1396 = vmatprep.subr.bf16.mxu0 0
    %1397 = vmatpush1.bf16.msra.mxu0 0
    %1398 = vmatprep.subr.bf16.mxu0 0
    %1399 = vmatpush1.bf16.msra.mxu0 0
    %1400 = vmatprep.subr.bf16.mxu0 0
    %1401 = vmatpush1.bf16.msra.mxu0 0
    %1402 = vmatprep.subr.bf16.mxu0 0
    %1403 = vmatpush1.bf16.msra.mxu0 0
    %1404 = vmatprep.subr.bf16.mxu0 0
    %1405 = vmatpush1.bf16.msra.mxu0 0
    %1406 = vmatprep.subr.bf16.mxu0 0
    %1407 = vmatpush1.bf16.msra.mxu0 0
    %1408 = vmatprep.subr.bf16.mxu0 0
    %1409 = vmatpush1.bf16.msra.mxu0 0
    %1410 = vmatprep.subr.bf16.mxu0 0
    %1411 = vmatpush1.bf16.msra.mxu0 %v1391
    %1412 = vmatprep.subr.bf16.mxu0 0
    %1413 = vmatpush2.bf16.msra.mxu0 0
    %1414 = vmatprep.subr.bf16.mxu0 0
    %1415 = vmatpush2.bf16.msra.mxu0 0
    %1416 = vmatprep.subr.bf16.mxu0 0
    %1417 = vmatpush2.bf16.msra.mxu0 0
    %1418 = vmatprep.subr.bf16.mxu0 0
    %1419 = vmatpush2.bf16.msra.mxu0 0
    %1420 = vmatprep.subr.bf16.mxu0 0
    %1421 = vmatpush2.bf16.msra.mxu0 0
    %1422 = vmatprep.subr.bf16.mxu0 0
    %1423 = vmatpush2.bf16.msra.mxu0 0
    %1424 = vmatprep.subr.bf16.mxu0 0
    %1425 = vmatpush2.bf16.msra.mxu0 0
    %1426 = vmatprep.subr.bf16.mxu0 0
    %1427 = vmatpush2.bf16.msra.mxu0 0
    %1428 = vmatprep.mubr.bf16.mxu0 0
    %1429 = vmatmul.mubr.bf16.gmra.mxu0 %v1394
    %v1430 = vpop.f32.mrf.mxu0
    %v1431 = vadd.f32 0.0, %v1430
    %v1432 = vpop.f32.mrf.mxu0
    %v1433 = vpop.f32.mrf.mxu0
    %v1434 = vadd.f32 0.0, %v1433
    %v1435 = vpop.f32.mrf.mxu0
    %1436 = vdwg.mxu0
    %1437 = vrot.lane.b32.xlu0 %v713, 96
    %v1438 = vpop.permute.xlu0 %1437
    %v1441 = vsel %vm715, %v1389, 0
    %1443 = vmatprep.subr.bf16.mxu0 0
    %1444 = vmatpush1.bf16.msra.mxu0 0
    %1445 = vmatprep.subr.bf16.mxu0 0
    %1446 = vmatpush1.bf16.msra.mxu0 0
    %1447 = vmatprep.subr.bf16.mxu0 0
    %1448 = vmatpush1.bf16.msra.mxu0 0
    %1449 = vmatprep.subr.bf16.mxu0 0
    %1450 = vmatpush1.bf16.msra.mxu0 0
    %1451 = vmatprep.subr.bf16.mxu0 0
    %1452 = vmatpush1.bf16.msra.mxu0 0
    %1453 = vmatprep.subr.bf16.mxu0 0
    %1454 = vmatpush1.bf16.msra.mxu0 0
    %1455 = vmatprep.subr.bf16.mxu0 0
    %1456 = vmatpush1.bf16.msra.mxu0 0
    %1457 = vmatprep.subr.bf16.mxu0 0
    %1458 = vmatpush1.bf16.msra.mxu0 %v1438
    %1459 = vmatprep.subr.bf16.mxu0 0
    %1460 = vmatpush2.bf16.msra.mxu0 0
    %1461 = vmatprep.subr.bf16.mxu0 0
    %1462 = vmatpush2.bf16.msra.mxu0 0
    %1463 = vmatprep.subr.bf16.mxu0 0
    %1464 = vmatpush2.bf16.msra.mxu0 0
    %1465 = vmatprep.subr.bf16.mxu0 0
    %1466 = vmatpush2.bf16.msra.mxu0 0
    %1467 = vmatprep.subr.bf16.mxu0 0
    %1468 = vmatpush2.bf16.msra.mxu0 0
    %1469 = vmatprep.subr.bf16.mxu0 0
    %1470 = vmatpush2.bf16.msra.mxu0 0
    %1471 = vmatprep.subr.bf16.mxu0 0
    %1472 = vmatpush2.bf16.msra.mxu0 0
    %1473 = vmatprep.subr.bf16.mxu0 0
    %1474 = vmatpush2.bf16.msra.mxu0 0
    %1475 = vmatprep.mubr.bf16.mxu0 0
    %1476 = vmatmul.mubr.bf16.gmra.mxu0 %v1441
    %v1477 = vpop.f32.mrf.mxu0
    %v1478 = vadd.f32 0.0, %v1477
    %v1479 = vpop.f32.mrf.mxu0
    %v1480 = vpop.f32.mrf.mxu0
    %v1481 = vadd.f32 0.0, %v1480
    %v1482 = vpop.f32.mrf.mxu0
    %1483 = vdwg.mxu0
    %v1484 = vpack.c.bf16 %v1434, %v1431
    %v1485 = vpack.c.bf16 %v1481, %v1478
    %v1488 = vunpack.c.l.b16 %v1484
    %v1489 = vunpack.c.h.b16 %v1484
    %v1490 = vunpack.c.l.b16 %v1485
    %v1491 = vunpack.c.h.b16 %v1485
    %v1492 = vpack.c.b16 %v1488, %v1488
    %v1493 = vpack.c.b16 %v1489, %v1489
    %v1494 = vpack.c.b16 %v1490, %v1490
    %v1495 = vpack.c.b16 %v1491, %v1491
    %1496 = vrot.lane.b32.xlu0 %v1492, 32
    %v1497 = vpop.permute.xlu0 %1496
    %1498 = vrot.lane.b32.xlu0 %v1493, 32
    %v1499 = vpop.permute.xlu0 %1498
    %1500 = vrot.lane.b32.xlu0 %v1494, 32
    %v1501 = vpop.permute.xlu0 %1500
    %1502 = vrot.lane.b32.xlu0 %v1495, 32
    %v1503 = vpop.permute.xlu0 %1502
    %vm1508 = vcmask 388352
    %1509 = vst.msk [vmem:[#allocation2] sm:$0xf] %vm1508, %v1497
    %1510 = vst.msk [vmem:[#allocation2 + $0x8] sm:$0xf] %vm1508, %v1499
    %1511 = vst.msk [vmem:[#allocation2 + $0x10] sm:$0xf] %vm1508, %v1501
    %1512 = vst.msk [vmem:[#allocation2 + $0x18] sm:$0xf] %vm1508, %v1503
    %1513 = vrot.lane.b32.xlu0 %v309, 80
    %v1514 = vpop.permute.xlu0 %1513
    %1515 = vrot.lane.b32.xlu0 %v510, 80
    %v1516 = vpop.permute.xlu0 %1515
    %v1518 = vsel %vm715, %v1514, 0
    %v1521 = vsel %vm715, %v1516, 0
    %1523 = vmatprep.subr.bf16.mxu0 0
    %1524 = vmatpush1.bf16.xpose.msra.mxu0 0
    %1525 = vmatprep.subr.bf16.mxu0 0
    %1526 = vmatpush1.bf16.xpose.msra.mxu0 0
    %1527 = vmatprep.subr.bf16.mxu0 0
    %1528 = vmatpush1.bf16.xpose.msra.mxu0 0
    %1529 = vmatprep.subr.bf16.mxu0 0
    %1530 = vmatpush1.bf16.xpose.msra.mxu0 0
    %1531 = vmatprep.subr.bf16.mxu0 0
    %1532 = vmatpush1.bf16.xpose.msra.mxu0 0
    %1533 = vmatprep.subr.bf16.mxu0 0
    %1534 = vmatpush1.bf16.xpose.msra.mxu0 0
    %1535 = vmatprep.subr.bf16.mxu0 0
    %1536 = vmatpush1.bf16.xpose.msra.mxu0 0
    %1537 = vmatprep.subr.bf16.mxu0 0
    %1538 = vmatpush1.bf16.xpose.msra.mxu0 %v1521
    %1539 = vmatprep.subr.bf16.mxu0 0
    %1540 = vmatpush2.bf16.xpose.msra.mxu0 0
    %1541 = vmatprep.subr.bf16.mxu0 0
    %1542 = vmatpush2.bf16.xpose.msra.mxu0 0
    %1543 = vmatprep.subr.bf16.mxu0 0
    %1544 = vmatpush2.bf16.xpose.msra.mxu0 0
    %1545 = vmatprep.subr.bf16.mxu0 0
    %1546 = vmatpush2.bf16.xpose.msra.mxu0 0
    %1547 = vmatprep.subr.bf16.mxu0 0
    %1548 = vmatpush2.bf16.xpose.msra.mxu0 0
    %1549 = vmatprep.subr.bf16.mxu0 0
    %1550 = vmatpush2.bf16.xpose.msra.mxu0 0
    %1551 = vmatprep.subr.bf16.mxu0 0
    %1552 = vmatpush2.bf16.xpose.msra.mxu0 0
    %1553 = vmatprep.subr.bf16.mxu0 0
    %1554 = vmatpush2.bf16.xpose.msra.mxu0 0
    %1555 = vmatprep.mubr.bf16.mxu0 0
    %1556 = vmatmul.mubr.bf16.gmra.mxu0 %v1518
    %v1557 = vpop.f32.mrf.mxu0
    %v1558 = vadd.f32 0.0, %v1557
    %v1559 = vpop.f32.mrf.mxu0
    %v1560 = vpop.f32.mrf.mxu0
    %v1561 = vadd.f32 0.0, %v1560
    %v1562 = vpop.f32.mrf.mxu0
    %1563 = vdwg.mxu0
    %1564 = vrot.lane.b32.xlu0 %v311, 80
    %v1565 = vpop.permute.xlu0 %1564
    %1566 = vrot.lane.b32.xlu0 %v512, 80
    %v1567 = vpop.permute.xlu0 %1566
    %v1569 = vsel %vm715, %v1565, 0
    %v1572 = vsel %vm715, %v1567, 0
    %1574 = vmatprep.subr.bf16.mxu0 0
    %1575 = vmatpush1.bf16.xpose.msra.mxu0 0
    %1576 = vmatprep.subr.bf16.mxu0 0
    %1577 = vmatpush1.bf16.xpose.msra.mxu0 0
    %1578 = vmatprep.subr.bf16.mxu0 0
    %1579 = vmatpush1.bf16.xpose.msra.mxu0 0
    %1580 = vmatprep.subr.bf16.mxu0 0
    %1581 = vmatpush1.bf16.xpose.msra.mxu0 0
    %1582 = vmatprep.subr.bf16.mxu0 0
    %1583 = vmatpush1.bf16.xpose.msra.mxu0 0
    %1584 = vmatprep.subr.bf16.mxu0 0
    %1585 = vmatpush1.bf16.xpose.msra.mxu0 0
    %1586 = vmatprep.subr.bf16.mxu0 0
    %1587 = vmatpush1.bf16.xpose.msra.mxu0 0
    %1588 = vmatprep.subr.bf16.mxu0 0
    %1589 = vmatpush1.bf16.xpose.msra.mxu0 %v1572
    %1590 = vmatprep.subr.bf16.mxu0 0
    %1591 = vmatpush2.bf16.xpose.msra.mxu0 0
    %1592 = vmatprep.subr.bf16.mxu0 0
    %1593 = vmatpush2.bf16.xpose.msra.mxu0 0
    %1594 = vmatprep.subr.bf16.mxu0 0
    %1595 = vmatpush2.bf16.xpose.msra.mxu0 0
    %1596 = vmatprep.subr.bf16.mxu0 0
    %1597 = vmatpush2.bf16.xpose.msra.mxu0 0
    %1598 = vmatprep.subr.bf16.mxu0 0
    %1599 = vmatpush2.bf16.xpose.msra.mxu0 0
    %1600 = vmatprep.subr.bf16.mxu0 0
    %1601 = vmatpush2.bf16.xpose.msra.mxu0 0
    %1602 = vmatprep.subr.bf16.mxu0 0
    %1603 = vmatpush2.bf16.xpose.msra.mxu0 0
    %1604 = vmatprep.subr.bf16.mxu0 0
    %1605 = vmatpush2.bf16.xpose.msra.mxu0 0
    %1606 = vmatprep.mubr.bf16.mxu0 0
    %1607 = vmatmul.mubr.bf16.gmra.mxu0 %v1569
    %v1608 = vpop.f32.mrf.mxu0
    %v1609 = vadd.f32 0.0, %v1608
    %v1610 = vpop.f32.mrf.mxu0
    %v1611 = vpop.f32.mrf.mxu0
    %v1612 = vadd.f32 0.0, %v1611
    %v1613 = vpop.f32.mrf.mxu0
    %1614 = vdwg.mxu0
    %v1615 = vsel %vm715, %v1558, -inf
    %1616 = vmax.xlane.f32.xlu0 %v1615
    %v1617 = vpop.xlane.xlu0 %1616
    %v1618 = vsel %vm715, %v1561, -inf
    %1619 = vmax.xlane.f32.xlu0 %v1618
    %v1620 = vpop.xlane.xlu0 %1619
    %v1621 = vsel %vm715, %v1609, -inf
    %1622 = vmax.xlane.f32.xlu0 %v1621
    %v1623 = vpop.xlane.xlu0 %1622
    %v1624 = vsel %vm715, %v1612, -inf
    %1625 = vmax.xlane.f32.xlu0 %v1624
    %v1626 = vpop.xlane.xlu0 %1625
    %v1627 = vsub.f32 %v1558, %v1617
    %v1628 = vsub.f32 %v1561, %v1620
    %v1629 = vsub.f32 %v1609, %v1623
    %v1630 = vsub.f32 %v1612, %v1626
    %v1631 = vmul.f32 %v1627, 1.442695
    %v1632 = vpow.pop %v1631
    %v1633 = vmul.f32 %v1628, 1.442695
    %v1634 = vpow.pop %v1633
    %v1635 = vmul.f32 %v1629, 1.442695
    %v1636 = vpow.pop %v1635
    %v1637 = vmul.f32 %v1630, 1.442695
    %v1638 = vpow.pop %v1637
    %v1639 = vsel %vm715, %v1632, 0.0
    %1640 = vadd.xlane.f32.xlu0 %v1639
    %v1641 = vpop.xlane.xlu0 %1640
    %v1642 = vsel %vm715, %v1634, 0.0
    %1643 = vadd.xlane.f32.xlu0 %v1642
    %v1644 = vpop.xlane.xlu0 %1643
    %v1645 = vsel %vm715, %v1636, 0.0
    %1646 = vadd.xlane.f32.xlu0 %v1645
    %v1647 = vpop.xlane.xlu0 %1646
    %v1648 = vsel %vm715, %v1638, 0.0
    %1649 = vadd.xlane.f32.xlu0 %v1648
    %v1650 = vpop.xlane.xlu0 %1649
    %v1651 = vrcp.pop %v1641
    %v1652 = vrcp.pop %v1644
    %v1653 = vrcp.pop %v1647
    %v1654 = vrcp.pop %v1650
    %v1655 = vmul.f32 %v1632, %v1651
    %v1656 = vmul.f32 %v1634, %v1652
    %v1657 = vmul.f32 %v1636, %v1653
    %v1658 = vmul.f32 %v1638, %v1654
    %v1659 = vpack.c.bf16 %v1656, %v1655
    %v1660 = vpack.c.bf16 %v1658, %v1657
    %1661 = vrot.lane.b32.xlu0 %v711, 80
    %v1662 = vpop.permute.xlu0 %1661
    %v1665 = vsel %vm715, %v1659, 0
    %1667 = vmatprep.subr.bf16.mxu0 0
    %1668 = vmatpush1.bf16.msra.mxu0 0
    %1669 = vmatprep.subr.bf16.mxu0 0
    %1670 = vmatpush1.bf16.msra.mxu0 0
    %1671 = vmatprep.subr.bf16.mxu0 0
    %1672 = vmatpush1.bf16.msra.mxu0 0
    %1673 = vmatprep.subr.bf16.mxu0 0
    %1674 = vmatpush1.bf16.msra.mxu0 0
    %1675 = vmatprep.subr.bf16.mxu0 0
    %1676 = vmatpush1.bf16.msra.mxu0 0
    %1677 = vmatprep.subr.bf16.mxu0 0
    %1678 = vmatpush1.bf16.msra.mxu0 0
    %1679 = vmatprep.subr.bf16.mxu0 0
    %1680 = vmatpush1.bf16.msra.mxu0 0
    %1681 = vmatprep.subr.bf16.mxu0 0
    %1682 = vmatpush1.bf16.msra.mxu0 %v1662
    %1683 = vmatprep.subr.bf16.mxu0 0
    %1684 = vmatpush2.bf16.msra.mxu0 0
    %1685 = vmatprep.subr.bf16.mxu0 0
    %1686 = vmatpush2.bf16.msra.mxu0 0
    %1687 = vmatprep.subr.bf16.mxu0 0
    %1688 = vmatpush2.bf16.msra.mxu0 0
    %1689 = vmatprep.subr.bf16.mxu0 0
    %1690 = vmatpush2.bf16.msra.mxu0 0
    %1691 = vmatprep.subr.bf16.mxu0 0
    %1692 = vmatpush2.bf16.msra.mxu0 0
    %1693 = vmatprep.subr.bf16.mxu0 0
    %1694 = vmatpush2.bf16.msra.mxu0 0
    %1695 = vmatprep.subr.bf16.mxu0 0
    %1696 = vmatpush2.bf16.msra.mxu0 0
    %1697 = vmatprep.subr.bf16.mxu0 0
    %1698 = vmatpush2.bf16.msra.mxu0 0
    %1699 = vmatprep.mubr.bf16.mxu0 0
    %1700 = vmatmul.mubr.bf16.gmra.mxu0 %v1665
    %v1701 = vpop.f32.mrf.mxu0
    %v1702 = vadd.f32 0.0, %v1701
    %v1703 = vpop.f32.mrf.mxu0
    %v1704 = vpop.f32.mrf.mxu0
    %v1705 = vadd.f32 0.0, %v1704
    %v1706 = vpop.f32.mrf.mxu0
    %1707 = vdwg.mxu0
    %1708 = vrot.lane.b32.xlu0 %v713, 80
    %v1709 = vpop.permute.xlu0 %1708
    %v1712 = vsel %vm715, %v1660, 0
    %1714 = vmatprep.subr.bf16.mxu0 0
    %1715 = vmatpush1.bf16.msra.mxu0 0
    %1716 = vmatprep.subr.bf16.mxu0 0
    %1717 = vmatpush1.bf16.msra.mxu0 0
    %1718 = vmatprep.subr.bf16.mxu0 0
    %1719 = vmatpush1.bf16.msra.mxu0 0
    %1720 = vmatprep.subr.bf16.mxu0 0
    %1721 = vmatpush1.bf16.msra.mxu0 0
    %1722 = vmatprep.subr.bf16.mxu0 0
    %1723 = vmatpush1.bf16.msra.mxu0 0
    %1724 = vmatprep.subr.bf16.mxu0 0
    %1725 = vmatpush1.bf16.msra.mxu0 0
    %1726 = vmatprep.subr.bf16.mxu0 0
    %1727 = vmatpush1.bf16.msra.mxu0 0
    %1728 = vmatprep.subr.bf16.mxu0 0
    %1729 = vmatpush1.bf16.msra.mxu0 %v1709
    %1730 = vmatprep.subr.bf16.mxu0 0
    %1731 = vmatpush2.bf16.msra.mxu0 0
    %1732 = vmatprep.subr.bf16.mxu0 0
    %1733 = vmatpush2.bf16.msra.mxu0 0
    %1734 = vmatprep.subr.bf16.mxu0 0
    %1735 = vmatpush2.bf16.msra.mxu0 0
    %1736 = vmatprep.subr.bf16.mxu0 0
    %1737 = vmatpush2.bf16.msra.mxu0 0
    %1738 = vmatprep.subr.bf16.mxu0 0
    %1739 = vmatpush2.bf16.msra.mxu0 0
    %1740 = vmatprep.subr.bf16.mxu0 0
    %1741 = vmatpush2.bf16.msra.mxu0 0
    %1742 = vmatprep.subr.bf16.mxu0 0
    %1743 = vmatpush2.bf16.msra.mxu0 0
    %1744 = vmatprep.subr.bf16.mxu0 0
    %1745 = vmatpush2.bf16.msra.mxu0 0
    %1746 = vmatprep.mubr.bf16.mxu0 0
    %1747 = vmatmul.mubr.bf16.gmra.mxu0 %v1712
    %v1748 = vpop.f32.mrf.mxu0
    %v1749 = vadd.f32 0.0, %v1748
    %v1750 = vpop.f32.mrf.mxu0
    %v1751 = vpop.f32.mrf.mxu0
    %v1752 = vadd.f32 0.0, %v1751
    %v1753 = vpop.f32.mrf.mxu0
    %1754 = vdwg.mxu0
    %v1755 = vpack.c.bf16 %v1705, %v1702
    %v1756 = vpack.c.bf16 %v1752, %v1749
    %v1759 = vunpack.c.l.b16 %v1755
    %v1760 = vunpack.c.h.b16 %v1755
    %v1761 = vunpack.c.l.b16 %v1756
    %v1762 = vunpack.c.h.b16 %v1756
    %v1763 = vpack.c.b16 %v1759, %v1759
    %v1764 = vpack.c.b16 %v1760, %v1760
    %v1765 = vpack.c.b16 %v1761, %v1761
    %v1766 = vpack.c.b16 %v1762, %v1762
    %1767 = vrot.lane.b32.xlu0 %v1763, 48
    %v1768 = vpop.permute.xlu0 %1767
    %1769 = vrot.lane.b32.xlu0 %v1764, 48
    %v1770 = vpop.permute.xlu0 %1769
    %1771 = vrot.lane.b32.xlu0 %v1765, 48
    %v1772 = vpop.permute.xlu0 %1771
    %1773 = vrot.lane.b32.xlu0 %v1766, 48
    %v1774 = vpop.permute.xlu0 %1773
    %vm1779 = vcmask 519552
    %1780 = vst.msk [vmem:[#allocation2] sm:$0xf] %vm1779, %v1768
    %1781 = vst.msk [vmem:[#allocation2 + $0x8] sm:$0xf] %vm1779, %v1770
    %1782 = vst.msk [vmem:[#allocation2 + $0x10] sm:$0xf] %vm1779, %v1772
    %1783 = vst.msk [vmem:[#allocation2 + $0x18] sm:$0xf] %vm1779, %v1774
    %1784 = vrot.lane.b32.xlu0 %v309, 64
    %v1785 = vpop.permute.xlu0 %1784
    %1786 = vrot.lane.b32.xlu0 %v510, 64
    %v1787 = vpop.permute.xlu0 %1786
    %v1789 = vsel %vm715, %v1785, 0
    %v1792 = vsel %vm715, %v1787, 0
    %1794 = vmatprep.subr.bf16.mxu0 0
    %1795 = vmatpush1.bf16.xpose.msra.mxu0 0
    %1796 = vmatprep.subr.bf16.mxu0 0
    %1797 = vmatpush1.bf16.xpose.msra.mxu0 0
    %1798 = vmatprep.subr.bf16.mxu0 0
    %1799 = vmatpush1.bf16.xpose.msra.mxu0 0
    %1800 = vmatprep.subr.bf16.mxu0 0
    %1801 = vmatpush1.bf16.xpose.msra.mxu0 0
    %1802 = vmatprep.subr.bf16.mxu0 0
    %1803 = vmatpush1.bf16.xpose.msra.mxu0 0
    %1804 = vmatprep.subr.bf16.mxu0 0
    %1805 = vmatpush1.bf16.xpose.msra.mxu0 0
    %1806 = vmatprep.subr.bf16.mxu0 0
    %1807 = vmatpush1.bf16.xpose.msra.mxu0 0
    %1808 = vmatprep.subr.bf16.mxu0 0
    %1809 = vmatpush1.bf16.xpose.msra.mxu0 %v1792
    %1810 = vmatprep.subr.bf16.mxu0 0
    %1811 = vmatpush2.bf16.xpose.msra.mxu0 0
    %1812 = vmatprep.subr.bf16.mxu0 0
    %1813 = vmatpush2.bf16.xpose.msra.mxu0 0
    %1814 = vmatprep.subr.bf16.mxu0 0
    %1815 = vmatpush2.bf16.xpose.msra.mxu0 0
    %1816 = vmatprep.subr.bf16.mxu0 0
    %1817 = vmatpush2.bf16.xpose.msra.mxu0 0
    %1818 = vmatprep.subr.bf16.mxu0 0
    %1819 = vmatpush2.bf16.xpose.msra.mxu0 0
    %1820 = vmatprep.subr.bf16.mxu0 0
    %1821 = vmatpush2.bf16.xpose.msra.mxu0 0
    %1822 = vmatprep.subr.bf16.mxu0 0
    %1823 = vmatpush2.bf16.xpose.msra.mxu0 0
    %1824 = vmatprep.subr.bf16.mxu0 0
    %1825 = vmatpush2.bf16.xpose.msra.mxu0 0
    %1826 = vmatprep.mubr.bf16.mxu0 0
    %1827 = vmatmul.mubr.bf16.gmra.mxu0 %v1789
    %v1828 = vpop.f32.mrf.mxu0
    %v1829 = vadd.f32 0.0, %v1828
    %v1830 = vpop.f32.mrf.mxu0
    %v1831 = vpop.f32.mrf.mxu0
    %v1832 = vadd.f32 0.0, %v1831
    %v1833 = vpop.f32.mrf.mxu0
    %1834 = vdwg.mxu0
    %1835 = vrot.lane.b32.xlu0 %v311, 64
    %v1836 = vpop.permute.xlu0 %1835
    %1837 = vrot.lane.b32.xlu0 %v512, 64
    %v1838 = vpop.permute.xlu0 %1837
    %v1840 = vsel %vm715, %v1836, 0
    %v1843 = vsel %vm715, %v1838, 0
    %1845 = vmatprep.subr.bf16.mxu0 0
    %1846 = vmatpush1.bf16.xpose.msra.mxu0 0
    %1847 = vmatprep.subr.bf16.mxu0 0
    %1848 = vmatpush1.bf16.xpose.msra.mxu0 0
    %1849 = vmatprep.subr.bf16.mxu0 0
    %1850 = vmatpush1.bf16.xpose.msra.mxu0 0
    %1851 = vmatprep.subr.bf16.mxu0 0
    %1852 = vmatpush1.bf16.xpose.msra.mxu0 0
    %1853 = vmatprep.subr.bf16.mxu0 0
    %1854 = vmatpush1.bf16.xpose.msra.mxu0 0
    %1855 = vmatprep.subr.bf16.mxu0 0
    %1856 = vmatpush1.bf16.xpose.msra.mxu0 0
    %1857 = vmatprep.subr.bf16.mxu0 0
    %1858 = vmatpush1.bf16.xpose.msra.mxu0 0
    %1859 = vmatprep.subr.bf16.mxu0 0
    %1860 = vmatpush1.bf16.xpose.msra.mxu0 %v1843
    %1861 = vmatprep.subr.bf16.mxu0 0
    %1862 = vmatpush2.bf16.xpose.msra.mxu0 0
    %1863 = vmatprep.subr.bf16.mxu0 0
    %1864 = vmatpush2.bf16.xpose.msra.mxu0 0
    %1865 = vmatprep.subr.bf16.mxu0 0
    %1866 = vmatpush2.bf16.xpose.msra.mxu0 0
    %1867 = vmatprep.subr.bf16.mxu0 0
    %1868 = vmatpush2.bf16.xpose.msra.mxu0 0
    %1869 = vmatprep.subr.bf16.mxu0 0
    %1870 = vmatpush2.bf16.xpose.msra.mxu0 0
    %1871 = vmatprep.subr.bf16.mxu0 0
    %1872 = vmatpush2.bf16.xpose.msra.mxu0 0
    %1873 = vmatprep.subr.bf16.mxu0 0
    %1874 = vmatpush2.bf16.xpose.msra.mxu0 0
    %1875 = vmatprep.subr.bf16.mxu0 0
    %1876 = vmatpush2.bf16.xpose.msra.mxu0 0
    %1877 = vmatprep.mubr.bf16.mxu0 0
    %1878 = vmatmul.mubr.bf16.gmra.mxu0 %v1840
    %v1879 = vpop.f32.mrf.mxu0
    %v1880 = vadd.f32 0.0, %v1879
    %v1881 = vpop.f32.mrf.mxu0
    %v1882 = vpop.f32.mrf.mxu0
    %v1883 = vadd.f32 0.0, %v1882
    %v1884 = vpop.f32.mrf.mxu0
    %1885 = vdwg.mxu0
    %v1886 = vsel %vm715, %v1829, -inf
    %1887 = vmax.xlane.f32.xlu0 %v1886
    %v1888 = vpop.xlane.xlu0 %1887
    %v1889 = vsel %vm715, %v1832, -inf
    %1890 = vmax.xlane.f32.xlu0 %v1889
    %v1891 = vpop.xlane.xlu0 %1890
    %v1892 = vsel %vm715, %v1880, -inf
    %1893 = vmax.xlane.f32.xlu0 %v1892
    %v1894 = vpop.xlane.xlu0 %1893
    %v1895 = vsel %vm715, %v1883, -inf
    %1896 = vmax.xlane.f32.xlu0 %v1895
    %v1897 = vpop.xlane.xlu0 %1896
    %v1898 = vsub.f32 %v1829, %v1888
    %v1899 = vsub.f32 %v1832, %v1891
    %v1900 = vsub.f32 %v1880, %v1894
    %v1901 = vsub.f32 %v1883, %v1897
    %v1902 = vmul.f32 %v1898, 1.442695
    %v1903 = vpow.pop %v1902
    %v1904 = vmul.f32 %v1899, 1.442695
    %v1905 = vpow.pop %v1904
    %v1906 = vmul.f32 %v1900, 1.442695
    %v1907 = vpow.pop %v1906
    %v1908 = vmul.f32 %v1901, 1.442695
    %v1909 = vpow.pop %v1908
    %v1910 = vsel %vm715, %v1903, 0.0
    %1911 = vadd.xlane.f32.xlu0 %v1910
    %v1912 = vpop.xlane.xlu0 %1911
    %v1913 = vsel %vm715, %v1905, 0.0
    %1914 = vadd.xlane.f32.xlu0 %v1913
    %v1915 = vpop.xlane.xlu0 %1914
    %v1916 = vsel %vm715, %v1907, 0.0
    %1917 = vadd.xlane.f32.xlu0 %v1916
    %v1918 = vpop.xlane.xlu0 %1917
    %v1919 = vsel %vm715, %v1909, 0.0
    %1920 = vadd.xlane.f32.xlu0 %v1919
    %v1921 = vpop.xlane.xlu0 %1920
    %v1922 = vrcp.pop %v1912
    %v1923 = vrcp.pop %v1915
    %v1924 = vrcp.pop %v1918
    %v1925 = vrcp.pop %v1921
    %v1926 = vmul.f32 %v1903, %v1922
    %v1927 = vmul.f32 %v1905, %v1923
    %v1928 = vmul.f32 %v1907, %v1924
    %v1929 = vmul.f32 %v1909, %v1925
    %v1930 = vpack.c.bf16 %v1927, %v1926
    %v1931 = vpack.c.bf16 %v1929, %v1928
    %1932 = vrot.lane.b32.xlu0 %v711, 64
    %v1933 = vpop.permute.xlu0 %1932
    %v1936 = vsel %vm715, %v1930, 0
    %1938 = vmatprep.subr.bf16.mxu0 0
    %1939 = vmatpush1.bf16.msra.mxu0 0
    %1940 = vmatprep.subr.bf16.mxu0 0
    %1941 = vmatpush1.bf16.msra.mxu0 0
    %1942 = vmatprep.subr.bf16.mxu0 0
    %1943 = vmatpush1.bf16.msra.mxu0 0
    %1944 = vmatprep.subr.bf16.mxu0 0
    %1945 = vmatpush1.bf16.msra.mxu0 0
    %1946 = vmatprep.subr.bf16.mxu0 0
    %1947 = vmatpush1.bf16.msra.mxu0 0
    %1948 = vmatprep.subr.bf16.mxu0 0
    %1949 = vmatpush1.bf16.msra.mxu0 0
    %1950 = vmatprep.subr.bf16.mxu0 0
    %1951 = vmatpush1.bf16.msra.mxu0 0
    %1952 = vmatprep.subr.bf16.mxu0 0
    %1953 = vmatpush1.bf16.msra.mxu0 %v1933
    %1954 = vmatprep.subr.bf16.mxu0 0
    %1955 = vmatpush2.bf16.msra.mxu0 0
    %1956 = vmatprep.subr.bf16.mxu0 0
    %1957 = vmatpush2.bf16.msra.mxu0 0
    %1958 = vmatprep.subr.bf16.mxu0 0
    %1959 = vmatpush2.bf16.msra.mxu0 0
    %1960 = vmatprep.subr.bf16.mxu0 0
    %1961 = vmatpush2.bf16.msra.mxu0 0
    %1962 = vmatprep.subr.bf16.mxu0 0
    %1963 = vmatpush2.bf16.msra.mxu0 0
    %1964 = vmatprep.subr.bf16.mxu0 0
    %1965 = vmatpush2.bf16.msra.mxu0 0
    %1966 = vmatprep.subr.bf16.mxu0 0
    %1967 = vmatpush2.bf16.msra.mxu0 0
    %1968 = vmatprep.subr.bf16.mxu0 0
    %1969 = vmatpush2.bf16.msra.mxu0 0
    %1970 = vmatprep.mubr.bf16.mxu0 0
    %1971 = vmatmul.mubr.bf16.gmra.mxu0 %v1936
    %v1972 = vpop.f32.mrf.mxu0
    %v1973 = vadd.f32 0.0, %v1972
    %v1974 = vpop.f32.mrf.mxu0
    %v1975 = vpop.f32.mrf.mxu0
    %v1976 = vadd.f32 0.0, %v1975
    %v1977 = vpop.f32.mrf.mxu0
    %1978 = vdwg.mxu0
    %1979 = vrot.lane.b32.xlu0 %v713, 64
    %v1980 = vpop.permute.xlu0 %1979
    %v1983 = vsel %vm715, %v1931, 0
    %1985 = vmatprep.subr.bf16.mxu0 0
    %1986 = vmatpush1.bf16.msra.mxu0 0
    %1987 = vmatprep.subr.bf16.mxu0 0
    %1988 = vmatpush1.bf16.msra.mxu0 0
    %1989 = vmatprep.subr.bf16.mxu0 0
    %1990 = vmatpush1.bf16.msra.mxu0 0
    %1991 = vmatprep.subr.bf16.mxu0 0
    %1992 = vmatpush1.bf16.msra.mxu0 0
    %1993 = vmatprep.subr.bf16.mxu0 0
    %1994 = vmatpush1.bf16.msra.mxu0 0
    %1995 = vmatprep.subr.bf16.mxu0 0
    %1996 = vmatpush1.bf16.msra.mxu0 0
    %1997 = vmatprep.subr.bf16.mxu0 0
    %1998 = vmatpush1.bf16.msra.mxu0 0
    %1999 = vmatprep.subr.bf16.mxu0 0
    %2000 = vmatpush1.bf16.msra.mxu0 %v1980
    %2001 = vmatprep.subr.bf16.mxu0 0
    %2002 = vmatpush2.bf16.msra.mxu0 0
    %2003 = vmatprep.subr.bf16.mxu0 0
    %2004 = vmatpush2.bf16.msra.mxu0 0
    %2005 = vmatprep.subr.bf16.mxu0 0
    %2006 = vmatpush2.bf16.msra.mxu0 0
    %2007 = vmatprep.subr.bf16.mxu0 0
    %2008 = vmatpush2.bf16.msra.mxu0 0
    %2009 = vmatprep.subr.bf16.mxu0 0
    %2010 = vmatpush2.bf16.msra.mxu0 0
    %2011 = vmatprep.subr.bf16.mxu0 0
    %2012 = vmatpush2.bf16.msra.mxu0 0
    %2013 = vmatprep.subr.bf16.mxu0 0
    %2014 = vmatpush2.bf16.msra.mxu0 0
    %2015 = vmatprep.subr.bf16.mxu0 0
    %2016 = vmatpush2.bf16.msra.mxu0 0
    %2017 = vmatprep.mubr.bf16.mxu0 0
    %2018 = vmatmul.mubr.bf16.gmra.mxu0 %v1983
    %v2019 = vpop.f32.mrf.mxu0
    %v2020 = vadd.f32 0.0, %v2019
    %v2021 = vpop.f32.mrf.mxu0
    %v2022 = vpop.f32.mrf.mxu0
    %v2023 = vadd.f32 0.0, %v2022
    %v2024 = vpop.f32.mrf.mxu0
    %2025 = vdwg.mxu0
    %v2026 = vpack.c.bf16 %v1976, %v1973
    %v2027 = vpack.c.bf16 %v2023, %v2020
    %v2030 = vunpack.c.l.b16 %v2026
    %v2031 = vunpack.c.h.b16 %v2026
    %v2032 = vunpack.c.l.b16 %v2027
    %v2033 = vunpack.c.h.b16 %v2027
    %v2034 = vpack.c.b16 %v2030, %v2030
    %v2035 = vpack.c.b16 %v2031, %v2031
    %v2036 = vpack.c.b16 %v2032, %v2032
    %v2037 = vpack.c.b16 %v2033, %v2033
    %2038 = vrot.lane.b32.xlu0 %v2034, 64
    %v2039 = vpop.permute.xlu0 %2038
    %2040 = vrot.lane.b32.xlu0 %v2035, 64
    %v2041 = vpop.permute.xlu0 %2040
    %2042 = vrot.lane.b32.xlu0 %v2036, 64
    %v2043 = vpop.permute.xlu0 %2042
    %2044 = vrot.lane.b32.xlu0 %v2037, 64
    %v2045 = vpop.permute.xlu0 %2044
    %vm2050 = vcmask 650752
    %2051 = vst.msk [vmem:[#allocation2] sm:$0xf] %vm2050, %v2039
    %2052 = vst.msk [vmem:[#allocation2 + $0x8] sm:$0xf] %vm2050, %v2041
    %2053 = vst.msk [vmem:[#allocation2 + $0x10] sm:$0xf] %vm2050, %v2043
    %2054 = vst.msk [vmem:[#allocation2 + $0x18] sm:$0xf] %vm2050, %v2045
    %2055 = vrot.lane.b32.xlu0 %v309, 48
    %v2056 = vpop.permute.xlu0 %2055
    %2057 = vrot.lane.b32.xlu0 %v510, 48
    %v2058 = vpop.permute.xlu0 %2057
    %v2060 = vsel %vm715, %v2056, 0
    %v2063 = vsel %vm715, %v2058, 0
    %2065 = vmatprep.subr.bf16.mxu0 0
    %2066 = vmatpush1.bf16.xpose.msra.mxu0 0
    %2067 = vmatprep.subr.bf16.mxu0 0
    %2068 = vmatpush1.bf16.xpose.msra.mxu0 0
    %2069 = vmatprep.subr.bf16.mxu0 0
    %2070 = vmatpush1.bf16.xpose.msra.mxu0 0
    %2071 = vmatprep.subr.bf16.mxu0 0
    %2072 = vmatpush1.bf16.xpose.msra.mxu0 0
    %2073 = vmatprep.subr.bf16.mxu0 0
    %2074 = vmatpush1.bf16.xpose.msra.mxu0 0
    %2075 = vmatprep.subr.bf16.mxu0 0
    %2076 = vmatpush1.bf16.xpose.msra.mxu0 0
    %2077 = vmatprep.subr.bf16.mxu0 0
    %2078 = vmatpush1.bf16.xpose.msra.mxu0 0
    %2079 = vmatprep.subr.bf16.mxu0 0
    %2080 = vmatpush1.bf16.xpose.msra.mxu0 %v2063
    %2081 = vmatprep.subr.bf16.mxu0 0
    %2082 = vmatpush2.bf16.xpose.msra.mxu0 0
    %2083 = vmatprep.subr.bf16.mxu0 0
    %2084 = vmatpush2.bf16.xpose.msra.mxu0 0
    %2085 = vmatprep.subr.bf16.mxu0 0
    %2086 = vmatpush2.bf16.xpose.msra.mxu0 0
    %2087 = vmatprep.subr.bf16.mxu0 0
    %2088 = vmatpush2.bf16.xpose.msra.mxu0 0
    %2089 = vmatprep.subr.bf16.mxu0 0
    %2090 = vmatpush2.bf16.xpose.msra.mxu0 0
    %2091 = vmatprep.subr.bf16.mxu0 0
    %2092 = vmatpush2.bf16.xpose.msra.mxu0 0
    %2093 = vmatprep.subr.bf16.mxu0 0
    %2094 = vmatpush2.bf16.xpose.msra.mxu0 0
    %2095 = vmatprep.subr.bf16.mxu0 0
    %2096 = vmatpush2.bf16.xpose.msra.mxu0 0
    %2097 = vmatprep.mubr.bf16.mxu0 0
    %2098 = vmatmul.mubr.bf16.gmra.mxu0 %v2060
    %v2099 = vpop.f32.mrf.mxu0
    %v2100 = vadd.f32 0.0, %v2099
    %v2101 = vpop.f32.mrf.mxu0
    %v2102 = vpop.f32.mrf.mxu0
    %v2103 = vadd.f32 0.0, %v2102
    %v2104 = vpop.f32.mrf.mxu0
    %2105 = vdwg.mxu0
    %2106 = vrot.lane.b32.xlu0 %v311, 48
    %v2107 = vpop.permute.xlu0 %2106
    %2108 = vrot.lane.b32.xlu0 %v512, 48
    %v2109 = vpop.permute.xlu0 %2108
    %v2111 = vsel %vm715, %v2107, 0
    %v2114 = vsel %vm715, %v2109, 0
    %2116 = vmatprep.subr.bf16.mxu0 0
    %2117 = vmatpush1.bf16.xpose.msra.mxu0 0
    %2118 = vmatprep.subr.bf16.mxu0 0
    %2119 = vmatpush1.bf16.xpose.msra.mxu0 0
    %2120 = vmatprep.subr.bf16.mxu0 0
    %2121 = vmatpush1.bf16.xpose.msra.mxu0 0
    %2122 = vmatprep.subr.bf16.mxu0 0
    %2123 = vmatpush1.bf16.xpose.msra.mxu0 0
    %2124 = vmatprep.subr.bf16.mxu0 0
    %2125 = vmatpush1.bf16.xpose.msra.mxu0 0
    %2126 = vmatprep.subr.bf16.mxu0 0
    %2127 = vmatpush1.bf16.xpose.msra.mxu0 0
    %2128 = vmatprep.subr.bf16.mxu0 0
    %2129 = vmatpush1.bf16.xpose.msra.mxu0 0
    %2130 = vmatprep.subr.bf16.mxu0 0
    %2131 = vmatpush1.bf16.xpose.msra.mxu0 %v2114
    %2132 = vmatprep.subr.bf16.mxu0 0
    %2133 = vmatpush2.bf16.xpose.msra.mxu0 0
    %2134 = vmatprep.subr.bf16.mxu0 0
    %2135 = vmatpush2.bf16.xpose.msra.mxu0 0
    %2136 = vmatprep.subr.bf16.mxu0 0
    %2137 = vmatpush2.bf16.xpose.msra.mxu0 0
    %2138 = vmatprep.subr.bf16.mxu0 0
    %2139 = vmatpush2.bf16.xpose.msra.mxu0 0
    %2140 = vmatprep.subr.bf16.mxu0 0
    %2141 = vmatpush2.bf16.xpose.msra.mxu0 0
    %2142 = vmatprep.subr.bf16.mxu0 0
    %2143 = vmatpush2.bf16.xpose.msra.mxu0 0
    %2144 = vmatprep.subr.bf16.mxu0 0
    %2145 = vmatpush2.bf16.xpose.msra.mxu0 0
    %2146 = vmatprep.subr.bf16.mxu0 0
    %2147 = vmatpush2.bf16.xpose.msra.mxu0 0
    %2148 = vmatprep.mubr.bf16.mxu0 0
    %2149 = vmatmul.mubr.bf16.gmra.mxu0 %v2111
    %v2150 = vpop.f32.mrf.mxu0
    %v2151 = vadd.f32 0.0, %v2150
    %v2152 = vpop.f32.mrf.mxu0
    %v2153 = vpop.f32.mrf.mxu0
    %v2154 = vadd.f32 0.0, %v2153
    %v2155 = vpop.f32.mrf.mxu0
    %2156 = vdwg.mxu0
    %v2157 = vsel %vm715, %v2100, -inf
    %2158 = vmax.xlane.f32.xlu0 %v2157
    %v2159 = vpop.xlane.xlu0 %2158
    %v2160 = vsel %vm715, %v2103, -inf
    %2161 = vmax.xlane.f32.xlu0 %v2160
    %v2162 = vpop.xlane.xlu0 %2161
    %v2163 = vsel %vm715, %v2151, -inf
    %2164 = vmax.xlane.f32.xlu0 %v2163
    %v2165 = vpop.xlane.xlu0 %2164
    %v2166 = vsel %vm715, %v2154, -inf
    %2167 = vmax.xlane.f32.xlu0 %v2166
    %v2168 = vpop.xlane.xlu0 %2167
    %v2169 = vsub.f32 %v2100, %v2159
    %v2170 = vsub.f32 %v2103, %v2162
    %v2171 = vsub.f32 %v2151, %v2165
    %v2172 = vsub.f32 %v2154, %v2168
    %v2173 = vmul.f32 %v2169, 1.442695
    %v2174 = vpow.pop %v2173
    %v2175 = vmul.f32 %v2170, 1.442695
    %v2176 = vpow.pop %v2175
    %v2177 = vmul.f32 %v2171, 1.442695
    %v2178 = vpow.pop %v2177
    %v2179 = vmul.f32 %v2172, 1.442695
    %v2180 = vpow.pop %v2179
    %v2181 = vsel %vm715, %v2174, 0.0
    %2182 = vadd.xlane.f32.xlu0 %v2181
    %v2183 = vpop.xlane.xlu0 %2182
    %v2184 = vsel %vm715, %v2176, 0.0
    %2185 = vadd.xlane.f32.xlu0 %v2184
    %v2186 = vpop.xlane.xlu0 %2185
    %v2187 = vsel %vm715, %v2178, 0.0
    %2188 = vadd.xlane.f32.xlu0 %v2187
    %v2189 = vpop.xlane.xlu0 %2188
    %v2190 = vsel %vm715, %v2180, 0.0
    %2191 = vadd.xlane.f32.xlu0 %v2190
    %v2192 = vpop.xlane.xlu0 %2191
    %v2193 = vrcp.pop %v2183
    %v2194 = vrcp.pop %v2186
    %v2195 = vrcp.pop %v2189
    %v2196 = vrcp.pop %v2192
    %v2197 = vmul.f32 %v2174, %v2193
    %v2198 = vmul.f32 %v2176, %v2194
    %v2199 = vmul.f32 %v2178, %v2195
    %v2200 = vmul.f32 %v2180, %v2196
    %v2201 = vpack.c.bf16 %v2198, %v2197
    %v2202 = vpack.c.bf16 %v2200, %v2199
    %2203 = vrot.lane.b32.xlu0 %v711, 48
    %v2204 = vpop.permute.xlu0 %2203
    %v2207 = vsel %vm715, %v2201, 0
    %2209 = vmatprep.subr.bf16.mxu0 0
    %2210 = vmatpush1.bf16.msra.mxu0 0
    %2211 = vmatprep.subr.bf16.mxu0 0
    %2212 = vmatpush1.bf16.msra.mxu0 0
    %2213 = vmatprep.subr.bf16.mxu0 0
    %2214 = vmatpush1.bf16.msra.mxu0 0
    %2215 = vmatprep.subr.bf16.mxu0 0
    %2216 = vmatpush1.bf16.msra.mxu0 0
    %2217 = vmatprep.subr.bf16.mxu0 0
    %2218 = vmatpush1.bf16.msra.mxu0 0
    %2219 = vmatprep.subr.bf16.mxu0 0
    %2220 = vmatpush1.bf16.msra.mxu0 0
    %2221 = vmatprep.subr.bf16.mxu0 0
    %2222 = vmatpush1.bf16.msra.mxu0 0
    %2223 = vmatprep.subr.bf16.mxu0 0
    %2224 = vmatpush1.bf16.msra.mxu0 %v2204
    %2225 = vmatprep.subr.bf16.mxu0 0
    %2226 = vmatpush2.bf16.msra.mxu0 0
    %2227 = vmatprep.subr.bf16.mxu0 0
    %2228 = vmatpush2.bf16.msra.mxu0 0
    %2229 = vmatprep.subr.bf16.mxu0 0
    %2230 = vmatpush2.bf16.msra.mxu0 0
    %2231 = vmatprep.subr.bf16.mxu0 0
    %2232 = vmatpush2.bf16.msra.mxu0 0
    %2233 = vmatprep.subr.bf16.mxu0 0
    %2234 = vmatpush2.bf16.msra.mxu0 0
    %2235 = vmatprep.subr.bf16.mxu0 0
    %2236 = vmatpush2.bf16.msra.mxu0 0
    %2237 = vmatprep.subr.bf16.mxu0 0
    %2238 = vmatpush2.bf16.msra.mxu0 0
    %2239 = vmatprep.subr.bf16.mxu0 0
    %2240 = vmatpush2.bf16.msra.mxu0 0
    %2241 = vmatprep.mubr.bf16.mxu0 0
    %2242 = vmatmul.mubr.bf16.gmra.mxu0 %v2207
    %v2243 = vpop.f32.mrf.mxu0
    %v2244 = vadd.f32 0.0, %v2243
    %v2245 = vpop.f32.mrf.mxu0
    %v2246 = vpop.f32.mrf.mxu0
    %v2247 = vadd.f32 0.0, %v2246
    %v2248 = vpop.f32.mrf.mxu0
    %2249 = vdwg.mxu0
    %2250 = vrot.lane.b32.xlu0 %v713, 48
    %v2251 = vpop.permute.xlu0 %2250
    %v2254 = vsel %vm715, %v2202, 0
    %2256 = vmatprep.subr.bf16.mxu0 0
    %2257 = vmatpush1.bf16.msra.mxu0 0
    %2258 = vmatprep.subr.bf16.mxu0 0
    %2259 = vmatpush1.bf16.msra.mxu0 0
    %2260 = vmatprep.subr.bf16.mxu0 0
    %2261 = vmatpush1.bf16.msra.mxu0 0
    %2262 = vmatprep.subr.bf16.mxu0 0
    %2263 = vmatpush1.bf16.msra.mxu0 0
    %2264 = vmatprep.subr.bf16.mxu0 0
    %2265 = vmatpush1.bf16.msra.mxu0 0
    %2266 = vmatprep.subr.bf16.mxu0 0
    %2267 = vmatpush1.bf16.msra.mxu0 0
    %2268 = vmatprep.subr.bf16.mxu0 0
    %2269 = vmatpush1.bf16.msra.mxu0 0
    %2270 = vmatprep.subr.bf16.mxu0 0
    %2271 = vmatpush1.bf16.msra.mxu0 %v2251
    %2272 = vmatprep.subr.bf16.mxu0 0
    %2273 = vmatpush2.bf16.msra.mxu0 0
    %2274 = vmatprep.subr.bf16.mxu0 0
    %2275 = vmatpush2.bf16.msra.mxu0 0
    %2276 = vmatprep.subr.bf16.mxu0 0
    %2277 = vmatpush2.bf16.msra.mxu0 0
    %2278 = vmatprep.subr.bf16.mxu0 0
    %2279 = vmatpush2.bf16.msra.mxu0 0
    %2280 = vmatprep.subr.bf16.mxu0 0
    %2281 = vmatpush2.bf16.msra.mxu0 0
    %2282 = vmatprep.subr.bf16.mxu0 0
    %2283 = vmatpush2.bf16.msra.mxu0 0
    %2284 = vmatprep.subr.bf16.mxu0 0
    %2285 = vmatpush2.bf16.msra.mxu0 0
    %2286 = vmatprep.subr.bf16.mxu0 0
    %2287 = vmatpush2.bf16.msra.mxu0 0
    %2288 = vmatprep.mubr.bf16.mxu0 0
    %2289 = vmatmul.mubr.bf16.gmra.mxu0 %v2254
    %v2290 = vpop.f32.mrf.mxu0
    %v2291 = vadd.f32 0.0, %v2290
    %v2292 = vpop.f32.mrf.mxu0
    %v2293 = vpop.f32.mrf.mxu0
    %v2294 = vadd.f32 0.0, %v2293
    %v2295 = vpop.f32.mrf.mxu0
    %2296 = vdwg.mxu0
    %v2297 = vpack.c.bf16 %v2247, %v2244
    %v2298 = vpack.c.bf16 %v2294, %v2291
    %v2301 = vunpack.c.l.b16 %v2297
    %v2302 = vunpack.c.h.b16 %v2297
    %v2303 = vunpack.c.l.b16 %v2298
    %v2304 = vunpack.c.h.b16 %v2298
    %v2305 = vpack.c.b16 %v2301, %v2301
    %v2306 = vpack.c.b16 %v2302, %v2302
    %v2307 = vpack.c.b16 %v2303, %v2303
    %v2308 = vpack.c.b16 %v2304, %v2304
    %2309 = vrot.lane.b32.xlu0 %v2305, 80
    %v2310 = vpop.permute.xlu0 %2309
    %2311 = vrot.lane.b32.xlu0 %v2306, 80
    %v2312 = vpop.permute.xlu0 %2311
    %2313 = vrot.lane.b32.xlu0 %v2307, 80
    %v2314 = vpop.permute.xlu0 %2313
    %2315 = vrot.lane.b32.xlu0 %v2308, 80
    %v2316 = vpop.permute.xlu0 %2315
    %vm2321 = vcmask 781952
    %2322 = vst.msk [vmem:[#allocation2] sm:$0xf] %vm2321, %v2310
    %2323 = vst.msk [vmem:[#allocation2 + $0x8] sm:$0xf] %vm2321, %v2312
    %2324 = vst.msk [vmem:[#allocation2 + $0x10] sm:$0xf] %vm2321, %v2314
    %2325 = vst.msk [vmem:[#allocation2 + $0x18] sm:$0xf] %vm2321, %v2316
    %2326 = vrot.lane.b32.xlu0 %v309, 32
    %v2327 = vpop.permute.xlu0 %2326
    %2328 = vrot.lane.b32.xlu0 %v510, 32
    %v2329 = vpop.permute.xlu0 %2328
    %v2331 = vsel %vm715, %v2327, 0
    %v2334 = vsel %vm715, %v2329, 0
    %2336 = vmatprep.subr.bf16.mxu0 0
    %2337 = vmatpush1.bf16.xpose.msra.mxu0 0
    %2338 = vmatprep.subr.bf16.mxu0 0
    %2339 = vmatpush1.bf16.xpose.msra.mxu0 0
    %2340 = vmatprep.subr.bf16.mxu0 0
    %2341 = vmatpush1.bf16.xpose.msra.mxu0 0
    %2342 = vmatprep.subr.bf16.mxu0 0
    %2343 = vmatpush1.bf16.xpose.msra.mxu0 0
    %2344 = vmatprep.subr.bf16.mxu0 0
    %2345 = vmatpush1.bf16.xpose.msra.mxu0 0
    %2346 = vmatprep.subr.bf16.mxu0 0
    %2347 = vmatpush1.bf16.xpose.msra.mxu0 0
    %2348 = vmatprep.subr.bf16.mxu0 0
    %2349 = vmatpush1.bf16.xpose.msra.mxu0 0
    %2350 = vmatprep.subr.bf16.mxu0 0
    %2351 = vmatpush1.bf16.xpose.msra.mxu0 %v2334
    %2352 = vmatprep.subr.bf16.mxu0 0
    %2353 = vmatpush2.bf16.xpose.msra.mxu0 0
    %2354 = vmatprep.subr.bf16.mxu0 0
    %2355 = vmatpush2.bf16.xpose.msra.mxu0 0
    %2356 = vmatprep.subr.bf16.mxu0 0
    %2357 = vmatpush2.bf16.xpose.msra.mxu0 0
    %2358 = vmatprep.subr.bf16.mxu0 0
    %2359 = vmatpush2.bf16.xpose.msra.mxu0 0
    %2360 = vmatprep.subr.bf16.mxu0 0
    %2361 = vmatpush2.bf16.xpose.msra.mxu0 0
    %2362 = vmatprep.subr.bf16.mxu0 0
    %2363 = vmatpush2.bf16.xpose.msra.mxu0 0
    %2364 = vmatprep.subr.bf16.mxu0 0
    %2365 = vmatpush2.bf16.xpose.msra.mxu0 0
    %2366 = vmatprep.subr.bf16.mxu0 0
    %2367 = vmatpush2.bf16.xpose.msra.mxu0 0
    %2368 = vmatprep.mubr.bf16.mxu0 0
    %2369 = vmatmul.mubr.bf16.gmra.mxu0 %v2331
    %v2370 = vpop.f32.mrf.mxu0
    %v2371 = vadd.f32 0.0, %v2370
    %v2372 = vpop.f32.mrf.mxu0
    %v2373 = vpop.f32.mrf.mxu0
    %v2374 = vadd.f32 0.0, %v2373
    %v2375 = vpop.f32.mrf.mxu0
    %2376 = vdwg.mxu0
    %2377 = vrot.lane.b32.xlu0 %v311, 32
    %v2378 = vpop.permute.xlu0 %2377
    %2379 = vrot.lane.b32.xlu0 %v512, 32
    %v2380 = vpop.permute.xlu0 %2379
    %v2382 = vsel %vm715, %v2378, 0
    %v2385 = vsel %vm715, %v2380, 0
    %2387 = vmatprep.subr.bf16.mxu0 0
    %2388 = vmatpush1.bf16.xpose.msra.mxu0 0
    %2389 = vmatprep.subr.bf16.mxu0 0
    %2390 = vmatpush1.bf16.xpose.msra.mxu0 0
    %2391 = vmatprep.subr.bf16.mxu0 0
    %2392 = vmatpush1.bf16.xpose.msra.mxu0 0
    %2393 = vmatprep.subr.bf16.mxu0 0
    %2394 = vmatpush1.bf16.xpose.msra.mxu0 0
    %2395 = vmatprep.subr.bf16.mxu0 0
    %2396 = vmatpush1.bf16.xpose.msra.mxu0 0
    %2397 = vmatprep.subr.bf16.mxu0 0
    %2398 = vmatpush1.bf16.xpose.msra.mxu0 0
    %2399 = vmatprep.subr.bf16.mxu0 0
    %2400 = vmatpush1.bf16.xpose.msra.mxu0 0
    %2401 = vmatprep.subr.bf16.mxu0 0
    %2402 = vmatpush1.bf16.xpose.msra.mxu0 %v2385
    %2403 = vmatprep.subr.bf16.mxu0 0
    %2404 = vmatpush2.bf16.xpose.msra.mxu0 0
    %2405 = vmatprep.subr.bf16.mxu0 0
    %2406 = vmatpush2.bf16.xpose.msra.mxu0 0
    %2407 = vmatprep.subr.bf16.mxu0 0
    %2408 = vmatpush2.bf16.xpose.msra.mxu0 0
    %2409 = vmatprep.subr.bf16.mxu0 0
    %2410 = vmatpush2.bf16.xpose.msra.mxu0 0
    %2411 = vmatprep.subr.bf16.mxu0 0
    %2412 = vmatpush2.bf16.xpose.msra.mxu0 0
    %2413 = vmatprep.subr.bf16.mxu0 0
    %2414 = vmatpush2.bf16.xpose.msra.mxu0 0
    %2415 = vmatprep.subr.bf16.mxu0 0
    %2416 = vmatpush2.bf16.xpose.msra.mxu0 0
    %2417 = vmatprep.subr.bf16.mxu0 0
    %2418 = vmatpush2.bf16.xpose.msra.mxu0 0
    %2419 = vmatprep.mubr.bf16.mxu0 0
    %2420 = vmatmul.mubr.bf16.gmra.mxu0 %v2382
    %v2421 = vpop.f32.mrf.mxu0
    %v2422 = vadd.f32 0.0, %v2421
    %v2423 = vpop.f32.mrf.mxu0
    %v2424 = vpop.f32.mrf.mxu0
    %v2425 = vadd.f32 0.0, %v2424
    %v2426 = vpop.f32.mrf.mxu0
    %2427 = vdwg.mxu0
    %v2428 = vsel %vm715, %v2371, -inf
    %2429 = vmax.xlane.f32.xlu0 %v2428
    %v2430 = vpop.xlane.xlu0 %2429
    %v2431 = vsel %vm715, %v2374, -inf
    %2432 = vmax.xlane.f32.xlu0 %v2431
    %v2433 = vpop.xlane.xlu0 %2432
    %v2434 = vsel %vm715, %v2422, -inf
    %2435 = vmax.xlane.f32.xlu0 %v2434
    %v2436 = vpop.xlane.xlu0 %2435
    %v2437 = vsel %vm715, %v2425, -inf
    %2438 = vmax.xlane.f32.xlu0 %v2437
    %v2439 = vpop.xlane.xlu0 %2438
    %v2440 = vsub.f32 %v2371, %v2430
    %v2441 = vsub.f32 %v2374, %v2433
    %v2442 = vsub.f32 %v2422, %v2436
    %v2443 = vsub.f32 %v2425, %v2439
    %v2444 = vmul.f32 %v2440, 1.442695
    %v2445 = vpow.pop %v2444
    %v2446 = vmul.f32 %v2441, 1.442695
    %v2447 = vpow.pop %v2446
    %v2448 = vmul.f32 %v2442, 1.442695
    %v2449 = vpow.pop %v2448
    %v2450 = vmul.f32 %v2443, 1.442695
    %v2451 = vpow.pop %v2450
    %v2452 = vsel %vm715, %v2445, 0.0
    %2453 = vadd.xlane.f32.xlu0 %v2452
    %v2454 = vpop.xlane.xlu0 %2453
    %v2455 = vsel %vm715, %v2447, 0.0
    %2456 = vadd.xlane.f32.xlu0 %v2455
    %v2457 = vpop.xlane.xlu0 %2456
    %v2458 = vsel %vm715, %v2449, 0.0
    %2459 = vadd.xlane.f32.xlu0 %v2458
    %v2460 = vpop.xlane.xlu0 %2459
    %v2461 = vsel %vm715, %v2451, 0.0
    %2462 = vadd.xlane.f32.xlu0 %v2461
    %v2463 = vpop.xlane.xlu0 %2462
    %v2464 = vrcp.pop %v2454
    %v2465 = vrcp.pop %v2457
    %v2466 = vrcp.pop %v2460
    %v2467 = vrcp.pop %v2463
    %v2468 = vmul.f32 %v2445, %v2464
    %v2469 = vmul.f32 %v2447, %v2465
    %v2470 = vmul.f32 %v2449, %v2466
    %v2471 = vmul.f32 %v2451, %v2467
    %v2472 = vpack.c.bf16 %v2469, %v2468
    %v2473 = vpack.c.bf16 %v2471, %v2470
    %2474 = vrot.lane.b32.xlu0 %v711, 32
    %v2475 = vpop.permute.xlu0 %2474
    %v2478 = vsel %vm715, %v2472, 0
    %2480 = vmatprep.subr.bf16.mxu0 0
    %2481 = vmatpush1.bf16.msra.mxu0 0
    %2482 = vmatprep.subr.bf16.mxu0 0
    %2483 = vmatpush1.bf16.msra.mxu0 0
    %2484 = vmatprep.subr.bf16.mxu0 0
    %2485 = vmatpush1.bf16.msra.mxu0 0
    %2486 = vmatprep.subr.bf16.mxu0 0
    %2487 = vmatpush1.bf16.msra.mxu0 0
    %2488 = vmatprep.subr.bf16.mxu0 0
    %2489 = vmatpush1.bf16.msra.mxu0 0
    %2490 = vmatprep.subr.bf16.mxu0 0
    %2491 = vmatpush1.bf16.msra.mxu0 0
    %2492 = vmatprep.subr.bf16.mxu0 0
    %2493 = vmatpush1.bf16.msra.mxu0 0
    %2494 = vmatprep.subr.bf16.mxu0 0
    %2495 = vmatpush1.bf16.msra.mxu0 %v2475
    %2496 = vmatprep.subr.bf16.mxu0 0
    %2497 = vmatpush2.bf16.msra.mxu0 0
    %2498 = vmatprep.subr.bf16.mxu0 0
    %2499 = vmatpush2.bf16.msra.mxu0 0
    %2500 = vmatprep.subr.bf16.mxu0 0
    %2501 = vmatpush2.bf16.msra.mxu0 0
    %2502 = vmatprep.subr.bf16.mxu0 0
    %2503 = vmatpush2.bf16.msra.mxu0 0
    %2504 = vmatprep.subr.bf16.mxu0 0
    %2505 = vmatpush2.bf16.msra.mxu0 0
    %2506 = vmatprep.subr.bf16.mxu0 0
    %2507 = vmatpush2.bf16.msra.mxu0 0
    %2508 = vmatprep.subr.bf16.mxu0 0
    %2509 = vmatpush2.bf16.msra.mxu0 0
    %2510 = vmatprep.subr.bf16.mxu0 0
    %2511 = vmatpush2.bf16.msra.mxu0 0
    %2512 = vmatprep.mubr.bf16.mxu0 0
    %2513 = vmatmul.mubr.bf16.gmra.mxu0 %v2478
    %v2514 = vpop.f32.mrf.mxu0
    %v2515 = vadd.f32 0.0, %v2514
    %v2516 = vpop.f32.mrf.mxu0
    %v2517 = vpop.f32.mrf.mxu0
    %v2518 = vadd.f32 0.0, %v2517
    %v2519 = vpop.f32.mrf.mxu0
    %2520 = vdwg.mxu0
    %2521 = vrot.lane.b32.xlu0 %v713, 32
    %v2522 = vpop.permute.xlu0 %2521
    %v2525 = vsel %vm715, %v2473, 0
    %2527 = vmatprep.subr.bf16.mxu0 0
    %2528 = vmatpush1.bf16.msra.mxu0 0
    %2529 = vmatprep.subr.bf16.mxu0 0
    %2530 = vmatpush1.bf16.msra.mxu0 0
    %2531 = vmatprep.subr.bf16.mxu0 0
    %2532 = vmatpush1.bf16.msra.mxu0 0
    %2533 = vmatprep.subr.bf16.mxu0 0
    %2534 = vmatpush1.bf16.msra.mxu0 0
    %2535 = vmatprep.subr.bf16.mxu0 0
    %2536 = vmatpush1.bf16.msra.mxu0 0
    %2537 = vmatprep.subr.bf16.mxu0 0
    %2538 = vmatpush1.bf16.msra.mxu0 0
    %2539 = vmatprep.subr.bf16.mxu0 0
    %2540 = vmatpush1.bf16.msra.mxu0 0
    %2541 = vmatprep.subr.bf16.mxu0 0
    %2542 = vmatpush1.bf16.msra.mxu0 %v2522
    %2543 = vmatprep.subr.bf16.mxu0 0
    %2544 = vmatpush2.bf16.msra.mxu0 0
    %2545 = vmatprep.subr.bf16.mxu0 0
    %2546 = vmatpush2.bf16.msra.mxu0 0
    %2547 = vmatprep.subr.bf16.mxu0 0
    %2548 = vmatpush2.bf16.msra.mxu0 0
    %2549 = vmatprep.subr.bf16.mxu0 0
    %2550 = vmatpush2.bf16.msra.mxu0 0
    %2551 = vmatprep.subr.bf16.mxu0 0
    %2552 = vmatpush2.bf16.msra.mxu0 0
    %2553 = vmatprep.subr.bf16.mxu0 0
    %2554 = vmatpush2.bf16.msra.mxu0 0
    %2555 = vmatprep.subr.bf16.mxu0 0
    %2556 = vmatpush2.bf16.msra.mxu0 0
    %2557 = vmatprep.subr.bf16.mxu0 0
    %2558 = vmatpush2.bf16.msra.mxu0 0
    %2559 = vmatprep.mubr.bf16.mxu0 0
    %2560 = vmatmul.mubr.bf16.gmra.mxu0 %v2525
    %v2561 = vpop.f32.mrf.mxu0
    %v2562 = vadd.f32 0.0, %v2561
    %v2563 = vpop.f32.mrf.mxu0
    %v2564 = vpop.f32.mrf.mxu0
    %v2565 = vadd.f32 0.0, %v2564
    %v2566 = vpop.f32.mrf.mxu0
    %2567 = vdwg.mxu0
    %v2568 = vpack.c.bf16 %v2518, %v2515
    %v2569 = vpack.c.bf16 %v2565, %v2562
    %v2572 = vunpack.c.l.b16 %v2568
    %v2573 = vunpack.c.h.b16 %v2568
    %v2574 = vunpack.c.l.b16 %v2569
    %v2575 = vunpack.c.h.b16 %v2569
    %v2576 = vpack.c.b16 %v2572, %v2572
    %v2577 = vpack.c.b16 %v2573, %v2573
    %v2578 = vpack.c.b16 %v2574, %v2574
    %v2579 = vpack.c.b16 %v2575, %v2575
    %2580 = vrot.lane.b32.xlu0 %v2576, 96
    %v2581 = vpop.permute.xlu0 %2580
    %2582 = vrot.lane.b32.xlu0 %v2577, 96
    %v2583 = vpop.permute.xlu0 %2582
    %2584 = vrot.lane.b32.xlu0 %v2578, 96
    %v2585 = vpop.permute.xlu0 %2584
    %2586 = vrot.lane.b32.xlu0 %v2579, 96
    %v2587 = vpop.permute.xlu0 %2586
    %vm2592 = vcmask 913152
    %2593 = vst.msk [vmem:[#allocation2] sm:$0xf] %vm2592, %v2581
    %2594 = vst.msk [vmem:[#allocation2 + $0x8] sm:$0xf] %vm2592, %v2583
    %2595 = vst.msk [vmem:[#allocation2 + $0x10] sm:$0xf] %vm2592, %v2585
    %2596 = vst.msk [vmem:[#allocation2 + $0x18] sm:$0xf] %vm2592, %v2587
    %2597 = vrot.lane.b32.xlu0 %v309, 16
    %v2598 = vpop.permute.xlu0 %2597
    %2599 = vrot.lane.b32.xlu0 %v510, 16
    %v2600 = vpop.permute.xlu0 %2599
    %v2602 = vsel %vm715, %v2598, 0
    %v2605 = vsel %vm715, %v2600, 0
    %2607 = vmatprep.subr.bf16.mxu0 0
    %2608 = vmatpush1.bf16.xpose.msra.mxu0 0
    %2609 = vmatprep.subr.bf16.mxu0 0
    %2610 = vmatpush1.bf16.xpose.msra.mxu0 0
    %2611 = vmatprep.subr.bf16.mxu0 0
    %2612 = vmatpush1.bf16.xpose.msra.mxu0 0
    %2613 = vmatprep.subr.bf16.mxu0 0
    %2614 = vmatpush1.bf16.xpose.msra.mxu0 0
    %2615 = vmatprep.subr.bf16.mxu0 0
    %2616 = vmatpush1.bf16.xpose.msra.mxu0 0
    %2617 = vmatprep.subr.bf16.mxu0 0
    %2618 = vmatpush1.bf16.xpose.msra.mxu0 0
    %2619 = vmatprep.subr.bf16.mxu0 0
    %2620 = vmatpush1.bf16.xpose.msra.mxu0 0
    %2621 = vmatprep.subr.bf16.mxu0 0
    %2622 = vmatpush1.bf16.xpose.msra.mxu0 %v2605
    %2623 = vmatprep.subr.bf16.mxu0 0
    %2624 = vmatpush2.bf16.xpose.msra.mxu0 0
    %2625 = vmatprep.subr.bf16.mxu0 0
    %2626 = vmatpush2.bf16.xpose.msra.mxu0 0
    %2627 = vmatprep.subr.bf16.mxu0 0
    %2628 = vmatpush2.bf16.xpose.msra.mxu0 0
    %2629 = vmatprep.subr.bf16.mxu0 0
    %2630 = vmatpush2.bf16.xpose.msra.mxu0 0
    %2631 = vmatprep.subr.bf16.mxu0 0
    %2632 = vmatpush2.bf16.xpose.msra.mxu0 0
    %2633 = vmatprep.subr.bf16.mxu0 0
    %2634 = vmatpush2.bf16.xpose.msra.mxu0 0
    %2635 = vmatprep.subr.bf16.mxu0 0
    %2636 = vmatpush2.bf16.xpose.msra.mxu0 0
    %2637 = vmatprep.subr.bf16.mxu0 0
    %2638 = vmatpush2.bf16.xpose.msra.mxu0 0
    %2639 = vmatprep.mubr.bf16.mxu0 0
    %2640 = vmatmul.mubr.bf16.gmra.mxu0 %v2602
    %v2641 = vpop.f32.mrf.mxu0
    %v2642 = vadd.f32 0.0, %v2641
    %v2643 = vpop.f32.mrf.mxu0
    %v2644 = vpop.f32.mrf.mxu0
    %v2645 = vadd.f32 0.0, %v2644
    %v2646 = vpop.f32.mrf.mxu0
    %2647 = vdwg.mxu0
    %2648 = vrot.lane.b32.xlu0 %v311, 16
    %v2649 = vpop.permute.xlu0 %2648
    %2650 = vrot.lane.b32.xlu0 %v512, 16
    %v2651 = vpop.permute.xlu0 %2650
    %v2653 = vsel %vm715, %v2649, 0
    %v2656 = vsel %vm715, %v2651, 0
    %2658 = vmatprep.subr.bf16.mxu0 0
    %2659 = vmatpush1.bf16.xpose.msra.mxu0 0
    %2660 = vmatprep.subr.bf16.mxu0 0
    %2661 = vmatpush1.bf16.xpose.msra.mxu0 0
    %2662 = vmatprep.subr.bf16.mxu0 0
    %2663 = vmatpush1.bf16.xpose.msra.mxu0 0
    %2664 = vmatprep.subr.bf16.mxu0 0
    %2665 = vmatpush1.bf16.xpose.msra.mxu0 0
    %2666 = vmatprep.subr.bf16.mxu0 0
    %2667 = vmatpush1.bf16.xpose.msra.mxu0 0
    %2668 = vmatprep.subr.bf16.mxu0 0
    %2669 = vmatpush1.bf16.xpose.msra.mxu0 0
    %2670 = vmatprep.subr.bf16.mxu0 0
    %2671 = vmatpush1.bf16.xpose.msra.mxu0 0
    %2672 = vmatprep.subr.bf16.mxu0 0
    %2673 = vmatpush1.bf16.xpose.msra.mxu0 %v2656
    %2674 = vmatprep.subr.bf16.mxu0 0
    %2675 = vmatpush2.bf16.xpose.msra.mxu0 0
    %2676 = vmatprep.subr.bf16.mxu0 0
    %2677 = vmatpush2.bf16.xpose.msra.mxu0 0
    %2678 = vmatprep.subr.bf16.mxu0 0
    %2679 = vmatpush2.bf16.xpose.msra.mxu0 0
    %2680 = vmatprep.subr.bf16.mxu0 0
    %2681 = vmatpush2.bf16.xpose.msra.mxu0 0
    %2682 = vmatprep.subr.bf16.mxu0 0
    %2683 = vmatpush2.bf16.xpose.msra.mxu0 0
    %2684 = vmatprep.subr.bf16.mxu0 0
    %2685 = vmatpush2.bf16.xpose.msra.mxu0 0
    %2686 = vmatprep.subr.bf16.mxu0 0
    %2687 = vmatpush2.bf16.xpose.msra.mxu0 0
    %2688 = vmatprep.subr.bf16.mxu0 0
    %2689 = vmatpush2.bf16.xpose.msra.mxu0 0
    %2690 = vmatprep.mubr.bf16.mxu0 0
    %2691 = vmatmul.mubr.bf16.gmra.mxu0 %v2653
    %v2692 = vpop.f32.mrf.mxu0
    %v2693 = vadd.f32 0.0, %v2692
    %v2694 = vpop.f32.mrf.mxu0
    %v2695 = vpop.f32.mrf.mxu0
    %v2696 = vadd.f32 0.0, %v2695
    %v2697 = vpop.f32.mrf.mxu0
    %2698 = vdwg.mxu0
    %v2699 = vsel %vm715, %v2642, -inf
    %2700 = vmax.xlane.f32.xlu0 %v2699
    %v2701 = vpop.xlane.xlu0 %2700
    %v2702 = vsel %vm715, %v2645, -inf
    %2703 = vmax.xlane.f32.xlu0 %v2702
    %v2704 = vpop.xlane.xlu0 %2703
    %v2705 = vsel %vm715, %v2693, -inf
    %2706 = vmax.xlane.f32.xlu0 %v2705
    %v2707 = vpop.xlane.xlu0 %2706
    %v2708 = vsel %vm715, %v2696, -inf
    %2709 = vmax.xlane.f32.xlu0 %v2708
    %v2710 = vpop.xlane.xlu0 %2709
    %v2711 = vsub.f32 %v2642, %v2701
    %v2712 = vsub.f32 %v2645, %v2704
    %v2713 = vsub.f32 %v2693, %v2707
    %v2714 = vsub.f32 %v2696, %v2710
    %v2715 = vmul.f32 %v2711, 1.442695
    %v2716 = vpow.pop %v2715
    %v2717 = vmul.f32 %v2712, 1.442695
    %v2718 = vpow.pop %v2717
    %v2719 = vmul.f32 %v2713, 1.442695
    %v2720 = vpow.pop %v2719
    %v2721 = vmul.f32 %v2714, 1.442695
    %v2722 = vpow.pop %v2721
    %v2723 = vsel %vm715, %v2716, 0.0
    %2724 = vadd.xlane.f32.xlu0 %v2723
    %v2725 = vpop.xlane.xlu0 %2724
    %v2726 = vsel %vm715, %v2718, 0.0
    %2727 = vadd.xlane.f32.xlu0 %v2726
    %v2728 = vpop.xlane.xlu0 %2727
    %v2729 = vsel %vm715, %v2720, 0.0
    %2730 = vadd.xlane.f32.xlu0 %v2729
    %v2731 = vpop.xlane.xlu0 %2730
    %v2732 = vsel %vm715, %v2722, 0.0
    %2733 = vadd.xlane.f32.xlu0 %v2732
    %v2734 = vpop.xlane.xlu0 %2733
    %v2735 = vrcp.pop %v2725
    %v2736 = vrcp.pop %v2728
    %v2737 = vrcp.pop %v2731
    %v2738 = vrcp.pop %v2734
    %v2739 = vmul.f32 %v2716, %v2735
    %v2740 = vmul.f32 %v2718, %v2736
    %v2741 = vmul.f32 %v2720, %v2737
    %v2742 = vmul.f32 %v2722, %v2738
    %v2743 = vpack.c.bf16 %v2740, %v2739
    %v2744 = vpack.c.bf16 %v2742, %v2741
    %2745 = vrot.lane.b32.xlu0 %v711, 16
    %v2746 = vpop.permute.xlu0 %2745
    %v2749 = vsel %vm715, %v2743, 0
    %2751 = vmatprep.subr.bf16.mxu0 0
    %2752 = vmatpush1.bf16.msra.mxu0 0
    %2753 = vmatprep.subr.bf16.mxu0 0
    %2754 = vmatpush1.bf16.msra.mxu0 0
    %2755 = vmatprep.subr.bf16.mxu0 0
    %2756 = vmatpush1.bf16.msra.mxu0 0
    %2757 = vmatprep.subr.bf16.mxu0 0
    %2758 = vmatpush1.bf16.msra.mxu0 0
    %2759 = vmatprep.subr.bf16.mxu0 0
    %2760 = vmatpush1.bf16.msra.mxu0 0
    %2761 = vmatprep.subr.bf16.mxu0 0
    %2762 = vmatpush1.bf16.msra.mxu0 0
    %2763 = vmatprep.subr.bf16.mxu0 0
    %2764 = vmatpush1.bf16.msra.mxu0 0
    %2765 = vmatprep.subr.bf16.mxu0 0
    %2766 = vmatpush1.bf16.msra.mxu0 %v2746
    %2767 = vmatprep.subr.bf16.mxu0 0
    %2768 = vmatpush2.bf16.msra.mxu0 0
    %2769 = vmatprep.subr.bf16.mxu0 0
    %2770 = vmatpush2.bf16.msra.mxu0 0
    %2771 = vmatprep.subr.bf16.mxu0 0
    %2772 = vmatpush2.bf16.msra.mxu0 0
    %2773 = vmatprep.subr.bf16.mxu0 0
    %2774 = vmatpush2.bf16.msra.mxu0 0
    %2775 = vmatprep.subr.bf16.mxu0 0
    %2776 = vmatpush2.bf16.msra.mxu0 0
    %2777 = vmatprep.subr.bf16.mxu0 0
    %2778 = vmatpush2.bf16.msra.mxu0 0
    %2779 = vmatprep.subr.bf16.mxu0 0
    %2780 = vmatpush2.bf16.msra.mxu0 0
    %2781 = vmatprep.subr.bf16.mxu0 0
    %2782 = vmatpush2.bf16.msra.mxu0 0
    %2783 = vmatprep.mubr.bf16.mxu0 0
    %2784 = vmatmul.mubr.bf16.gmra.mxu0 %v2749
    %v2785 = vpop.f32.mrf.mxu0
    %v2786 = vadd.f32 0.0, %v2785
    %v2787 = vpop.f32.mrf.mxu0
    %v2788 = vpop.f32.mrf.mxu0
    %v2789 = vadd.f32 0.0, %v2788
    %v2790 = vpop.f32.mrf.mxu0
    %2791 = vdwg.mxu0
    %2792 = vrot.lane.b32.xlu0 %v713, 16
    %v2793 = vpop.permute.xlu0 %2792
    %v2796 = vsel %vm715, %v2744, 0
    %2798 = vmatprep.subr.bf16.mxu0 0
    %2799 = vmatpush1.bf16.msra.mxu0 0
    %2800 = vmatprep.subr.bf16.mxu0 0
    %2801 = vmatpush1.bf16.msra.mxu0 0
    %2802 = vmatprep.subr.bf16.mxu0 0
    %2803 = vmatpush1.bf16.msra.mxu0 0
    %2804 = vmatprep.subr.bf16.mxu0 0
    %2805 = vmatpush1.bf16.msra.mxu0 0
    %2806 = vmatprep.subr.bf16.mxu0 0
    %2807 = vmatpush1.bf16.msra.mxu0 0
    %2808 = vmatprep.subr.bf16.mxu0 0
    %2809 = vmatpush1.bf16.msra.mxu0 0
    %2810 = vmatprep.subr.bf16.mxu0 0
    %2811 = vmatpush1.bf16.msra.mxu0 0
    %2812 = vmatprep.subr.bf16.mxu0 0
    %2813 = vmatpush1.bf16.msra.mxu0 %v2793
    %2814 = vmatprep.subr.bf16.mxu0 0
    %2815 = vmatpush2.bf16.msra.mxu0 0
    %2816 = vmatprep.subr.bf16.mxu0 0
    %2817 = vmatpush2.bf16.msra.mxu0 0
    %2818 = vmatprep.subr.bf16.mxu0 0
    %2819 = vmatpush2.bf16.msra.mxu0 0
    %2820 = vmatprep.subr.bf16.mxu0 0
    %2821 = vmatpush2.bf16.msra.mxu0 0
    %2822 = vmatprep.subr.bf16.mxu0 0
    %2823 = vmatpush2.bf16.msra.mxu0 0
    %2824 = vmatprep.subr.bf16.mxu0 0
    %2825 = vmatpush2.bf16.msra.mxu0 0
    %2826 = vmatprep.subr.bf16.mxu0 0
    %2827 = vmatpush2.bf16.msra.mxu0 0
    %2828 = vmatprep.subr.bf16.mxu0 0
    %2829 = vmatpush2.bf16.msra.mxu0 0
    %2830 = vmatprep.mubr.bf16.mxu0 0
    %2831 = vmatmul.mubr.bf16.gmra.mxu0 %v2796
    %v2832 = vpop.f32.mrf.mxu0
    %v2833 = vadd.f32 0.0, %v2832
    %v2834 = vpop.f32.mrf.mxu0
    %v2835 = vpop.f32.mrf.mxu0
    %v2836 = vadd.f32 0.0, %v2835
    %v2837 = vpop.f32.mrf.mxu0
    %2838 = vdwg.mxu0
    %v2839 = vpack.c.bf16 %v2789, %v2786
    %v2840 = vpack.c.bf16 %v2836, %v2833
    %v2843 = vunpack.c.l.b16 %v2839
    %v2844 = vunpack.c.h.b16 %v2839
    %v2845 = vunpack.c.l.b16 %v2840
    %v2846 = vunpack.c.h.b16 %v2840
    %v2847 = vpack.c.b16 %v2843, %v2843
    %v2848 = vpack.c.b16 %v2844, %v2844
    %v2849 = vpack.c.b16 %v2845, %v2845
    %v2850 = vpack.c.b16 %v2846, %v2846
    %2851 = vrot.lane.b32.xlu0 %v2847, 112
    %v2852 = vpop.permute.xlu0 %2851
    %2853 = vrot.lane.b32.xlu0 %v2848, 112
    %v2854 = vpop.permute.xlu0 %2853
    %2855 = vrot.lane.b32.xlu0 %v2849, 112
    %v2856 = vpop.permute.xlu0 %2855
    %2857 = vrot.lane.b32.xlu0 %v2850, 112
    %v2858 = vpop.permute.xlu0 %2857
    %vm2863 = vcmask 1044352
    %2864 = vst.msk [vmem:[#allocation2] sm:$0xf] %vm2863, %v2852
    %2865 = vst.msk [vmem:[#allocation2 + $0x8] sm:$0xf] %vm2863, %v2854
    %2866 = vst.msk [vmem:[#allocation2 + $0x10] sm:$0xf] %vm2863, %v2856
    %2867 = vst.msk [vmem:[#allocation2 + $0x18] sm:$0xf] %vm2863, %v2858
    %v2869 = vsel %vm715, %v310, 0
    %v2872 = vsel %vm715, %v511, 0
    %2874 = vmatprep.subr.bf16.mxu0 0
    %2875 = vmatpush1.bf16.xpose.msra.mxu0 0
    %2876 = vmatprep.subr.bf16.mxu0 0
    %2877 = vmatpush1.bf16.xpose.msra.mxu0 0
    %2878 = vmatprep.subr.bf16.mxu0 0
    %2879 = vmatpush1.bf16.xpose.msra.mxu0 0
    %2880 = vmatprep.subr.bf16.mxu0 0
    %2881 = vmatpush1.bf16.xpose.msra.mxu0 0
    %2882 = vmatprep.subr.bf16.mxu0 0
    %2883 = vmatpush1.bf16.xpose.msra.mxu0 0
    %2884 = vmatprep.subr.bf16.mxu0 0
    %2885 = vmatpush1.bf16.xpose.msra.mxu0 0
    %2886 = vmatprep.subr.bf16.mxu0 0
    %2887 = vmatpush1.bf16.xpose.msra.mxu0 0
    %2888 = vmatprep.subr.bf16.mxu0 0
    %2889 = vmatpush1.bf16.xpose.msra.mxu0 %v2872
    %2890 = vmatprep.subr.bf16.mxu0 0
    %2891 = vmatpush2.bf16.xpose.msra.mxu0 0
    %2892 = vmatprep.subr.bf16.mxu0 0
    %2893 = vmatpush2.bf16.xpose.msra.mxu0 0
    %2894 = vmatprep.subr.bf16.mxu0 0
    %2895 = vmatpush2.bf16.xpose.msra.mxu0 0
    %2896 = vmatprep.subr.bf16.mxu0 0
    %2897 = vmatpush2.bf16.xpose.msra.mxu0 0
    %2898 = vmatprep.subr.bf16.mxu0 0
    %2899 = vmatpush2.bf16.xpose.msra.mxu0 0
    %2900 = vmatprep.subr.bf16.mxu0 0
    %2901 = vmatpush2.bf16.xpose.msra.mxu0 0
    %2902 = vmatprep.subr.bf16.mxu0 0
    %2903 = vmatpush2.bf16.xpose.msra.mxu0 0
    %2904 = vmatprep.subr.bf16.mxu0 0
    %2905 = vmatpush2.bf16.xpose.msra.mxu0 0
    %2906 = vmatprep.mubr.bf16.mxu0 0
    %2907 = vmatmul.mubr.bf16.gmra.mxu0 %v2869
    %v2908 = vpop.f32.mrf.mxu0
    %v2909 = vadd.f32 0.0, %v2908
    %v2910 = vpop.f32.mrf.mxu0
    %v2911 = vpop.f32.mrf.mxu0
    %v2912 = vadd.f32 0.0, %v2911
    %v2913 = vpop.f32.mrf.mxu0
    %2914 = vdwg.mxu0
    %v2916 = vsel %vm715, %v312, 0
    %v2919 = vsel %vm715, %v513, 0
    %2921 = vmatprep.subr.bf16.mxu0 0
    %2922 = vmatpush1.bf16.xpose.msra.mxu0 0
    %2923 = vmatprep.subr.bf16.mxu0 0
    %2924 = vmatpush1.bf16.xpose.msra.mxu0 0
    %2925 = vmatprep.subr.bf16.mxu0 0
    %2926 = vmatpush1.bf16.xpose.msra.mxu0 0
    %2927 = vmatprep.subr.bf16.mxu0 0
    %2928 = vmatpush1.bf16.xpose.msra.mxu0 0
    %2929 = vmatprep.subr.bf16.mxu0 0
    %2930 = vmatpush1.bf16.xpose.msra.mxu0 0
    %2931 = vmatprep.subr.bf16.mxu0 0
    %2932 = vmatpush1.bf16.xpose.msra.mxu0 0
    %2933 = vmatprep.subr.bf16.mxu0 0
    %2934 = vmatpush1.bf16.xpose.msra.mxu0 0
    %2935 = vmatprep.subr.bf16.mxu0 0
    %2936 = vmatpush1.bf16.xpose.msra.mxu0 %v2919
    %2937 = vmatprep.subr.bf16.mxu0 0
    %2938 = vmatpush2.bf16.xpose.msra.mxu0 0
    %2939 = vmatprep.subr.bf16.mxu0 0
    %2940 = vmatpush2.bf16.xpose.msra.mxu0 0
    %2941 = vmatprep.subr.bf16.mxu0 0
    %2942 = vmatpush2.bf16.xpose.msra.mxu0 0
    %2943 = vmatprep.subr.bf16.mxu0 0
    %2944 = vmatpush2.bf16.xpose.msra.mxu0 0
    %2945 = vmatprep.subr.bf16.mxu0 0
    %2946 = vmatpush2.bf16.xpose.msra.mxu0 0
    %2947 = vmatprep.subr.bf16.mxu0 0
    %2948 = vmatpush2.bf16.xpose.msra.mxu0 0
    %2949 = vmatprep.subr.bf16.mxu0 0
    %2950 = vmatpush2.bf16.xpose.msra.mxu0 0
    %2951 = vmatprep.subr.bf16.mxu0 0
    %2952 = vmatpush2.bf16.xpose.msra.mxu0 0
    %2953 = vmatprep.mubr.bf16.mxu0 0
    %2954 = vmatmul.mubr.bf16.gmra.mxu0 %v2916
    %v2955 = vpop.f32.mrf.mxu0
    %v2956 = vadd.f32 0.0, %v2955
    %v2957 = vpop.f32.mrf.mxu0
    %v2958 = vpop.f32.mrf.mxu0
    %v2959 = vadd.f32 0.0, %v2958
    %v2960 = vpop.f32.mrf.mxu0
    %2961 = vdwg.mxu0
    %v2962 = vsel %vm715, %v2909, -inf
    %2963 = vmax.xlane.f32.xlu0 %v2962
    %v2964 = vpop.xlane.xlu0 %2963
    %v2965 = vsel %vm715, %v2912, -inf
    %2966 = vmax.xlane.f32.xlu0 %v2965
    %v2967 = vpop.xlane.xlu0 %2966
    %v2968 = vsel %vm715, %v2956, -inf
    %2969 = vmax.xlane.f32.xlu0 %v2968
    %v2970 = vpop.xlane.xlu0 %2969
    %v2971 = vsel %vm715, %v2959, -inf
    %2972 = vmax.xlane.f32.xlu0 %v2971
    %v2973 = vpop.xlane.xlu0 %2972
    %v2974 = vsub.f32 %v2909, %v2964
    %v2975 = vsub.f32 %v2912, %v2967
    %v2976 = vsub.f32 %v2956, %v2970
    %v2977 = vsub.f32 %v2959, %v2973
    %v2978 = vmul.f32 %v2974, 1.442695
    %v2979 = vpow.pop %v2978
    %v2980 = vmul.f32 %v2975, 1.442695
    %v2981 = vpow.pop %v2980
    %v2982 = vmul.f32 %v2976, 1.442695
    %v2983 = vpow.pop %v2982
    %v2984 = vmul.f32 %v2977, 1.442695
    %v2985 = vpow.pop %v2984
    %v2986 = vsel %vm715, %v2979, 0.0
    %2987 = vadd.xlane.f32.xlu0 %v2986
    %v2988 = vpop.xlane.xlu0 %2987
    %v2989 = vsel %vm715, %v2981, 0.0
    %2990 = vadd.xlane.f32.xlu0 %v2989
    %v2991 = vpop.xlane.xlu0 %2990
    %v2992 = vsel %vm715, %v2983, 0.0
    %2993 = vadd.xlane.f32.xlu0 %v2992
    %v2994 = vpop.xlane.xlu0 %2993
    %v2995 = vsel %vm715, %v2985, 0.0
    %2996 = vadd.xlane.f32.xlu0 %v2995
    %v2997 = vpop.xlane.xlu0 %2996
    %v2998 = vrcp.pop %v2988
    %v2999 = vrcp.pop %v2991
    %v3000 = vrcp.pop %v2994
    %v3001 = vrcp.pop %v2997
    %v3002 = vmul.f32 %v2979, %v2998
    %v3003 = vmul.f32 %v2981, %v2999
    %v3004 = vmul.f32 %v2983, %v3000
    %v3005 = vmul.f32 %v2985, %v3001
    %v3006 = vpack.c.bf16 %v3003, %v3002
    %v3007 = vpack.c.bf16 %v3005, %v3004
    %v3009 = vsel %vm715, %v3006, 0
    %3011 = vmatprep.subr.bf16.mxu0 0
    %3012 = vmatpush1.bf16.msra.mxu0 0
    %3013 = vmatprep.subr.bf16.mxu0 0
    %3014 = vmatpush1.bf16.msra.mxu0 0
    %3015 = vmatprep.subr.bf16.mxu0 0
    %3016 = vmatpush1.bf16.msra.mxu0 0
    %3017 = vmatprep.subr.bf16.mxu0 0
    %3018 = vmatpush1.bf16.msra.mxu0 0
    %3019 = vmatprep.subr.bf16.mxu0 0
    %3020 = vmatpush1.bf16.msra.mxu0 0
    %3021 = vmatprep.subr.bf16.mxu0 0
    %3022 = vmatpush1.bf16.msra.mxu0 0
    %3023 = vmatprep.subr.bf16.mxu0 0
    %3024 = vmatpush1.bf16.msra.mxu0 0
    %3025 = vmatprep.subr.bf16.mxu0 0
    %3026 = vmatpush1.bf16.msra.mxu0 %v712
    %3027 = vmatprep.subr.bf16.mxu0 0
    %3028 = vmatpush2.bf16.msra.mxu0 0
    %3029 = vmatprep.subr.bf16.mxu0 0
    %3030 = vmatpush2.bf16.msra.mxu0 0
    %3031 = vmatprep.subr.bf16.mxu0 0
    %3032 = vmatpush2.bf16.msra.mxu0 0
    %3033 = vmatprep.subr.bf16.mxu0 0
    %3034 = vmatpush2.bf16.msra.mxu0 0
    %3035 = vmatprep.subr.bf16.mxu0 0
    %3036 = vmatpush2.bf16.msra.mxu0 0
    %3037 = vmatprep.subr.bf16.mxu0 0
    %3038 = vmatpush2.bf16.msra.mxu0 0
    %3039 = vmatprep.subr.bf16.mxu0 0
    %3040 = vmatpush2.bf16.msra.mxu0 0
    %3041 = vmatprep.subr.bf16.mxu0 0
    %3042 = vmatpush2.bf16.msra.mxu0 0
    %3043 = vmatprep.mubr.bf16.mxu0 0
    %3044 = vmatmul.mubr.bf16.gmra.mxu0 %v3009
    %v3045 = vpop.f32.mrf.mxu0
    %v3046 = vadd.f32 0.0, %v3045
    %v3047 = vpop.f32.mrf.mxu0
    %v3048 = vpop.f32.mrf.mxu0
    %v3049 = vadd.f32 0.0, %v3048
    %v3050 = vpop.f32.mrf.mxu0
    %3051 = vdwg.mxu0
    %v3053 = vsel %vm715, %v3007, 0
    %3055 = vmatprep.subr.bf16.mxu0 0
    %3056 = vmatpush1.bf16.msra.mxu0 0
    %3057 = vmatprep.subr.bf16.mxu0 0
    %3058 = vmatpush1.bf16.msra.mxu0 0
    %3059 = vmatprep.subr.bf16.mxu0 0
    %3060 = vmatpush1.bf16.msra.mxu0 0
    %3061 = vmatprep.subr.bf16.mxu0 0
    %3062 = vmatpush1.bf16.msra.mxu0 0
    %3063 = vmatprep.subr.bf16.mxu0 0
    %3064 = vmatpush1.bf16.msra.mxu0 0
    %3065 = vmatprep.subr.bf16.mxu0 0
    %3066 = vmatpush1.bf16.msra.mxu0 0
    %3067 = vmatprep.subr.bf16.mxu0 0
    %3068 = vmatpush1.bf16.msra.mxu0 0
    %3069 = vmatprep.subr.bf16.mxu0 0
    %3070 = vmatpush1.bf16.msra.mxu0 %v714
    %3071 = vmatprep.subr.bf16.mxu0 0
    %3072 = vmatpush2.bf16.msra.mxu0 0
    %3073 = vmatprep.subr.bf16.mxu0 0
    %3074 = vmatpush2.bf16.msra.mxu0 0
    %3075 = vmatprep.subr.bf16.mxu0 0
    %3076 = vmatpush2.bf16.msra.mxu0 0
    %3077 = vmatprep.subr.bf16.mxu0 0
    %3078 = vmatpush2.bf16.msra.mxu0 0
    %3079 = vmatprep.subr.bf16.mxu0 0
    %3080 = vmatpush2.bf16.msra.mxu0 0
    %3081 = vmatprep.subr.bf16.mxu0 0
    %3082 = vmatpush2.bf16.msra.mxu0 0
    %3083 = vmatprep.subr.bf16.mxu0 0
    %3084 = vmatpush2.bf16.msra.mxu0 0
    %3085 = vmatprep.subr.bf16.mxu0 0
    %3086 = vmatpush2.bf16.msra.mxu0 0
    %3087 = vmatprep.mubr.bf16.mxu0 0
    %3088 = vmatmul.mubr.bf16.gmra.mxu0 %v3053
    %v3089 = vpop.f32.mrf.mxu0
    %v3090 = vadd.f32 0.0, %v3089
    %v3091 = vpop.f32.mrf.mxu0
    %v3092 = vpop.f32.mrf.mxu0
    %v3093 = vadd.f32 0.0, %v3092
    %v3094 = vpop.f32.mrf.mxu0
    %3095 = vdwg.mxu0
    %v3096 = vpack.c.bf16 %v3049, %v3046
    %v3097 = vpack.c.bf16 %v3093, %v3090
    %v3100 = vunpack.c.l.b16 %v3096
    %v3101 = vunpack.c.h.b16 %v3096
    %v3102 = vunpack.c.l.b16 %v3097
    %v3103 = vunpack.c.h.b16 %v3097
    %v3104 = vpack.c.b16 %v3100, %v3100
    %v3105 = vpack.c.b16 %v3101, %v3101
    %v3106 = vpack.c.b16 %v3102, %v3102
    %v3107 = vpack.c.b16 %v3103, %v3103
    %3112 = vst.msk [vmem:[#allocation2 + $0x4] sm:$0xf] %vm960, %v3104
    %3113 = vst.msk [vmem:[#allocation2 + $0xc] sm:$0xf] %vm960, %v3105
    %3114 = vst.msk [vmem:[#allocation2 + $0x14] sm:$0xf] %vm960, %v3106
    %3115 = vst.msk [vmem:[#allocation2 + $0x1c] sm:$0xf] %vm960, %v3107
    %3117 = vrot.lane.b32.xlu0 %v310, 112
    %v3118 = vpop.permute.xlu0 %3117
    %3120 = vrot.lane.b32.xlu0 %v511, 112
    %v3121 = vpop.permute.xlu0 %3120
    %v3123 = vsel %vm715, %v3118, 0
    %v3126 = vsel %vm715, %v3121, 0
    %3128 = vmatprep.subr.bf16.mxu0 0
    %3129 = vmatpush1.bf16.xpose.msra.mxu0 0
    %3130 = vmatprep.subr.bf16.mxu0 0
    %3131 = vmatpush1.bf16.xpose.msra.mxu0 0
    %3132 = vmatprep.subr.bf16.mxu0 0
    %3133 = vmatpush1.bf16.xpose.msra.mxu0 0
    %3134 = vmatprep.subr.bf16.mxu0 0
    %3135 = vmatpush1.bf16.xpose.msra.mxu0 0
    %3136 = vmatprep.subr.bf16.mxu0 0
    %3137 = vmatpush1.bf16.xpose.msra.mxu0 0
    %3138 = vmatprep.subr.bf16.mxu0 0
    %3139 = vmatpush1.bf16.xpose.msra.mxu0 0
    %3140 = vmatprep.subr.bf16.mxu0 0
    %3141 = vmatpush1.bf16.xpose.msra.mxu0 0
    %3142 = vmatprep.subr.bf16.mxu0 0
    %3143 = vmatpush1.bf16.xpose.msra.mxu0 %v3126
    %3144 = vmatprep.subr.bf16.mxu0 0
    %3145 = vmatpush2.bf16.xpose.msra.mxu0 0
    %3146 = vmatprep.subr.bf16.mxu0 0
    %3147 = vmatpush2.bf16.xpose.msra.mxu0 0
    %3148 = vmatprep.subr.bf16.mxu0 0
    %3149 = vmatpush2.bf16.xpose.msra.mxu0 0
    %3150 = vmatprep.subr.bf16.mxu0 0
    %3151 = vmatpush2.bf16.xpose.msra.mxu0 0
    %3152 = vmatprep.subr.bf16.mxu0 0
    %3153 = vmatpush2.bf16.xpose.msra.mxu0 0
    %3154 = vmatprep.subr.bf16.mxu0 0
    %3155 = vmatpush2.bf16.xpose.msra.mxu0 0
    %3156 = vmatprep.subr.bf16.mxu0 0
    %3157 = vmatpush2.bf16.xpose.msra.mxu0 0
    %3158 = vmatprep.subr.bf16.mxu0 0
    %3159 = vmatpush2.bf16.xpose.msra.mxu0 0
    %3160 = vmatprep.mubr.bf16.mxu0 0
    %3161 = vmatmul.mubr.bf16.gmra.mxu0 %v3123
    %v3162 = vpop.f32.mrf.mxu0
    %v3163 = vadd.f32 0.0, %v3162
    %v3164 = vpop.f32.mrf.mxu0
    %v3165 = vpop.f32.mrf.mxu0
    %v3166 = vadd.f32 0.0, %v3165
    %v3167 = vpop.f32.mrf.mxu0
    %3168 = vdwg.mxu0
    %3170 = vrot.lane.b32.xlu0 %v312, 112
    %v3171 = vpop.permute.xlu0 %3170
    %3173 = vrot.lane.b32.xlu0 %v513, 112
    %v3174 = vpop.permute.xlu0 %3173
    %v3176 = vsel %vm715, %v3171, 0
    %v3179 = vsel %vm715, %v3174, 0
    %3181 = vmatprep.subr.bf16.mxu0 0
    %3182 = vmatpush1.bf16.xpose.msra.mxu0 0
    %3183 = vmatprep.subr.bf16.mxu0 0
    %3184 = vmatpush1.bf16.xpose.msra.mxu0 0
    %3185 = vmatprep.subr.bf16.mxu0 0
    %3186 = vmatpush1.bf16.xpose.msra.mxu0 0
    %3187 = vmatprep.subr.bf16.mxu0 0
    %3188 = vmatpush1.bf16.xpose.msra.mxu0 0
    %3189 = vmatprep.subr.bf16.mxu0 0
    %3190 = vmatpush1.bf16.xpose.msra.mxu0 0
    %3191 = vmatprep.subr.bf16.mxu0 0
    %3192 = vmatpush1.bf16.xpose.msra.mxu0 0
    %3193 = vmatprep.subr.bf16.mxu0 0
    %3194 = vmatpush1.bf16.xpose.msra.mxu0 0
    %3195 = vmatprep.subr.bf16.mxu0 0
    %3196 = vmatpush1.bf16.xpose.msra.mxu0 %v3179
    %3197 = vmatprep.subr.bf16.mxu0 0
    %3198 = vmatpush2.bf16.xpose.msra.mxu0 0
    %3199 = vmatprep.subr.bf16.mxu0 0
    %3200 = vmatpush2.bf16.xpose.msra.mxu0 0
    %3201 = vmatprep.subr.bf16.mxu0 0
    %3202 = vmatpush2.bf16.xpose.msra.mxu0 0
    %3203 = vmatprep.subr.bf16.mxu0 0
    %3204 = vmatpush2.bf16.xpose.msra.mxu0 0
    %3205 = vmatprep.subr.bf16.mxu0 0
    %3206 = vmatpush2.bf16.xpose.msra.mxu0 0
    %3207 = vmatprep.subr.bf16.mxu0 0
    %3208 = vmatpush2.bf16.xpose.msra.mxu0 0
    %3209 = vmatprep.subr.bf16.mxu0 0
    %3210 = vmatpush2.bf16.xpose.msra.mxu0 0
    %3211 = vmatprep.subr.bf16.mxu0 0
    %3212 = vmatpush2.bf16.xpose.msra.mxu0 0
    %3213 = vmatprep.mubr.bf16.mxu0 0
    %3214 = vmatmul.mubr.bf16.gmra.mxu0 %v3176
    %v3215 = vpop.f32.mrf.mxu0
    %v3216 = vadd.f32 0.0, %v3215
    %v3217 = vpop.f32.mrf.mxu0
    %v3218 = vpop.f32.mrf.mxu0
    %v3219 = vadd.f32 0.0, %v3218
    %v3220 = vpop.f32.mrf.mxu0
    %3221 = vdwg.mxu0
    %v3222 = vsel %vm715, %v3163, -inf
    %3223 = vmax.xlane.f32.xlu0 %v3222
    %v3224 = vpop.xlane.xlu0 %3223
    %v3225 = vsel %vm715, %v3166, -inf
    %3226 = vmax.xlane.f32.xlu0 %v3225
    %v3227 = vpop.xlane.xlu0 %3226
    %v3228 = vsel %vm715, %v3216, -inf
    %3229 = vmax.xlane.f32.xlu0 %v3228
    %v3230 = vpop.xlane.xlu0 %3229
    %v3231 = vsel %vm715, %v3219, -inf
    %3232 = vmax.xlane.f32.xlu0 %v3231
    %v3233 = vpop.xlane.xlu0 %3232
    %v3234 = vsub.f32 %v3163, %v3224
    %v3235 = vsub.f32 %v3166, %v3227
    %v3236 = vsub.f32 %v3216, %v3230
    %v3237 = vsub.f32 %v3219, %v3233
    %v3238 = vmul.f32 %v3234, 1.442695
    %v3239 = vpow.pop %v3238
    %v3240 = vmul.f32 %v3235, 1.442695
    %v3241 = vpow.pop %v3240
    %v3242 = vmul.f32 %v3236, 1.442695
    %v3243 = vpow.pop %v3242
    %v3244 = vmul.f32 %v3237, 1.442695
    %v3245 = vpow.pop %v3244
    %v3246 = vsel %vm715, %v3239, 0.0
    %3247 = vadd.xlane.f32.xlu0 %v3246
    %v3248 = vpop.xlane.xlu0 %3247
    %v3249 = vsel %vm715, %v3241, 0.0
    %3250 = vadd.xlane.f32.xlu0 %v3249
    %v3251 = vpop.xlane.xlu0 %3250
    %v3252 = vsel %vm715, %v3243, 0.0
    %3253 = vadd.xlane.f32.xlu0 %v3252
    %v3254 = vpop.xlane.xlu0 %3253
    %v3255 = vsel %vm715, %v3245, 0.0
    %3256 = vadd.xlane.f32.xlu0 %v3255
    %v3257 = vpop.xlane.xlu0 %3256
    %v3258 = vrcp.pop %v3248
    %v3259 = vrcp.pop %v3251
    %v3260 = vrcp.pop %v3254
    %v3261 = vrcp.pop %v3257
    %v3262 = vmul.f32 %v3239, %v3258
    %v3263 = vmul.f32 %v3241, %v3259
    %v3264 = vmul.f32 %v3243, %v3260
    %v3265 = vmul.f32 %v3245, %v3261
    %v3266 = vpack.c.bf16 %v3263, %v3262
    %v3267 = vpack.c.bf16 %v3265, %v3264
    %3269 = vrot.lane.b32.xlu0 %v712, 112
    %v3270 = vpop.permute.xlu0 %3269
    %v3273 = vsel %vm715, %v3266, 0
    %3275 = vmatprep.subr.bf16.mxu0 0
    %3276 = vmatpush1.bf16.msra.mxu0 0
    %3277 = vmatprep.subr.bf16.mxu0 0
    %3278 = vmatpush1.bf16.msra.mxu0 0
    %3279 = vmatprep.subr.bf16.mxu0 0
    %3280 = vmatpush1.bf16.msra.mxu0 0
    %3281 = vmatprep.subr.bf16.mxu0 0
    %3282 = vmatpush1.bf16.msra.mxu0 0
    %3283 = vmatprep.subr.bf16.mxu0 0
    %3284 = vmatpush1.bf16.msra.mxu0 0
    %3285 = vmatprep.subr.bf16.mxu0 0
    %3286 = vmatpush1.bf16.msra.mxu0 0
    %3287 = vmatprep.subr.bf16.mxu0 0
    %3288 = vmatpush1.bf16.msra.mxu0 0
    %3289 = vmatprep.subr.bf16.mxu0 0
    %3290 = vmatpush1.bf16.msra.mxu0 %v3270
    %3291 = vmatprep.subr.bf16.mxu0 0
    %3292 = vmatpush2.bf16.msra.mxu0 0
    %3293 = vmatprep.subr.bf16.mxu0 0
    %3294 = vmatpush2.bf16.msra.mxu0 0
    %3295 = vmatprep.subr.bf16.mxu0 0
    %3296 = vmatpush2.bf16.msra.mxu0 0
    %3297 = vmatprep.subr.bf16.mxu0 0
    %3298 = vmatpush2.bf16.msra.mxu0 0
    %3299 = vmatprep.subr.bf16.mxu0 0
    %3300 = vmatpush2.bf16.msra.mxu0 0
    %3301 = vmatprep.subr.bf16.mxu0 0
    %3302 = vmatpush2.bf16.msra.mxu0 0
    %3303 = vmatprep.subr.bf16.mxu0 0
    %3304 = vmatpush2.bf16.msra.mxu0 0
    %3305 = vmatprep.subr.bf16.mxu0 0
    %3306 = vmatpush2.bf16.msra.mxu0 0
    %3307 = vmatprep.mubr.bf16.mxu0 0
    %3308 = vmatmul.mubr.bf16.gmra.mxu0 %v3273
    %v3309 = vpop.f32.mrf.mxu0
    %v3310 = vadd.f32 0.0, %v3309
    %v3311 = vpop.f32.mrf.mxu0
    %v3312 = vpop.f32.mrf.mxu0
    %v3313 = vadd.f32 0.0, %v3312
    %v3314 = vpop.f32.mrf.mxu0
    %3315 = vdwg.mxu0
    %3317 = vrot.lane.b32.xlu0 %v714, 112
    %v3318 = vpop.permute.xlu0 %3317
    %v3321 = vsel %vm715, %v3267, 0
    %3323 = vmatprep.subr.bf16.mxu0 0
    %3324 = vmatpush1.bf16.msra.mxu0 0
    %3325 = vmatprep.subr.bf16.mxu0 0
    %3326 = vmatpush1.bf16.msra.mxu0 0
    %3327 = vmatprep.subr.bf16.mxu0 0
    %3328 = vmatpush1.bf16.msra.mxu0 0
    %3329 = vmatprep.subr.bf16.mxu0 0
    %3330 = vmatpush1.bf16.msra.mxu0 0
    %3331 = vmatprep.subr.bf16.mxu0 0
    %3332 = vmatpush1.bf16.msra.mxu0 0
    %3333 = vmatprep.subr.bf16.mxu0 0
    %3334 = vmatpush1.bf16.msra.mxu0 0
    %3335 = vmatprep.subr.bf16.mxu0 0
    %3336 = vmatpush1.bf16.msra.mxu0 0
    %3337 = vmatprep.subr.bf16.mxu0 0
    %3338 = vmatpush1.bf16.msra.mxu0 %v3318
    %3339 = vmatprep.subr.bf16.mxu0 0
    %3340 = vmatpush2.bf16.msra.mxu0 0
    %3341 = vmatprep.subr.bf16.mxu0 0
    %3342 = vmatpush2.bf16.msra.mxu0 0
    %3343 = vmatprep.subr.bf16.mxu0 0
    %3344 = vmatpush2.bf16.msra.mxu0 0
    %3345 = vmatprep.subr.bf16.mxu0 0
    %3346 = vmatpush2.bf16.msra.mxu0 0
    %3347 = vmatprep.subr.bf16.mxu0 0
    %3348 = vmatpush2.bf16.msra.mxu0 0
    %3349 = vmatprep.subr.bf16.mxu0 0
    %3350 = vmatpush2.bf16.msra.mxu0 0
    %3351 = vmatprep.subr.bf16.mxu0 0
    %3352 = vmatpush2.bf16.msra.mxu0 0
    %3353 = vmatprep.subr.bf16.mxu0 0
    %3354 = vmatpush2.bf16.msra.mxu0 0
    %3355 = vmatprep.mubr.bf16.mxu0 0
    %3356 = vmatmul.mubr.bf16.gmra.mxu0 %v3321
    %v3357 = vpop.f32.mrf.mxu0
    %v3358 = vadd.f32 0.0, %v3357
    %v3359 = vpop.f32.mrf.mxu0
    %v3360 = vpop.f32.mrf.mxu0
    %v3361 = vadd.f32 0.0, %v3360
    %v3362 = vpop.f32.mrf.mxu0
    %3363 = vdwg.mxu0
    %v3364 = vpack.c.bf16 %v3313, %v3310
    %v3365 = vpack.c.bf16 %v3361, %v3358
    %v3368 = vunpack.c.l.b16 %v3364
    %v3369 = vunpack.c.h.b16 %v3364
    %v3370 = vunpack.c.l.b16 %v3365
    %v3371 = vunpack.c.h.b16 %v3365
    %v3372 = vpack.c.b16 %v3368, %v3368
    %v3373 = vpack.c.b16 %v3369, %v3369
    %v3374 = vpack.c.b16 %v3370, %v3370
    %v3375 = vpack.c.b16 %v3371, %v3371
    %3376 = vrot.lane.b32.xlu0 %v3372, 16
    %v3377 = vpop.permute.xlu0 %3376
    %3378 = vrot.lane.b32.xlu0 %v3373, 16
    %v3379 = vpop.permute.xlu0 %3378
    %3380 = vrot.lane.b32.xlu0 %v3374, 16
    %v3381 = vpop.permute.xlu0 %3380
    %3382 = vrot.lane.b32.xlu0 %v3375, 16
    %v3383 = vpop.permute.xlu0 %3382
    %3388 = vst.msk [vmem:[#allocation2 + $0x4] sm:$0xf] %vm1237, %v3377
    %3389 = vst.msk [vmem:[#allocation2 + $0xc] sm:$0xf] %vm1237, %v3379
    %3390 = vst.msk [vmem:[#allocation2 + $0x14] sm:$0xf] %vm1237, %v3381
    %3391 = vst.msk [vmem:[#allocation2 + $0x1c] sm:$0xf] %vm1237, %v3383
    %3392 = vrot.lane.b32.xlu0 %v310, 96
    %v3393 = vpop.permute.xlu0 %3392
    %3394 = vrot.lane.b32.xlu0 %v511, 96
    %v3395 = vpop.permute.xlu0 %3394
    %v3397 = vsel %vm715, %v3393, 0
    %v3400 = vsel %vm715, %v3395, 0
    %3402 = vmatprep.subr.bf16.mxu0 0
    %3403 = vmatpush1.bf16.xpose.msra.mxu0 0
    %3404 = vmatprep.subr.bf16.mxu0 0
    %3405 = vmatpush1.bf16.xpose.msra.mxu0 0
    %3406 = vmatprep.subr.bf16.mxu0 0
    %3407 = vmatpush1.bf16.xpose.msra.mxu0 0
    %3408 = vmatprep.subr.bf16.mxu0 0
    %3409 = vmatpush1.bf16.xpose.msra.mxu0 0
    %3410 = vmatprep.subr.bf16.mxu0 0
    %3411 = vmatpush1.bf16.xpose.msra.mxu0 0
    %3412 = vmatprep.subr.bf16.mxu0 0
    %3413 = vmatpush1.bf16.xpose.msra.mxu0 0
    %3414 = vmatprep.subr.bf16.mxu0 0
    %3415 = vmatpush1.bf16.xpose.msra.mxu0 0
    %3416 = vmatprep.subr.bf16.mxu0 0
    %3417 = vmatpush1.bf16.xpose.msra.mxu0 %v3400
    %3418 = vmatprep.subr.bf16.mxu0 0
    %3419 = vmatpush2.bf16.xpose.msra.mxu0 0
    %3420 = vmatprep.subr.bf16.mxu0 0
    %3421 = vmatpush2.bf16.xpose.msra.mxu0 0
    %3422 = vmatprep.subr.bf16.mxu0 0
    %3423 = vmatpush2.bf16.xpose.msra.mxu0 0
    %3424 = vmatprep.subr.bf16.mxu0 0
    %3425 = vmatpush2.bf16.xpose.msra.mxu0 0
    %3426 = vmatprep.subr.bf16.mxu0 0
    %3427 = vmatpush2.bf16.xpose.msra.mxu0 0
    %3428 = vmatprep.subr.bf16.mxu0 0
    %3429 = vmatpush2.bf16.xpose.msra.mxu0 0
    %3430 = vmatprep.subr.bf16.mxu0 0
    %3431 = vmatpush2.bf16.xpose.msra.mxu0 0
    %3432 = vmatprep.subr.bf16.mxu0 0
    %3433 = vmatpush2.bf16.xpose.msra.mxu0 0
    %3434 = vmatprep.mubr.bf16.mxu0 0
    %3435 = vmatmul.mubr.bf16.gmra.mxu0 %v3397
    %v3436 = vpop.f32.mrf.mxu0
    %v3437 = vadd.f32 0.0, %v3436
    %v3438 = vpop.f32.mrf.mxu0
    %v3439 = vpop.f32.mrf.mxu0
    %v3440 = vadd.f32 0.0, %v3439
    %v3441 = vpop.f32.mrf.mxu0
    %3442 = vdwg.mxu0
    %3443 = vrot.lane.b32.xlu0 %v312, 96
    %v3444 = vpop.permute.xlu0 %3443
    %3445 = vrot.lane.b32.xlu0 %v513, 96
    %v3446 = vpop.permute.xlu0 %3445
    %v3448 = vsel %vm715, %v3444, 0
    %v3451 = vsel %vm715, %v3446, 0
    %3453 = vmatprep.subr.bf16.mxu0 0
    %3454 = vmatpush1.bf16.xpose.msra.mxu0 0
    %3455 = vmatprep.subr.bf16.mxu0 0
    %3456 = vmatpush1.bf16.xpose.msra.mxu0 0
    %3457 = vmatprep.subr.bf16.mxu0 0
    %3458 = vmatpush1.bf16.xpose.msra.mxu0 0
    %3459 = vmatprep.subr.bf16.mxu0 0
    %3460 = vmatpush1.bf16.xpose.msra.mxu0 0
    %3461 = vmatprep.subr.bf16.mxu0 0
    %3462 = vmatpush1.bf16.xpose.msra.mxu0 0
    %3463 = vmatprep.subr.bf16.mxu0 0
    %3464 = vmatpush1.bf16.xpose.msra.mxu0 0
    %3465 = vmatprep.subr.bf16.mxu0 0
    %3466 = vmatpush1.bf16.xpose.msra.mxu0 0
    %3467 = vmatprep.subr.bf16.mxu0 0
    %3468 = vmatpush1.bf16.xpose.msra.mxu0 %v3451
    %3469 = vmatprep.subr.bf16.mxu0 0
    %3470 = vmatpush2.bf16.xpose.msra.mxu0 0
    %3471 = vmatprep.subr.bf16.mxu0 0
    %3472 = vmatpush2.bf16.xpose.msra.mxu0 0
    %3473 = vmatprep.subr.bf16.mxu0 0
    %3474 = vmatpush2.bf16.xpose.msra.mxu0 0
    %3475 = vmatprep.subr.bf16.mxu0 0
    %3476 = vmatpush2.bf16.xpose.msra.mxu0 0
    %3477 = vmatprep.subr.bf16.mxu0 0
    %3478 = vmatpush2.bf16.xpose.msra.mxu0 0
    %3479 = vmatprep.subr.bf16.mxu0 0
    %3480 = vmatpush2.bf16.xpose.msra.mxu0 0
    %3481 = vmatprep.subr.bf16.mxu0 0
    %3482 = vmatpush2.bf16.xpose.msra.mxu0 0
    %3483 = vmatprep.subr.bf16.mxu0 0
    %3484 = vmatpush2.bf16.xpose.msra.mxu0 0
    %3485 = vmatprep.mubr.bf16.mxu0 0
    %3486 = vmatmul.mubr.bf16.gmra.mxu0 %v3448
    %v3487 = vpop.f32.mrf.mxu0
    %v3488 = vadd.f32 0.0, %v3487
    %v3489 = vpop.f32.mrf.mxu0
    %v3490 = vpop.f32.mrf.mxu0
    %v3491 = vadd.f32 0.0, %v3490
    %v3492 = vpop.f32.mrf.mxu0
    %3493 = vdwg.mxu0
    %v3494 = vsel %vm715, %v3437, -inf
    %3495 = vmax.xlane.f32.xlu0 %v3494
    %v3496 = vpop.xlane.xlu0 %3495
    %v3497 = vsel %vm715, %v3440, -inf
    %3498 = vmax.xlane.f32.xlu0 %v3497
    %v3499 = vpop.xlane.xlu0 %3498
    %v3500 = vsel %vm715, %v3488, -inf
    %3501 = vmax.xlane.f32.xlu0 %v3500
    %v3502 = vpop.xlane.xlu0 %3501
    %v3503 = vsel %vm715, %v3491, -inf
    %3504 = vmax.xlane.f32.xlu0 %v3503
    %v3505 = vpop.xlane.xlu0 %3504
    %v3506 = vsub.f32 %v3437, %v3496
    %v3507 = vsub.f32 %v3440, %v3499
    %v3508 = vsub.f32 %v3488, %v3502
    %v3509 = vsub.f32 %v3491, %v3505
    %v3510 = vmul.f32 %v3506, 1.442695
    %v3511 = vpow.pop %v3510
    %v3512 = vmul.f32 %v3507, 1.442695
    %v3513 = vpow.pop %v3512
    %v3514 = vmul.f32 %v3508, 1.442695
    %v3515 = vpow.pop %v3514
    %v3516 = vmul.f32 %v3509, 1.442695
    %v3517 = vpow.pop %v3516
    %v3518 = vsel %vm715, %v3511, 0.0
    %3519 = vadd.xlane.f32.xlu0 %v3518
    %v3520 = vpop.xlane.xlu0 %3519
    %v3521 = vsel %vm715, %v3513, 0.0
    %3522 = vadd.xlane.f32.xlu0 %v3521
    %v3523 = vpop.xlane.xlu0 %3522
    %v3524 = vsel %vm715, %v3515, 0.0
    %3525 = vadd.xlane.f32.xlu0 %v3524
    %v3526 = vpop.xlane.xlu0 %3525
    %v3527 = vsel %vm715, %v3517, 0.0
    %3528 = vadd.xlane.f32.xlu0 %v3527
    %v3529 = vpop.xlane.xlu0 %3528
    %v3530 = vrcp.pop %v3520
    %v3531 = vrcp.pop %v3523
    %v3532 = vrcp.pop %v3526
    %v3533 = vrcp.pop %v3529
    %v3534 = vmul.f32 %v3511, %v3530
    %v3535 = vmul.f32 %v3513, %v3531
    %v3536 = vmul.f32 %v3515, %v3532
    %v3537 = vmul.f32 %v3517, %v3533
    %v3538 = vpack.c.bf16 %v3535, %v3534
    %v3539 = vpack.c.bf16 %v3537, %v3536
    %3540 = vrot.lane.b32.xlu0 %v712, 96
    %v3541 = vpop.permute.xlu0 %3540
    %v3544 = vsel %vm715, %v3538, 0
    %3546 = vmatprep.subr.bf16.mxu0 0
    %3547 = vmatpush1.bf16.msra.mxu0 0
    %3548 = vmatprep.subr.bf16.mxu0 0
    %3549 = vmatpush1.bf16.msra.mxu0 0
    %3550 = vmatprep.subr.bf16.mxu0 0
    %3551 = vmatpush1.bf16.msra.mxu0 0
    %3552 = vmatprep.subr.bf16.mxu0 0
    %3553 = vmatpush1.bf16.msra.mxu0 0
    %3554 = vmatprep.subr.bf16.mxu0 0
    %3555 = vmatpush1.bf16.msra.mxu0 0
    %3556 = vmatprep.subr.bf16.mxu0 0
    %3557 = vmatpush1.bf16.msra.mxu0 0
    %3558 = vmatprep.subr.bf16.mxu0 0
    %3559 = vmatpush1.bf16.msra.mxu0 0
    %3560 = vmatprep.subr.bf16.mxu0 0
    %3561 = vmatpush1.bf16.msra.mxu0 %v3541
    %3562 = vmatprep.subr.bf16.mxu0 0
    %3563 = vmatpush2.bf16.msra.mxu0 0
    %3564 = vmatprep.subr.bf16.mxu0 0
    %3565 = vmatpush2.bf16.msra.mxu0 0
    %3566 = vmatprep.subr.bf16.mxu0 0
    %3567 = vmatpush2.bf16.msra.mxu0 0
    %3568 = vmatprep.subr.bf16.mxu0 0
    %3569 = vmatpush2.bf16.msra.mxu0 0
    %3570 = vmatprep.subr.bf16.mxu0 0
    %3571 = vmatpush2.bf16.msra.mxu0 0
    %3572 = vmatprep.subr.bf16.mxu0 0
    %3573 = vmatpush2.bf16.msra.mxu0 0
    %3574 = vmatprep.subr.bf16.mxu0 0
    %3575 = vmatpush2.bf16.msra.mxu0 0
    %3576 = vmatprep.subr.bf16.mxu0 0
    %3577 = vmatpush2.bf16.msra.mxu0 0
    %3578 = vmatprep.mubr.bf16.mxu0 0
    %3579 = vmatmul.mubr.bf16.gmra.mxu0 %v3544
    %v3580 = vpop.f32.mrf.mxu0
    %v3581 = vadd.f32 0.0, %v3580
    %v3582 = vpop.f32.mrf.mxu0
    %v3583 = vpop.f32.mrf.mxu0
    %v3584 = vadd.f32 0.0, %v3583
    %v3585 = vpop.f32.mrf.mxu0
    %3586 = vdwg.mxu0
    %3587 = vrot.lane.b32.xlu0 %v714, 96
    %v3588 = vpop.permute.xlu0 %3587
    %v3591 = vsel %vm715, %v3539, 0
    %3593 = vmatprep.subr.bf16.mxu0 0
    %3594 = vmatpush1.bf16.msra.mxu0 0
    %3595 = vmatprep.subr.bf16.mxu0 0
    %3596 = vmatpush1.bf16.msra.mxu0 0
    %3597 = vmatprep.subr.bf16.mxu0 0
    %3598 = vmatpush1.bf16.msra.mxu0 0
    %3599 = vmatprep.subr.bf16.mxu0 0
    %3600 = vmatpush1.bf16.msra.mxu0 0
    %3601 = vmatprep.subr.bf16.mxu0 0
    %3602 = vmatpush1.bf16.msra.mxu0 0
    %3603 = vmatprep.subr.bf16.mxu0 0
    %3604 = vmatpush1.bf16.msra.mxu0 0
    %3605 = vmatprep.subr.bf16.mxu0 0
    %3606 = vmatpush1.bf16.msra.mxu0 0
    %3607 = vmatprep.subr.bf16.mxu0 0
    %3608 = vmatpush1.bf16.msra.mxu0 %v3588
    %3609 = vmatprep.subr.bf16.mxu0 0
    %3610 = vmatpush2.bf16.msra.mxu0 0
    %3611 = vmatprep.subr.bf16.mxu0 0
    %3612 = vmatpush2.bf16.msra.mxu0 0
    %3613 = vmatprep.subr.bf16.mxu0 0
    %3614 = vmatpush2.bf16.msra.mxu0 0
    %3615 = vmatprep.subr.bf16.mxu0 0
    %3616 = vmatpush2.bf16.msra.mxu0 0
    %3617 = vmatprep.subr.bf16.mxu0 0
    %3618 = vmatpush2.bf16.msra.mxu0 0
    %3619 = vmatprep.subr.bf16.mxu0 0
    %3620 = vmatpush2.bf16.msra.mxu0 0
    %3621 = vmatprep.subr.bf16.mxu0 0
    %3622 = vmatpush2.bf16.msra.mxu0 0
    %3623 = vmatprep.subr.bf16.mxu0 0
    %3624 = vmatpush2.bf16.msra.mxu0 0
    %3625 = vmatprep.mubr.bf16.mxu0 0
    %3626 = vmatmul.mubr.bf16.gmra.mxu0 %v3591
    %v3627 = vpop.f32.mrf.mxu0
    %v3628 = vadd.f32 0.0, %v3627
    %v3629 = vpop.f32.mrf.mxu0
    %v3630 = vpop.f32.mrf.mxu0
    %v3631 = vadd.f32 0.0, %v3630
    %v3632 = vpop.f32.mrf.mxu0
    %3633 = vdwg.mxu0
    %v3634 = vpack.c.bf16 %v3584, %v3581
    %v3635 = vpack.c.bf16 %v3631, %v3628
    %v3638 = vunpack.c.l.b16 %v3634
    %v3639 = vunpack.c.h.b16 %v3634
    %v3640 = vunpack.c.l.b16 %v3635
    %v3641 = vunpack.c.h.b16 %v3635
    %v3642 = vpack.c.b16 %v3638, %v3638
    %v3643 = vpack.c.b16 %v3639, %v3639
    %v3644 = vpack.c.b16 %v3640, %v3640
    %v3645 = vpack.c.b16 %v3641, %v3641
    %3646 = vrot.lane.b32.xlu0 %v3642, 32
    %v3647 = vpop.permute.xlu0 %3646
    %3648 = vrot.lane.b32.xlu0 %v3643, 32
    %v3649 = vpop.permute.xlu0 %3648
    %3650 = vrot.lane.b32.xlu0 %v3644, 32
    %v3651 = vpop.permute.xlu0 %3650
    %3652 = vrot.lane.b32.xlu0 %v3645, 32
    %v3653 = vpop.permute.xlu0 %3652
    %3658 = vst.msk [vmem:[#allocation2 + $0x4] sm:$0xf] %vm1508, %v3647
    %3659 = vst.msk [vmem:[#allocation2 + $0xc] sm:$0xf] %vm1508, %v3649
    %3660 = vst.msk [vmem:[#allocation2 + $0x14] sm:$0xf] %vm1508, %v3651
    %3661 = vst.msk [vmem:[#allocation2 + $0x1c] sm:$0xf] %vm1508, %v3653
    %3662 = vrot.lane.b32.xlu0 %v310, 80
    %v3663 = vpop.permute.xlu0 %3662
    %3664 = vrot.lane.b32.xlu0 %v511, 80
    %v3665 = vpop.permute.xlu0 %3664
    %v3667 = vsel %vm715, %v3663, 0
    %v3670 = vsel %vm715, %v3665, 0
    %3672 = vmatprep.subr.bf16.mxu0 0
    %3673 = vmatpush1.bf16.xpose.msra.mxu0 0
    %3674 = vmatprep.subr.bf16.mxu0 0
    %3675 = vmatpush1.bf16.xpose.msra.mxu0 0
    %3676 = vmatprep.subr.bf16.mxu0 0
    %3677 = vmatpush1.bf16.xpose.msra.mxu0 0
    %3678 = vmatprep.subr.bf16.mxu0 0
    %3679 = vmatpush1.bf16.xpose.msra.mxu0 0
    %3680 = vmatprep.subr.bf16.mxu0 0
    %3681 = vmatpush1.bf16.xpose.msra.mxu0 0
    %3682 = vmatprep.subr.bf16.mxu0 0
    %3683 = vmatpush1.bf16.xpose.msra.mxu0 0
    %3684 = vmatprep.subr.bf16.mxu0 0
    %3685 = vmatpush1.bf16.xpose.msra.mxu0 0
    %3686 = vmatprep.subr.bf16.mxu0 0
    %3687 = vmatpush1.bf16.xpose.msra.mxu0 %v3670
    %3688 = vmatprep.subr.bf16.mxu0 0
    %3689 = vmatpush2.bf16.xpose.msra.mxu0 0
    %3690 = vmatprep.subr.bf16.mxu0 0
    %3691 = vmatpush2.bf16.xpose.msra.mxu0 0
    %3692 = vmatprep.subr.bf16.mxu0 0
    %3693 = vmatpush2.bf16.xpose.msra.mxu0 0
    %3694 = vmatprep.subr.bf16.mxu0 0
    %3695 = vmatpush2.bf16.xpose.msra.mxu0 0
    %3696 = vmatprep.subr.bf16.mxu0 0
    %3697 = vmatpush2.bf16.xpose.msra.mxu0 0
    %3698 = vmatprep.subr.bf16.mxu0 0
    %3699 = vmatpush2.bf16.xpose.msra.mxu0 0
    %3700 = vmatprep.subr.bf16.mxu0 0
    %3701 = vmatpush2.bf16.xpose.msra.mxu0 0
    %3702 = vmatprep.subr.bf16.mxu0 0
    %3703 = vmatpush2.bf16.xpose.msra.mxu0 0
    %3704 = vmatprep.mubr.bf16.mxu0 0
    %3705 = vmatmul.mubr.bf16.gmra.mxu0 %v3667
    %v3706 = vpop.f32.mrf.mxu0
    %v3707 = vadd.f32 0.0, %v3706
    %v3708 = vpop.f32.mrf.mxu0
    %v3709 = vpop.f32.mrf.mxu0
    %v3710 = vadd.f32 0.0, %v3709
    %v3711 = vpop.f32.mrf.mxu0
    %3712 = vdwg.mxu0
    %3713 = vrot.lane.b32.xlu0 %v312, 80
    %v3714 = vpop.permute.xlu0 %3713
    %3715 = vrot.lane.b32.xlu0 %v513, 80
    %v3716 = vpop.permute.xlu0 %3715
    %v3718 = vsel %vm715, %v3714, 0
    %v3721 = vsel %vm715, %v3716, 0
    %3723 = vmatprep.subr.bf16.mxu0 0
    %3724 = vmatpush1.bf16.xpose.msra.mxu0 0
    %3725 = vmatprep.subr.bf16.mxu0 0
    %3726 = vmatpush1.bf16.xpose.msra.mxu0 0
    %3727 = vmatprep.subr.bf16.mxu0 0
    %3728 = vmatpush1.bf16.xpose.msra.mxu0 0
    %3729 = vmatprep.subr.bf16.mxu0 0
    %3730 = vmatpush1.bf16.xpose.msra.mxu0 0
    %3731 = vmatprep.subr.bf16.mxu0 0
    %3732 = vmatpush1.bf16.xpose.msra.mxu0 0
    %3733 = vmatprep.subr.bf16.mxu0 0
    %3734 = vmatpush1.bf16.xpose.msra.mxu0 0
    %3735 = vmatprep.subr.bf16.mxu0 0
    %3736 = vmatpush1.bf16.xpose.msra.mxu0 0
    %3737 = vmatprep.subr.bf16.mxu0 0
    %3738 = vmatpush1.bf16.xpose.msra.mxu0 %v3721
    %3739 = vmatprep.subr.bf16.mxu0 0
    %3740 = vmatpush2.bf16.xpose.msra.mxu0 0
    %3741 = vmatprep.subr.bf16.mxu0 0
    %3742 = vmatpush2.bf16.xpose.msra.mxu0 0
    %3743 = vmatprep.subr.bf16.mxu0 0
    %3744 = vmatpush2.bf16.xpose.msra.mxu0 0
    %3745 = vmatprep.subr.bf16.mxu0 0
    %3746 = vmatpush2.bf16.xpose.msra.mxu0 0
    %3747 = vmatprep.subr.bf16.mxu0 0
    %3748 = vmatpush2.bf16.xpose.msra.mxu0 0
    %3749 = vmatprep.subr.bf16.mxu0 0
    %3750 = vmatpush2.bf16.xpose.msra.mxu0 0
    %3751 = vmatprep.subr.bf16.mxu0 0
    %3752 = vmatpush2.bf16.xpose.msra.mxu0 0
    %3753 = vmatprep.subr.bf16.mxu0 0
    %3754 = vmatpush2.bf16.xpose.msra.mxu0 0
    %3755 = vmatprep.mubr.bf16.mxu0 0
    %3756 = vmatmul.mubr.bf16.gmra.mxu0 %v3718
    %v3757 = vpop.f32.mrf.mxu0
    %v3758 = vadd.f32 0.0, %v3757
    %v3759 = vpop.f32.mrf.mxu0
    %v3760 = vpop.f32.mrf.mxu0
    %v3761 = vadd.f32 0.0, %v3760
    %v3762 = vpop.f32.mrf.mxu0
    %3763 = vdwg.mxu0
    %v3764 = vsel %vm715, %v3707, -inf
    %3765 = vmax.xlane.f32.xlu0 %v3764
    %v3766 = vpop.xlane.xlu0 %3765
    %v3767 = vsel %vm715, %v3710, -inf
    %3768 = vmax.xlane.f32.xlu0 %v3767
    %v3769 = vpop.xlane.xlu0 %3768
    %v3770 = vsel %vm715, %v3758, -inf
    %3771 = vmax.xlane.f32.xlu0 %v3770
    %v3772 = vpop.xlane.xlu0 %3771
    %v3773 = vsel %vm715, %v3761, -inf
    %3774 = vmax.xlane.f32.xlu0 %v3773
    %v3775 = vpop.xlane.xlu0 %3774
    %v3776 = vsub.f32 %v3707, %v3766
    %v3777 = vsub.f32 %v3710, %v3769
    %v3778 = vsub.f32 %v3758, %v3772
    %v3779 = vsub.f32 %v3761, %v3775
    %v3780 = vmul.f32 %v3776, 1.442695
    %v3781 = vpow.pop %v3780
    %v3782 = vmul.f32 %v3777, 1.442695
    %v3783 = vpow.pop %v3782
    %v3784 = vmul.f32 %v3778, 1.442695
    %v3785 = vpow.pop %v3784
    %v3786 = vmul.f32 %v3779, 1.442695
    %v3787 = vpow.pop %v3786
    %v3788 = vsel %vm715, %v3781, 0.0
    %3789 = vadd.xlane.f32.xlu0 %v3788
    %v3790 = vpop.xlane.xlu0 %3789
    %v3791 = vsel %vm715, %v3783, 0.0
    %3792 = vadd.xlane.f32.xlu0 %v3791
    %v3793 = vpop.xlane.xlu0 %3792
    %v3794 = vsel %vm715, %v3785, 0.0
    %3795 = vadd.xlane.f32.xlu0 %v3794
    %v3796 = vpop.xlane.xlu0 %3795
    %v3797 = vsel %vm715, %v3787, 0.0
    %3798 = vadd.xlane.f32.xlu0 %v3797
    %v3799 = vpop.xlane.xlu0 %3798
    %v3800 = vrcp.pop %v3790
    %v3801 = vrcp.pop %v3793
    %v3802 = vrcp.pop %v3796
    %v3803 = vrcp.pop %v3799
    %v3804 = vmul.f32 %v3781, %v3800
    %v3805 = vmul.f32 %v3783, %v3801
    %v3806 = vmul.f32 %v3785, %v3802
    %v3807 = vmul.f32 %v3787, %v3803
    %v3808 = vpack.c.bf16 %v3805, %v3804
    %v3809 = vpack.c.bf16 %v3807, %v3806
    %3810 = vrot.lane.b32.xlu0 %v712, 80
    %v3811 = vpop.permute.xlu0 %3810
    %v3814 = vsel %vm715, %v3808, 0
    %3816 = vmatprep.subr.bf16.mxu0 0
    %3817 = vmatpush1.bf16.msra.mxu0 0
    %3818 = vmatprep.subr.bf16.mxu0 0
    %3819 = vmatpush1.bf16.msra.mxu0 0
    %3820 = vmatprep.subr.bf16.mxu0 0
    %3821 = vmatpush1.bf16.msra.mxu0 0
    %3822 = vmatprep.subr.bf16.mxu0 0
    %3823 = vmatpush1.bf16.msra.mxu0 0
    %3824 = vmatprep.subr.bf16.mxu0 0
    %3825 = vmatpush1.bf16.msra.mxu0 0
    %3826 = vmatprep.subr.bf16.mxu0 0
    %3827 = vmatpush1.bf16.msra.mxu0 0
    %3828 = vmatprep.subr.bf16.mxu0 0
    %3829 = vmatpush1.bf16.msra.mxu0 0
    %3830 = vmatprep.subr.bf16.mxu0 0
    %3831 = vmatpush1.bf16.msra.mxu0 %v3811
    %3832 = vmatprep.subr.bf16.mxu0 0
    %3833 = vmatpush2.bf16.msra.mxu0 0
    %3834 = vmatprep.subr.bf16.mxu0 0
    %3835 = vmatpush2.bf16.msra.mxu0 0
    %3836 = vmatprep.subr.bf16.mxu0 0
    %3837 = vmatpush2.bf16.msra.mxu0 0
    %3838 = vmatprep.subr.bf16.mxu0 0
    %3839 = vmatpush2.bf16.msra.mxu0 0
    %3840 = vmatprep.subr.bf16.mxu0 0
    %3841 = vmatpush2.bf16.msra.mxu0 0
    %3842 = vmatprep.subr.bf16.mxu0 0
    %3843 = vmatpush2.bf16.msra.mxu0 0
    %3844 = vmatprep.subr.bf16.mxu0 0
    %3845 = vmatpush2.bf16.msra.mxu0 0
    %3846 = vmatprep.subr.bf16.mxu0 0
    %3847 = vmatpush2.bf16.msra.mxu0 0
    %3848 = vmatprep.mubr.bf16.mxu0 0
    %3849 = vmatmul.mubr.bf16.gmra.mxu0 %v3814
    %v3850 = vpop.f32.mrf.mxu0
    %v3851 = vadd.f32 0.0, %v3850
    %v3852 = vpop.f32.mrf.mxu0
    %v3853 = vpop.f32.mrf.mxu0
    %v3854 = vadd.f32 0.0, %v3853
    %v3855 = vpop.f32.mrf.mxu0
    %3856 = vdwg.mxu0
    %3857 = vrot.lane.b32.xlu0 %v714, 80
    %v3858 = vpop.permute.xlu0 %3857
    %v3861 = vsel %vm715, %v3809, 0
    %3863 = vmatprep.subr.bf16.mxu0 0
    %3864 = vmatpush1.bf16.msra.mxu0 0
    %3865 = vmatprep.subr.bf16.mxu0 0
    %3866 = vmatpush1.bf16.msra.mxu0 0
    %3867 = vmatprep.subr.bf16.mxu0 0
    %3868 = vmatpush1.bf16.msra.mxu0 0
    %3869 = vmatprep.subr.bf16.mxu0 0
    %3870 = vmatpush1.bf16.msra.mxu0 0
    %3871 = vmatprep.subr.bf16.mxu0 0
    %3872 = vmatpush1.bf16.msra.mxu0 0
    %3873 = vmatprep.subr.bf16.mxu0 0
    %3874 = vmatpush1.bf16.msra.mxu0 0
    %3875 = vmatprep.subr.bf16.mxu0 0
    %3876 = vmatpush1.bf16.msra.mxu0 0
    %3877 = vmatprep.subr.bf16.mxu0 0
    %3878 = vmatpush1.bf16.msra.mxu0 %v3858
    %3879 = vmatprep.subr.bf16.mxu0 0
    %3880 = vmatpush2.bf16.msra.mxu0 0
    %3881 = vmatprep.subr.bf16.mxu0 0
    %3882 = vmatpush2.bf16.msra.mxu0 0
    %3883 = vmatprep.subr.bf16.mxu0 0
    %3884 = vmatpush2.bf16.msra.mxu0 0
    %3885 = vmatprep.subr.bf16.mxu0 0
    %3886 = vmatpush2.bf16.msra.mxu0 0
    %3887 = vmatprep.subr.bf16.mxu0 0
    %3888 = vmatpush2.bf16.msra.mxu0 0
    %3889 = vmatprep.subr.bf16.mxu0 0
    %3890 = vmatpush2.bf16.msra.mxu0 0
    %3891 = vmatprep.subr.bf16.mxu0 0
    %3892 = vmatpush2.bf16.msra.mxu0 0
    %3893 = vmatprep.subr.bf16.mxu0 0
    %3894 = vmatpush2.bf16.msra.mxu0 0
    %3895 = vmatprep.mubr.bf16.mxu0 0
    %3896 = vmatmul.mubr.bf16.gmra.mxu0 %v3861
    %v3897 = vpop.f32.mrf.mxu0
    %v3898 = vadd.f32 0.0, %v3897
    %v3899 = vpop.f32.mrf.mxu0
    %v3900 = vpop.f32.mrf.mxu0
    %v3901 = vadd.f32 0.0, %v3900
    %v3902 = vpop.f32.mrf.mxu0
    %3903 = vdwg.mxu0
    %v3904 = vpack.c.bf16 %v3854, %v3851
    %v3905 = vpack.c.bf16 %v3901, %v3898
    %v3908 = vunpack.c.l.b16 %v3904
    %v3909 = vunpack.c.h.b16 %v3904
    %v3910 = vunpack.c.l.b16 %v3905
    %v3911 = vunpack.c.h.b16 %v3905
    %v3912 = vpack.c.b16 %v3908, %v3908
    %v3913 = vpack.c.b16 %v3909, %v3909
    %v3914 = vpack.c.b16 %v3910, %v3910
    %v3915 = vpack.c.b16 %v3911, %v3911
    %3916 = vrot.lane.b32.xlu0 %v3912, 48
    %v3917 = vpop.permute.xlu0 %3916
    %3918 = vrot.lane.b32.xlu0 %v3913, 48
    %v3919 = vpop.permute.xlu0 %3918
    %3920 = vrot.lane.b32.xlu0 %v3914, 48
    %v3921 = vpop.permute.xlu0 %3920
    %3922 = vrot.lane.b32.xlu0 %v3915, 48
    %v3923 = vpop.permute.xlu0 %3922
    %3928 = vst.msk [vmem:[#allocation2 + $0x4] sm:$0xf] %vm1779, %v3917
    %3929 = vst.msk [vmem:[#allocation2 + $0xc] sm:$0xf] %vm1779, %v3919
    %3930 = vst.msk [vmem:[#allocation2 + $0x14] sm:$0xf] %vm1779, %v3921
    %3931 = vst.msk [vmem:[#allocation2 + $0x1c] sm:$0xf] %vm1779, %v3923
    %v3932 = vld [vmem:[#allocation2] sm:$0xff]
    %v3933 = vld [vmem:[#allocation2 + $0x8] sm:$0xff]
    %v3934 = vld [vmem:[#allocation2 + $0x10] sm:$0xff]
    %v3935 = vld [vmem:[#allocation2 + $0x18] sm:$0xff]
    %v3936 = vld [vmem:[#allocation11] sm:$0xff]
    %v3937 = vld [vmem:[#allocation11 + $0x8] sm:$0xff]
    %v3938 = vld [vmem:[#allocation11 + $0x10] sm:$0xff]
    %v3939 = vld [vmem:[#allocation11 + $0x18] sm:$0xff]
    %v3940 = vld [vmem:[#allocation11 + $0x20] sm:$0xff]
    %v3941 = vld [vmem:[#allocation11 + $0x28] sm:$0xff]
    %v3942 = vld [vmem:[#allocation11 + $0x30] sm:$0xff]
    %v3943 = vld [vmem:[#allocation11 + $0x38] sm:$0xff]
    %v3944 = vld [vmem:[#allocation11 + $0x40] sm:$0xff]
    %v3945 = vld [vmem:[#allocation11 + $0x48] sm:$0xff]
    %v3946 = vld [vmem:[#allocation11 + $0x50] sm:$0xff]
    %v3947 = vld [vmem:[#allocation11 + $0x58] sm:$0xff]
    %v3948 = vld [vmem:[#allocation11 + $0x60] sm:$0xff]
    %v3949 = vld [vmem:[#allocation11 + $0x68] sm:$0xff]
    %v3950 = vld [vmem:[#allocation11 + $0x70] sm:$0xff]
    %v3951 = vld [vmem:[#allocation11 + $0x78] sm:$0xff]
    %v3952 = vld [vmem:[#allocation11 + $0x80] sm:$0xff]
    %v3953 = vld [vmem:[#allocation11 + $0x88] sm:$0xff]
    %v3954 = vld [vmem:[#allocation11 + $0x90] sm:$0xff]
    %v3955 = vld [vmem:[#allocation11 + $0x98] sm:$0xff]
    %v3956 = vld [vmem:[#allocation11 + $0xa0] sm:$0xff]
    %v3957 = vld [vmem:[#allocation11 + $0xa8] sm:$0xff]
    %v3958 = vld [vmem:[#allocation11 + $0xb0] sm:$0xff]
    %v3959 = vld [vmem:[#allocation11 + $0xb8] sm:$0xff]
    %v3960 = vld [vmem:[%s5] sm:$0x3]
    %v3962 = vlaneseq
    %v3963 = vshrl.u32 %v3962, 7
    %v3964 = vsub.s32 0, %v3963
    %v3965 = vrot.slane %v3960, %v3964
    %v3966 = vlaneseq
    %v3967 = vshrl.u32 %v3966, 7
    %v3968 = vsub.s32 1, %v3967
    %v3969 = vrot.slane %v3960, %v3968
    %v3976 = vunpack.c.l.b16 %v3932
    %v3977 = vunpack.c.h.b16 %v3932
    %v3978 = vunpack.c.l.b16 %v3933
    %v3979 = vunpack.c.h.b16 %v3933
    %v3980 = vunpack.c.l.b16 %v3934
    %v3981 = vunpack.c.h.b16 %v3934
    %v3982 = vunpack.c.l.b16 %v3935
    %v3983 = vunpack.c.h.b16 %v3935
    %v3984 = vpack.c.b16 %v3978, %v3976
    %v3985 = vpack.c.b16 %v3979, %v3977
    %v3986 = vpack.c.b16 %v3982, %v3980
    %v3987 = vpack.c.b16 %v3983, %v3981
    %v4014 = vunpack.c.l.b16 %v3936
    %v4015 = vunpack.c.h.b16 %v3936
    %v4016 = vunpack.c.l.b16 %v3937
    %v4017 = vunpack.c.h.b16 %v3937
    %v4018 = vunpack.c.l.b16 %v3938
    %v4019 = vunpack.c.h.b16 %v3938
    %v4020 = vunpack.c.l.b16 %v3939
    %v4021 = vunpack.c.h.b16 %v3939
    %v4022 = vunpack.c.l.b16 %v3940
    %v4023 = vunpack.c.h.b16 %v3940
    %v4024 = vunpack.c.l.b16 %v3941
    %v4025 = vunpack.c.h.b16 %v3941
    %v4026 = vunpack.c.l.b16 %v3942
    %v4027 = vunpack.c.h.b16 %v3942
    %v4028 = vunpack.c.l.b16 %v3943
    %v4029 = vunpack.c.h.b16 %v3943
    %v4030 = vunpack.c.l.b16 %v3944
    %v4031 = vunpack.c.h.b16 %v3944
    %v4032 = vunpack.c.l.b16 %v3945
    %v4033 = vunpack.c.h.b16 %v3945
    %v4034 = vunpack.c.l.b16 %v3946
    %v4035 = vunpack.c.h.b16 %v3946
    %v4036 = vunpack.c.l.b16 %v3947
    %v4037 = vunpack.c.h.b16 %v3947
    %v4038 = vunpack.c.l.b16 %v3948
    %v4039 = vunpack.c.h.b16 %v3948
    %v4040 = vunpack.c.l.b16 %v3949
    %v4041 = vunpack.c.h.b16 %v3949
    %v4042 = vunpack.c.l.b16 %v3950
    %v4043 = vunpack.c.h.b16 %v3950
    %v4044 = vunpack.c.l.b16 %v3951
    %v4045 = vunpack.c.h.b16 %v3951
    %v4046 = vunpack.c.l.b16 %v3952
    %v4047 = vunpack.c.h.b16 %v3952
    %v4048 = vunpack.c.l.b16 %v3953
    %v4049 = vunpack.c.h.b16 %v3953
    %v4050 = vunpack.c.l.b16 %v3954
    %v4051 = vunpack.c.h.b16 %v3954
    %v4052 = vunpack.c.l.b16 %v3955
    %v4053 = vunpack.c.h.b16 %v3955
    %v4054 = vunpack.c.l.b16 %v3956
    %v4055 = vunpack.c.h.b16 %v3956
    %v4056 = vunpack.c.l.b16 %v3957
    %v4057 = vunpack.c.h.b16 %v3957
    %v4058 = vunpack.c.l.b16 %v3958
    %v4059 = vunpack.c.h.b16 %v3958
    %v4060 = vunpack.c.l.b16 %v3959
    %v4061 = vunpack.c.h.b16 %v3959
    %v4062 = vpack.c.b16 %v4016, %v4014
    %v4063 = vpack.c.b16 %v4017, %v4015
    %v4064 = vpack.c.b16 %v4020, %v4018
    %v4065 = vpack.c.b16 %v4021, %v4019
    %v4066 = vpack.c.b16 %v4024, %v4022
    %v4067 = vpack.c.b16 %v4025, %v4023
    %v4068 = vpack.c.b16 %v4028, %v4026
    %v4069 = vpack.c.b16 %v4029, %v4027
    %v4070 = vpack.c.b16 %v4032, %v4030
    %v4071 = vpack.c.b16 %v4033, %v4031
    %v4072 = vpack.c.b16 %v4036, %v4034
    %v4073 = vpack.c.b16 %v4037, %v4035
    %v4074 = vpack.c.b16 %v4040, %v4038
    %v4075 = vpack.c.b16 %v4041, %v4039
    %v4076 = vpack.c.b16 %v4044, %v4042
    %v4077 = vpack.c.b16 %v4045, %v4043
    %v4078 = vpack.c.b16 %v4048, %v4046
    %v4079 = vpack.c.b16 %v4049, %v4047
    %v4080 = vpack.c.b16 %v4052, %v4050
    %v4081 = vpack.c.b16 %v4053, %v4051
    %v4082 = vpack.c.b16 %v4056, %v4054
    %v4083 = vpack.c.b16 %v4057, %v4055
    %v4084 = vpack.c.b16 %v4060, %v4058
    %v4085 = vpack.c.b16 %v4061, %v4059
    %v4111 = vsel %vm249, %v3985, 0
    %v4114 = vsel %vm249, %v3987, 0
    %4116 = vmatprep.subr.bf16.mxu0 %v4077
    %4117 = vmatpush1.bf16.msra.mxu0 %v4076
    %4118 = vmatprep.subr.bf16.mxu0 %v4075
    %4119 = vmatpush1.bf16.msra.mxu0 %v4074
    %4120 = vmatprep.subr.bf16.mxu0 %v4073
    %4121 = vmatpush1.bf16.msra.mxu0 %v4072
    %4122 = vmatprep.subr.bf16.mxu0 %v4071
    %4123 = vmatpush1.bf16.msra.mxu0 %v4070
    %4124 = vmatprep.subr.bf16.mxu0 %v4069
    %4125 = vmatpush1.bf16.msra.mxu0 %v4068
    %4126 = vmatprep.subr.bf16.mxu0 %v4067
    %4127 = vmatpush1.bf16.msra.mxu0 %v4066
    %4128 = vmatprep.subr.bf16.mxu0 %v4065
    %4129 = vmatpush1.bf16.msra.mxu0 %v4064
    %4130 = vmatprep.subr.bf16.mxu0 %v4063
    %4131 = vmatpush1.bf16.msra.mxu0 %v4062
    %4132 = vmatprep.subr.bf16.mxu0 0
    %4133 = vmatpush2.bf16.msra.mxu0 0
    %4134 = vmatprep.subr.bf16.mxu0 0
    %4135 = vmatpush2.bf16.msra.mxu0 0
    %4136 = vmatprep.subr.bf16.mxu0 0
    %4137 = vmatpush2.bf16.msra.mxu0 0
    %4138 = vmatprep.subr.bf16.mxu0 0
    %4139 = vmatpush2.bf16.msra.mxu0 0
    %4140 = vmatprep.subr.bf16.mxu0 %v4085
    %4141 = vmatpush2.bf16.msra.mxu0 %v4084
    %4142 = vmatprep.subr.bf16.mxu0 %v4083
    %4143 = vmatpush2.bf16.msra.mxu0 %v4082
    %4144 = vmatprep.subr.bf16.mxu0 %v4081
    %4145 = vmatpush2.bf16.msra.mxu0 %v4080
    %4146 = vmatprep.subr.bf16.mxu0 %v4079
    %4147 = vmatpush2.bf16.msra.mxu0 %v4078
    %4148 = vmatprep.mubr.bf16.mxu0 %v4111
    %4149 = vmatmul.mubr.bf16.gmra.mxu0 %v3984
    %v4150 = vpop.f32.mrf.mxu0
    %v4151 = vadd.f32 %v3965, %v4150
    %v4152 = vpop.f32.mrf.mxu0
    %v4153 = vadd.f32 %v3969, %v4152
    %v4154 = vpop.f32.mrf.mxu0
    %v4155 = vadd.f32 %v3965, %v4154
    %v4156 = vpop.f32.mrf.mxu0
    %v4157 = vadd.f32 %v3969, %v4156
    %4158 = vmatprep.mubr.bf16.mxu0 %v4114
    %4159 = vmatmul.mubr.bf16.gmra.mxu0 %v3986
    %v4160 = vpop.f32.mrf.mxu0
    %v4161 = vadd.f32 %v3965, %v4160
    %v4162 = vpop.f32.mrf.mxu0
    %v4163 = vadd.f32 %v3969, %v4162
    %v4164 = vpop.f32.mrf.mxu0
    %v4165 = vadd.f32 %v3965, %v4164
    %v4166 = vpop.f32.mrf.mxu0
    %v4167 = vadd.f32 %v3969, %v4166
    %4168 = vdwg.mxu0
    %4169 = vst [vmem:[#allocation12] sm:$0xff] %v4151
    %4170 = vst.msk [vmem:[#allocation12 + $0x8] sm:$0xff] %vm249, %v4153
    %4171 = vst [vmem:[#allocation12 + $0x10] sm:$0xff] %v4155
    %4172 = vst.msk [vmem:[#allocation12 + $0x18] sm:$0xff] %vm249, %v4157
    %4173 = vst [vmem:[#allocation12 + $0x20] sm:$0xff] %v4161
    %4174 = vst.msk [vmem:[#allocation12 + $0x28] sm:$0xff] %vm249, %v4163
    %4175 = vst [vmem:[#allocation12 + $0x30] sm:$0xff] %v4165
    %4176 = vst.msk [vmem:[#allocation12 + $0x38] sm:$0xff] %vm249, %v4167
    // Predicated region
    $region46: #{tpu_custom_call.1} parent=1 // pred_check
      _
    $region47: #{tpu_custom_call.1} parent=1 // pred_check_branch
      %4178 = sbr.rel (0) target = $region49
    $region48: #{tpu_custom_call.1} parent=1 // pred_region
      %s4180 = ssub.s32 1024, 1024
      %4181 = vsyncadd [#allocation5], %s4180
      %s4182 = sshll.u32 [#allocation12], 4
      %s4183 = int_to_ptr.vmem [resolvable:$true] %s4182
      %4188 = dma.vmem_to_hbm [thread:$0]  %s4183, 1024, %s6, [#allocation5], 256, 256, 16
    $region49: #{tpu_custom_call.1} parent=1 // pred_fallthru
      _
    // Predicated region
    $region50: #{tpu_custom_call.1} parent=1 // pred_check
      _
    $region51: #{tpu_custom_call.1} parent=1 // pred_check_branch
      %4190 = sbr.rel (0) target = $region53
    $region52: #{tpu_custom_call.1} parent=1 // pred_region
      %4191 = dma.done [#allocation5], 1024
    $region53: #{tpu_custom_call.1} parent=1 // pred_fallthru
      _
    %4192 = vsyncpa [#allocation4], 1
    %4193 = vsyncpa [#allocation7], 1
    %4194 = vsyncpa [#allocation10], 1
    %4195 = vsyncpa [#allocation5], 1

</llo_original>
